<compile_context>
chip_gen: v7x
topology: tpu7x:2x2x1
jax: 0.10.0
libtpu: 0.0.40
codegen_flags: <defaults>
</compile_context>

<pallas_src>
import math

import jax
import jax.numpy as jnp
from jax.experimental import pallas as pl
from jax.experimental.pallas import tpu as pltpu

LANES = 128  # TPU vreg lane width; all channel dims are padded to this.


# ---------------------------------------------------------------------------
# Fused Pallas kernel: whole CNN forward for one batch tile
# ---------------------------------------------------------------------------
def make_cnn_kernel(n_layers, k, compute_dtype):
    pad = (k - 1) // 2  # 'same' padding for odd k (PyTorch padding='same')

    def kernel(*refs):
        n_in = 1 + 4 * n_layers + 4
        x_ref = refs[0]
        layer_refs = refs[1:1 + 4 * n_layers]
        lin_w_ref, lin_b_ref, fc_w_ref, fc_b_ref = refs[1 + 4 * n_layers:n_in]
        o_ref = refs[n_in]
        scratch_refs = refs[n_in + 1:]

        x = x_ref[...]                                    # (bt, H, W, Cin)
        for l in range(n_layers):
            w_ref, b_ref, sc_ref, sh_ref = layer_refs[4 * l:4 * l + 4]
            xp_ref, patch_ref = scratch_refs[2 * l:2 * l + 2]
            bt, Hl, Wl, Cin = x.shape
            Cout = w_ref.shape[1]                         # = LANES (padded)
            Ho, Wo = Hl // 2, Wl // 2

            # ---- 'same' zero padding: zero-fill scratch, store interior ----
            xp_ref[...] = jnp.zeros(xp_ref.shape, xp_ref.dtype)
            xp_ref[:, pad:pad + Hl, pad:pad + Wl, :] = x

            # ---- im2col: k*k shifted windows stored at channel offsets ----
            # (lane-aligned 128-wide chunks for every layer after the first)
            t = 0
            for dh in range(k):
                for dw in range(k):
                    patch_ref[:, :, :, t * Cin:(t + 1) * Cin] = (
                        xp_ref[:, dh:dh + Hl, dw:dw + Wl, :])
                    t += 1

            # ---- one deep-K MXU matmul per layer, f32 accumulate ----
            pm = patch_ref[...].reshape(bt * Hl * Wl, k * k * Cin)
            acc = jnp.dot(pm, w_ref[...], preferred_element_type=jnp.float32)
            z = jnp.maximum(acc + b_ref[...], 0.0)        # bias + ReLU; Dropout2d = id

            # ---- AvgPool2d(2): pure adds (1/4 folded into sc on host) ----
            z = z.reshape(bt, Hl, Wo, 2 * Cout)
            z = z[..., :Cout] + z[..., Cout:]             # pool along W (vreg split)
            z = z.reshape(bt, Ho, 2, Wo, Cout)
            z = z[:, :, 0] + z[:, :, 1]                   # pool along H
            # BatchNorm2d (eval, folded) applied on the pooled (4x smaller) map
            x = (z * sc_ref[...] + sh_ref[...]).astype(compute_dtype)

        # ---- flatten + MLP head (lin_w rows pre-permuted to padded-NHWC) ----
        bt, Hf, Wf, Cf = x.shape
        xf = x.reshape(bt, Hf * Wf * Cf)
        h = jnp.dot(xf, lin_w_ref[...],
                    preferred_element_type=jnp.float32) + lin_b_ref[...]
        h = jnp.maximum(h, 0.0).astype(compute_dtype)     # ReLU; Dropout = id
        out = jnp.dot(h, fc_w_ref[...],
                      preferred_element_type=jnp.float32) + fc_b_ref[...]
        o_ref[...] = out.reshape(bt, 1, out.shape[1])

    return kernel


# ---------------------------------------------------------------------------
# Wrapper
# ---------------------------------------------------------------------------
def cnn_forward(x_nchw, params, compute_dtype=jnp.float32, batch_tile=1,
                vmem_limit_bytes=32 * 1024 * 1024):
    """Whole CNN forward as a single fused Pallas TPU kernel.

    compute_dtype: dtype of weights/activations fed to the MXU (accumulation is
      always f32).  Use jnp.bfloat16 on v6e/v7x for ~2x MXU throughput and half
      the VMEM/DMA bytes; keep jnp.float32 on v5e (no bf16 VPU).
    batch_tile: batch rows per grid step; grid is (N // batch_tile,) marked
      "parallel" so v7x shards it across both TensorCores.
    """
    N, Cin0, H, W = x_nchw.shape
    conv_layers = params["conv_layers"]
    n_layers = len(conv_layers)
    k = conv_layers[0]["w"].shape[0]
    pad = (k - 1) // 2
    nf = conv_layers[0]["w"].shape[-1]
    num_classes = params["fc_w"].shape[1]
    C = LANES

    assert k % 2 == 1, "padding='same' path implemented for odd kernel sizes"
    assert H % (2 ** n_layers) == 0 and W % (2 ** n_layers) == 0, \
        "spatial dims must survive n_layers AvgPool2d(2) halvings"
    assert nf <= C and num_classes <= C and params["lin_w"].shape[1] <= C
    assert N % batch_tile == 0

    # NCHW -> NHWC once on the host (tiny).
    x_nhwc = jnp.transpose(x_nchw, (0, 2, 3, 1)).astype(compute_dtype)

    def pad_cols(a):  # (1, n) -> (1, 128), zeros in the padded lanes, f32
        return jnp.pad(a.astype(jnp.float32), ((0, 0), (0, C - a.shape[1])))

    inputs = [x_nhwc]
    for l, layer in enumerate(conv_layers):
        kh, kw, cin, cout = layer["w"].shape
        cin_p = cin if l == 0 else C   # activations carry C channels after layer 0
        w = jnp.zeros((kh, kw, cin_p, C), jnp.float32)
        w = w.at[:, :, :cin, :cout].set(layer["w"])
        inputs += [w.reshape(kh * kw * cin_p, C).astype(compute_dtype),
                   pad_cols(layer["b"]),
                   pad_cols(layer["bn_scale"] * 0.25),   # fold avg-pool 1/4
                   pad_cols(layer["bn_shift"])]

    # First Linear: permute rows from PyTorch's NCHW-flatten order to the
    # kernel's (channel-padded) NHWC-flatten order; pad in/out dims to 128.
    Hf, Wf = H // (2 ** n_layers), W // (2 ** n_layers)
    lin_w, lin_out = params["lin_w"], params["lin_w"].shape[1]
    assert lin_w.shape[0] == nf * Hf * Wf
    lw = lin_w.reshape(nf, Hf, Wf, lin_out).transpose(1, 2, 0, 3)
    lw = jnp.pad(lw, ((0, 0), (0, 0), (0, C - nf), (0, C - lin_out)))
    fc_w = jnp.pad(params["fc_w"],
                   ((0, C - params["fc_w"].shape[0]), (0, C - num_classes)))
    inputs += [lw.reshape(Hf * Wf * C, C).astype(compute_dtype),
               pad_cols(params["lin_b"]),
               fc_w.astype(compute_dtype),
               pad_cols(params["fc_b"])]

    # ---- scratch (per layer: padded buffer + im2col patches) + cost/fit ----
    act_bytes = jnp.dtype(compute_dtype).itemsize
    scratch_shapes, scratch_bytes, flops = [], 0, 0
    Hl, Wl, Cin_l = H, W, Cin0
    for _ in range(n_layers):
        xp_shape = (batch_tile, Hl + 2 * pad, Wl + 2 * pad, Cin_l)
        patch_shape = (batch_tile, Hl, Wl, k * k * Cin_l)
        scratch_shapes += [pltpu.VMEM(xp_shape, compute_dtype),
                           pltpu.VMEM(patch_shape, compute_dtype)]
        scratch_bytes += (math.prod(xp_shape) + math.prod(patch_shape)) * act_bytes
        flops += 2 * N * Hl * Wl * (k * k * Cin_l) * C
        Hl, Wl, Cin_l = Hl // 2, Wl // 2, C
    flops += 2 * N * (Hl * Wl * C) * C + 2 * N * C * C

    def nbytes(a):
        return a.size * jnp.dtype(a.dtype).itemsize

    weight_bytes = sum(nbytes(a) for a in inputs[1:])
    io_bytes = 2 * (batch_tile * H * W * Cin0 * act_bytes + batch_tile * C * 4)
    vmem_needed = 2 * weight_bytes + io_bytes + scratch_bytes
    if vmem_needed > vmem_limit_bytes:
        # TODO(synk): add an H-tiled grid axis with a 2-row halo (or accumulate
        # k*k shifted matmuls to avoid the patches blowup) for inputs that do
        # not fit whole in VMEM; unnecessary at these sizes.
        raise ValueError(f"fused CNN needs ~{vmem_needed} B of VMEM "
                         f"(> {vmem_limit_bytes}); reduce batch_tile/resolution")

    # ---- batch grid (parallel -> both v7x TensorCores); weights resident ----
    grid = (N // batch_tile,)
    in_specs = [pl.BlockSpec((batch_tile, H, W, Cin0), lambda i: (i, 0, 0, 0))]
    in_specs += [pl.BlockSpec(a.shape, lambda i: (0, 0)) for a in inputs[1:]]
    out_spec = pl.BlockSpec((batch_tile, 1, C), lambda i: (i, 0, 0))

    cost = pl.CostEstimate(
        flops=int(flops), transcendentals=0,
        bytes_accessed=int(nbytes(x_nhwc) + weight_bytes + N * C * 4))

    out = pl.pallas_call(
        make_cnn_kernel(n_layers, k, compute_dtype),
        out_shape=jax.ShapeDtypeStruct((N, 1, C), jnp.float32),
        grid_spec=pltpu.PrefetchScalarGridSpec(
            num_scalar_prefetch=0, grid=grid,
            in_specs=in_specs, out_specs=out_spec,
            scratch_shapes=scratch_shapes),
        compiler_params=pltpu.CompilerParams(
            dimension_semantics=("parallel",),
            vmem_limit_bytes=vmem_limit_bytes),
        cost_estimate=cost,
    )(*inputs)
    return out.reshape(N, C)[:, :num_classes]


# ---------------------------------------------------------------------------
# Deterministic synthetic parameters (shapes follow the nn.Module __init__)
# ---------------------------------------------------------------------------
def init_params(key, num_channels, num_classes, n_filters, k_size, n_layers, flat_dim):
    params = {"conv_layers": []}
    cin = num_channels
    eps = 1e-5
    for _ in range(n_layers):
        key, k1, k2, k3, k4, k5, k6 = jax.random.split(key, 7)
        w = 0.1 * jax.random.normal(k1, (k_size, k_size, cin, n_filters), jnp.float32)
        b = 0.1 * jax.random.normal(k2, (1, n_filters), jnp.float32)
        gamma = 1.0 + 0.1 * jax.random.normal(k3, (1, n_filters), jnp.float32)
        beta = 0.1 * jax.random.normal(k4, (1, n_filters), jnp.float32)
        run_mean = 0.1 * jax.random.normal(k5, (1, n_filters), jnp.float32)
        run_var = jnp.abs(jax.random.normal(k6, (1, n_filters), jnp.float32)) + 0.5
        scale = gamma / jnp.sqrt(run_var + eps)
        shift = beta - run_mean * scale
        params["conv_layers"].append(
            {"w": w, "b": b, "bn_scale": scale, "bn_shift": shift})
        cin = n_filters
    key, k1, k2, k3, k4 = jax.random.split(key, 5)
    params["lin_w"] = 0.05 * jax.random.normal(k1, (flat_dim, n_filters), jnp.float32)
    params["lin_b"] = 0.05 * jax.random.normal(k2, (1, n_filters), jnp.float32)
    params["fc_w"] = 0.05 * jax.random.normal(k3, (n_filters, num_classes), jnp.float32)
    params["fc_b"] = 0.05 * jax.random.normal(k4, (1, num_classes), jnp.float32)
    return params


# ---------------------------------------------------------------------------
# Pure-JAX reference (PyTorch semantics, eval mode) for the correctness check
# ---------------------------------------------------------------------------
def reference_forward(x_nchw, params):
    x = x_nchw
    for layer in params["conv_layers"]:
        w_oihw = jnp.transpose(layer["w"], (3, 2, 0, 1))  # HWIO -> OIHW
        x = jax.lax.conv_general_dilated(
            x, w_oihw, window_strides=(1, 1), padding="SAME",
            dimension_numbers=("NCHW", "OIHW", "NCHW"),
            precision=jax.lax.Precision.HIGHEST)
        x = x + layer["b"][0][None, :, None, None]
        x = jnp.maximum(x, 0.0)
        x = (x * layer["bn_scale"][0][None, :, None, None]
             + layer["bn_shift"][0][None, :, None, None])
        N, C, H, W = x.shape
        x = x.reshape(N, C, H // 2, 2, W // 2, 2).mean(axis=(3, 5))
    N = x.shape[0]
    x = x.reshape(N, -1)
    h = jnp.maximum(x @ params["lin_w"] + params["lin_b"][0], 0.0)
    return h @ params["fc_w"] + params["fc_b"][0]


if __name__ == "__main__":
    # Small shapes: batch=2, channels=4, spatial=16x16, 32 filters, 10 classes,
    # 3 conv blocks (each halves spatial: 16 -> 8 -> 4 -> 2).
    num_channels, num_classes = 4, 10
    n_filters, k_size, n_layers = 32, 3, 3
    N, H, W = 2, 16, 16

    key = jax.random.PRNGKey(0)
    kx, kp = jax.random.split(key)
    x = jax.random.normal(kx, (N, num_channels, H, W), jnp.float32)

    spatial_out = H // (2 ** n_layers)
    flat_dim = n_filters * spatial_out * spatial_out  # LazyLinear inferred in-features
    params = init_params(kp, num_channels, num_classes,
                         n_filters, k_size, n_layers, flat_dim)

    out = cnn_forward(x, params)   # f32 path; pass compute_dtype=jnp.bfloat16 on v6e/v7x
    out = jax.block_until_ready(out)

    ref = reference_forward(x, params)
    assert out.shape == (N, num_classes)
    # Tolerance covers MXU default-precision matmuls vs. the HIGHEST-precision
    # reference; structural/layout bugs would show up as O(0.1+) differences.
    assert bool(jnp.allclose(out, ref, atol=2e-2, rtol=2e-2)), \
        f"max abs diff {float(jnp.max(jnp.abs(out - ref)))}"

    print("KERNEL_OK")
</pallas_src>

<mosaic_0001>
module attributes {stable_mosaic.version = 11 : i64} {
  func.func @kernel(%arg0: i32, %arg1: memref<1x16x16x4xf32, #tpu.memory_space<vmem>>, %arg2: memref<36x128xf32, #tpu.memory_space<vmem>>, %arg3: memref<1x128xf32, #tpu.memory_space<vmem>>, %arg4: memref<1x128xf32, #tpu.memory_space<vmem>>, %arg5: memref<1x128xf32, #tpu.memory_space<vmem>>, %arg6: memref<1152x128xf32, #tpu.memory_space<vmem>>, %arg7: memref<1x128xf32, #tpu.memory_space<vmem>>, %arg8: memref<1x128xf32, #tpu.memory_space<vmem>>, %arg9: memref<1x128xf32, #tpu.memory_space<vmem>>, %arg10: memref<1152x128xf32, #tpu.memory_space<vmem>>, %arg11: memref<1x128xf32, #tpu.memory_space<vmem>>, %arg12: memref<1x128xf32, #tpu.memory_space<vmem>>, %arg13: memref<1x128xf32, #tpu.memory_space<vmem>>, %arg14: memref<512x128xf32, #tpu.memory_space<vmem>>, %arg15: memref<1x128xf32, #tpu.memory_space<vmem>>, %arg16: memref<128x128xf32, #tpu.memory_space<vmem>>, %arg17: memref<1x128xf32, #tpu.memory_space<vmem>>, %arg18: memref<1x1x128xf32, #tpu.memory_space<vmem>>, %arg19: memref<1x18x18x4xf32, #tpu.memory_space<vmem>>, %arg20: memref<1x16x16x36xf32, #tpu.memory_space<vmem>>, %arg21: memref<1x10x10x128xf32, #tpu.memory_space<vmem>>, %arg22: memref<1x8x8x1152xf32, #tpu.memory_space<vmem>>, %arg23: memref<1x6x6x128xf32, #tpu.memory_space<vmem>>, %arg24: memref<1x4x4x1152xf32, #tpu.memory_space<vmem>>) attributes {dimension_semantics = [#tpu.dimension_semantics<parallel>], iteration_bounds = array<i64: 2>, scalar_prefetch = 0 : i64, scratch_operands = 6 : i64, tpu.core_type = #tpu.core_type<tc>, window_params = [{transform_indices = @transform_0, window_bounds = array<i64: 1, 16, 16, 4>}, {pipeline_mode = #tpu.pipeline_mode<synchronous>, transform_indices = @transform_1, window_bounds = array<i64: 36, 128>}, {pipeline_mode = #tpu.pipeline_mode<synchronous>, transform_indices = @transform_2, window_bounds = array<i64: 1, 128>}, {pipeline_mode = #tpu.pipeline_mode<synchronous>, transform_indices = @transform_3, window_bounds = array<i64: 1, 128>}, {pipeline_mode = #tpu.pipeline_mode<synchronous>, transform_indices = @transform_4, window_bounds = array<i64: 1, 128>}, {pipeline_mode = #tpu.pipeline_mode<synchronous>, transform_indices = @transform_5, window_bounds = array<i64: 1152, 128>}, {pipeline_mode = #tpu.pipeline_mode<synchronous>, transform_indices = @transform_6, window_bounds = array<i64: 1, 128>}, {pipeline_mode = #tpu.pipeline_mode<synchronous>, transform_indices = @transform_7, window_bounds = array<i64: 1, 128>}, {pipeline_mode = #tpu.pipeline_mode<synchronous>, transform_indices = @transform_8, window_bounds = array<i64: 1, 128>}, {pipeline_mode = #tpu.pipeline_mode<synchronous>, transform_indices = @transform_9, window_bounds = array<i64: 1152, 128>}, {pipeline_mode = #tpu.pipeline_mode<synchronous>, transform_indices = @transform_10, window_bounds = array<i64: 1, 128>}, {pipeline_mode = #tpu.pipeline_mode<synchronous>, transform_indices = @transform_11, window_bounds = array<i64: 1, 128>}, {pipeline_mode = #tpu.pipeline_mode<synchronous>, transform_indices = @transform_12, window_bounds = array<i64: 1, 128>}, {pipeline_mode = #tpu.pipeline_mode<synchronous>, transform_indices = @transform_13, window_bounds = array<i64: 512, 128>}, {pipeline_mode = #tpu.pipeline_mode<synchronous>, transform_indices = @transform_14, window_bounds = array<i64: 1, 128>}, {pipeline_mode = #tpu.pipeline_mode<synchronous>, transform_indices = @transform_15, window_bounds = array<i64: 128, 128>}, {pipeline_mode = #tpu.pipeline_mode<synchronous>, transform_indices = @transform_16, window_bounds = array<i64: 1, 128>}, {transform_indices = @transform_17, window_bounds = array<i64: 1, 1, 128>}]} {
    %c0 = arith.constant 0 : index
    %c0_0 = arith.constant 0 : index
    %c0_1 = arith.constant 0 : index
    %c0_2 = arith.constant 0 : index
    %0 = vector.load %arg1[%c0, %c0_0, %c0_1, %c0_2] : memref<1x16x16x4xf32, #tpu.memory_space<vmem>>, vector<1x16x16x4xf32>
    %cst = arith.constant 0.000000e+00 : f32
    %1 = vector.broadcast %cst : f32 to vector<1x18x18x4xf32>
    %c0_3 = arith.constant 0 : index
    %c0_4 = arith.constant 0 : index
    %c0_5 = arith.constant 0 : index
    %c0_6 = arith.constant 0 : index
    %2 = vector.load %arg19[%c0_3, %c0_4, %c0_5, %c0_6] : memref<1x18x18x4xf32, #tpu.memory_space<vmem>>, vector<1x18x18x4xf32>
    tpu.vector_store %arg19[%c0_3, %c0_4, %c0_5, %c0_6], %1 {strides = array<i32>} : memref<1x18x18x4xf32, #tpu.memory_space<vmem>>, vector<1x18x18x4xf32>,
    %c0_7 = arith.constant 0 : index
    %c1 = arith.constant 1 : index
    %c1_8 = arith.constant 1 : index
    %c0_9 = arith.constant 0 : index
    %3 = vector.load %arg19[%c0_7, %c1, %c1_8, %c0_9] : memref<1x18x18x4xf32, #tpu.memory_space<vmem>>, vector<1x16x16x4xf32>
    tpu.vector_store %arg19[%c0_7, %c1, %c1_8, %c0_9], %0 {strides = array<i32>} : memref<1x18x18x4xf32, #tpu.memory_space<vmem>>, vector<1x16x16x4xf32>,
    %c0_10 = arith.constant 0 : index
    %c0_11 = arith.constant 0 : index
    %c0_12 = arith.constant 0 : index
    %c0_13 = arith.constant 0 : index
    %4 = vector.load %arg19[%c0_10, %c0_11, %c0_12, %c0_13] : memref<1x18x18x4xf32, #tpu.memory_space<vmem>>, vector<1x16x16x4xf32>
    %c0_14 = arith.constant 0 : index
    %c0_15 = arith.constant 0 : index
    %c0_16 = arith.constant 0 : index
    %c0_17 = arith.constant 0 : index
    %5 = vector.load %arg20[%c0_14, %c0_15, %c0_16, %c0_17] : memref<1x16x16x36xf32, #tpu.memory_space<vmem>>, vector<1x16x16x4xf32>
    tpu.vector_store %arg20[%c0_14, %c0_15, %c0_16, %c0_17], %4 {strides = array<i32>} : memref<1x16x16x36xf32, #tpu.memory_space<vmem>>, vector<1x16x16x4xf32>,
    %c0_18 = arith.constant 0 : index
    %c0_19 = arith.constant 0 : index
    %c1_20 = arith.constant 1 : index
    %c0_21 = arith.constant 0 : index
    %6 = vector.load %arg19[%c0_18, %c0_19, %c1_20, %c0_21] : memref<1x18x18x4xf32, #tpu.memory_space<vmem>>, vector<1x16x16x4xf32>
    %c0_22 = arith.constant 0 : index
    %c0_23 = arith.constant 0 : index
    %c0_24 = arith.constant 0 : index
    %c4 = arith.constant 4 : index
    %7 = vector.load %arg20[%c0_22, %c0_23, %c0_24, %c4] : memref<1x16x16x36xf32, #tpu.memory_space<vmem>>, vector<1x16x16x4xf32>
    tpu.vector_store %arg20[%c0_22, %c0_23, %c0_24, %c4], %6 {strides = array<i32>} : memref<1x16x16x36xf32, #tpu.memory_space<vmem>>, vector<1x16x16x4xf32>,
    %c0_25 = arith.constant 0 : index
    %c0_26 = arith.constant 0 : index
    %c2 = arith.constant 2 : index
    %c0_27 = arith.constant 0 : index
    %8 = vector.load %arg19[%c0_25, %c0_26, %c2, %c0_27] : memref<1x18x18x4xf32, #tpu.memory_space<vmem>>, vector<1x16x16x4xf32>
    %c0_28 = arith.constant 0 : index
    %c0_29 = arith.constant 0 : index
    %c0_30 = arith.constant 0 : index
    %c8 = arith.constant 8 : index
    %9 = vector.load %arg20[%c0_28, %c0_29, %c0_30, %c8] : memref<1x16x16x36xf32, #tpu.memory_space<vmem>>, vector<1x16x16x4xf32>
    tpu.vector_store %arg20[%c0_28, %c0_29, %c0_30, %c8], %8 {strides = array<i32>} : memref<1x16x16x36xf32, #tpu.memory_space<vmem>>, vector<1x16x16x4xf32>,
    %c0_31 = arith.constant 0 : index
    %c1_32 = arith.constant 1 : index
    %c0_33 = arith.constant 0 : index
    %c0_34 = arith.constant 0 : index
    %10 = vector.load %arg19[%c0_31, %c1_32, %c0_33, %c0_34] : memref<1x18x18x4xf32, #tpu.memory_space<vmem>>, vector<1x16x16x4xf32>
    %c0_35 = arith.constant 0 : index
    %c0_36 = arith.constant 0 : index
    %c0_37 = arith.constant 0 : index
    %c12 = arith.constant 12 : index
    %11 = vector.load %arg20[%c0_35, %c0_36, %c0_37, %c12] : memref<1x16x16x36xf32, #tpu.memory_space<vmem>>, vector<1x16x16x4xf32>
    tpu.vector_store %arg20[%c0_35, %c0_36, %c0_37, %c12], %10 {strides = array<i32>} : memref<1x16x16x36xf32, #tpu.memory_space<vmem>>, vector<1x16x16x4xf32>,
    %c0_38 = arith.constant 0 : index
    %c1_39 = arith.constant 1 : index
    %c1_40 = arith.constant 1 : index
    %c0_41 = arith.constant 0 : index
    %12 = vector.load %arg19[%c0_38, %c1_39, %c1_40, %c0_41] : memref<1x18x18x4xf32, #tpu.memory_space<vmem>>, vector<1x16x16x4xf32>
    %c0_42 = arith.constant 0 : index
    %c0_43 = arith.constant 0 : index
    %c0_44 = arith.constant 0 : index
    %c16 = arith.constant 16 : index
    %13 = vector.load %arg20[%c0_42, %c0_43, %c0_44, %c16] : memref<1x16x16x36xf32, #tpu.memory_space<vmem>>, vector<1x16x16x4xf32>
    tpu.vector_store %arg20[%c0_42, %c0_43, %c0_44, %c16], %12 {strides = array<i32>} : memref<1x16x16x36xf32, #tpu.memory_space<vmem>>, vector<1x16x16x4xf32>,
    %c0_45 = arith.constant 0 : index
    %c1_46 = arith.constant 1 : index
    %c2_47 = arith.constant 2 : index
    %c0_48 = arith.constant 0 : index
    %14 = vector.load %arg19[%c0_45, %c1_46, %c2_47, %c0_48] : memref<1x18x18x4xf32, #tpu.memory_space<vmem>>, vector<1x16x16x4xf32>
    %c0_49 = arith.constant 0 : index
    %c0_50 = arith.constant 0 : index
    %c0_51 = arith.constant 0 : index
    %c20 = arith.constant 20 : index
    %15 = vector.load %arg20[%c0_49, %c0_50, %c0_51, %c20] : memref<1x16x16x36xf32, #tpu.memory_space<vmem>>, vector<1x16x16x4xf32>
    tpu.vector_store %arg20[%c0_49, %c0_50, %c0_51, %c20], %14 {strides = array<i32>} : memref<1x16x16x36xf32, #tpu.memory_space<vmem>>, vector<1x16x16x4xf32>,
    %c0_52 = arith.constant 0 : index
    %c2_53 = arith.constant 2 : index
    %c0_54 = arith.constant 0 : index
    %c0_55 = arith.constant 0 : index
    %16 = vector.load %arg19[%c0_52, %c2_53, %c0_54, %c0_55] : memref<1x18x18x4xf32, #tpu.memory_space<vmem>>, vector<1x16x16x4xf32>
    %c0_56 = arith.constant 0 : index
    %c0_57 = arith.constant 0 : index
    %c0_58 = arith.constant 0 : index
    %c24 = arith.constant 24 : index
    %17 = vector.load %arg20[%c0_56, %c0_57, %c0_58, %c24] : memref<1x16x16x36xf32, #tpu.memory_space<vmem>>, vector<1x16x16x4xf32>
    tpu.vector_store %arg20[%c0_56, %c0_57, %c0_58, %c24], %16 {strides = array<i32>} : memref<1x16x16x36xf32, #tpu.memory_space<vmem>>, vector<1x16x16x4xf32>,
    %c0_59 = arith.constant 0 : index
    %c2_60 = arith.constant 2 : index
    %c1_61 = arith.constant 1 : index
    %c0_62 = arith.constant 0 : index
    %18 = vector.load %arg19[%c0_59, %c2_60, %c1_61, %c0_62] : memref<1x18x18x4xf32, #tpu.memory_space<vmem>>, vector<1x16x16x4xf32>
    %c0_63 = arith.constant 0 : index
    %c0_64 = arith.constant 0 : index
    %c0_65 = arith.constant 0 : index
    %c28 = arith.constant 28 : index
    %19 = vector.load %arg20[%c0_63, %c0_64, %c0_65, %c28] : memref<1x16x16x36xf32, #tpu.memory_space<vmem>>, vector<1x16x16x4xf32>
    tpu.vector_store %arg20[%c0_63, %c0_64, %c0_65, %c28], %18 {strides = array<i32>} : memref<1x16x16x36xf32, #tpu.memory_space<vmem>>, vector<1x16x16x4xf32>,
    %c0_66 = arith.constant 0 : index
    %c2_67 = arith.constant 2 : index
    %c2_68 = arith.constant 2 : index
    %c0_69 = arith.constant 0 : index
    %20 = vector.load %arg19[%c0_66, %c2_67, %c2_68, %c0_69] : memref<1x18x18x4xf32, #tpu.memory_space<vmem>>, vector<1x16x16x4xf32>
    %c0_70 = arith.constant 0 : index
    %c0_71 = arith.constant 0 : index
    %c0_72 = arith.constant 0 : index
    %c32 = arith.constant 32 : index
    %21 = vector.load %arg20[%c0_70, %c0_71, %c0_72, %c32] : memref<1x16x16x36xf32, #tpu.memory_space<vmem>>, vector<1x16x16x4xf32>
    tpu.vector_store %arg20[%c0_70, %c0_71, %c0_72, %c32], %20 {strides = array<i32>} : memref<1x16x16x36xf32, #tpu.memory_space<vmem>>, vector<1x16x16x4xf32>,
    %c0_73 = arith.constant 0 : index
    %c0_74 = arith.constant 0 : index
    %c0_75 = arith.constant 0 : index
    %c0_76 = arith.constant 0 : index
    %22 = vector.load %arg20[%c0_73, %c0_74, %c0_75, %c0_76] : memref<1x16x16x36xf32, #tpu.memory_space<vmem>>, vector<1x16x16x36xf32>
    %23 = vector.shape_cast %22 : vector<1x16x16x36xf32> to vector<256x36xf32>
    %c0_77 = arith.constant 0 : index
    %c0_78 = arith.constant 0 : index
    %24 = vector.load %arg2[%c0_77, %c0_78] : memref<36x128xf32, #tpu.memory_space<vmem>>, vector<36x128xf32>
    %cst_79 = arith.constant dense<0.000000e+00> : vector<256x128xf32>
    %25 = tpu.matmul %23, %24, %cst_79 {dimension_numbers = #tpu.dot_dimension_numbers<[1], [0], [0], [1], [0, 0, 1, 1], [], []>} : vector<256x36xf32>, vector<36x128xf32>, vector<256x128xf32> -> vector<256x128xf32>
    %c0_80 = arith.constant 0 : index
    %c0_81 = arith.constant 0 : index
    %26 = vector.load %arg3[%c0_80, %c0_81] : memref<1x128xf32, #tpu.memory_space<vmem>>, vector<1x128xf32>
    %27 = vector.broadcast %26 : vector<1x128xf32> to vector<256x128xf32>
    %28 = arith.addf %25, %27 : vector<256x128xf32>
    %cst_82 = arith.constant 0.000000e+00 : f32
    %29 = vector.broadcast %cst_82 : f32 to vector<256x128xf32>
    %30 = arith.maximumf %28, %29 : vector<256x128xf32>
    %31 = vector.shape_cast %30 : vector<256x128xf32> to vector<1x16x8x256xf32>
    %32 = vector.extract_strided_slice %31 {offsets = [0, 0, 0, 0], sizes = [1, 16, 8, 128], strides = [1, 1, 1, 1]} : vector<1x16x8x256xf32> to vector<1x16x8x128xf32>
    %33 = vector.extract_strided_slice %31 {offsets = [0, 0, 0, 128], sizes = [1, 16, 8, 128], strides = [1, 1, 1, 1]} : vector<1x16x8x256xf32> to vector<1x16x8x128xf32>
    %34 = arith.addf %32, %33 : vector<1x16x8x128xf32>
    %35 = vector.shape_cast %34 : vector<1x16x8x128xf32> to vector<1x8x2x8x128xf32>
    %36 = vector.extract_strided_slice %35 {offsets = [0, 0, 0, 0, 0], sizes = [1, 8, 1, 8, 128], strides = [1, 1, 1, 1, 1]} : vector<1x8x2x8x128xf32> to vector<1x8x1x8x128xf32>
    %37 = vector.shape_cast %36 : vector<1x8x1x8x128xf32> to vector<1x8x8x128xf32>
    %38 = vector.extract_strided_slice %35 {offsets = [0, 0, 1, 0, 0], sizes = [1, 8, 1, 8, 128], strides = [1, 1, 1, 1, 1]} : vector<1x8x2x8x128xf32> to vector<1x8x1x8x128xf32>
    %39 = vector.shape_cast %38 : vector<1x8x1x8x128xf32> to vector<1x8x8x128xf32>
    %40 = arith.addf %37, %39 : vector<1x8x8x128xf32>
    %c0_83 = arith.constant 0 : index
    %c0_84 = arith.constant 0 : index
    %41 = vector.load %arg4[%c0_83, %c0_84] : memref<1x128xf32, #tpu.memory_space<vmem>>, vector<1x128xf32>
    %42 = vector.shape_cast %41 : vector<1x128xf32> to vector<1x1x1x128xf32>
    %43 = vector.broadcast %42 : vector<1x1x1x128xf32> to vector<1x8x8x128xf32>
    %44 = arith.mulf %40, %43 : vector<1x8x8x128xf32>
    %c0_85 = arith.constant 0 : index
    %c0_86 = arith.constant 0 : index
    %45 = vector.load %arg5[%c0_85, %c0_86] : memref<1x128xf32, #tpu.memory_space<vmem>>, vector<1x128xf32>
    %46 = vector.shape_cast %45 : vector<1x128xf32> to vector<1x1x1x128xf32>
    %47 = vector.broadcast %46 : vector<1x1x1x128xf32> to vector<1x8x8x128xf32>
    %48 = arith.addf %44, %47 : vector<1x8x8x128xf32>
    %cst_87 = arith.constant 0.000000e+00 : f32
    %49 = vector.broadcast %cst_87 : f32 to vector<1x10x10x128xf32>
    %c0_88 = arith.constant 0 : index
    %c0_89 = arith.constant 0 : index
    %c0_90 = arith.constant 0 : index
    %c0_91 = arith.constant 0 : index
    %50 = vector.load %arg21[%c0_88, %c0_89, %c0_90, %c0_91] : memref<1x10x10x128xf32, #tpu.memory_space<vmem>>, vector<1x10x10x128xf32>
    tpu.vector_store %arg21[%c0_88, %c0_89, %c0_90, %c0_91], %49 {strides = array<i32>} : memref<1x10x10x128xf32, #tpu.memory_space<vmem>>, vector<1x10x10x128xf32>,
    %c0_92 = arith.constant 0 : index
    %c1_93 = arith.constant 1 : index
    %c1_94 = arith.constant 1 : index
    %c0_95 = arith.constant 0 : index
    %51 = vector.load %arg21[%c0_92, %c1_93, %c1_94, %c0_95] : memref<1x10x10x128xf32, #tpu.memory_space<vmem>>, vector<1x8x8x128xf32>
    tpu.vector_store %arg21[%c0_92, %c1_93, %c1_94, %c0_95], %48 {strides = array<i32>} : memref<1x10x10x128xf32, #tpu.memory_space<vmem>>, vector<1x8x8x128xf32>,
    %c0_96 = arith.constant 0 : index
    %c0_97 = arith.constant 0 : index
    %c0_98 = arith.constant 0 : index
    %c0_99 = arith.constant 0 : index
    %52 = vector.load %arg21[%c0_96, %c0_97, %c0_98, %c0_99] : memref<1x10x10x128xf32, #tpu.memory_space<vmem>>, vector<1x8x8x128xf32>
    %c0_100 = arith.constant 0 : index
    %c0_101 = arith.constant 0 : index
    %c0_102 = arith.constant 0 : index
    %c0_103 = arith.constant 0 : index
    %53 = vector.load %arg22[%c0_100, %c0_101, %c0_102, %c0_103] : memref<1x8x8x1152xf32, #tpu.memory_space<vmem>>, vector<1x8x8x128xf32>
    tpu.vector_store %arg22[%c0_100, %c0_101, %c0_102, %c0_103], %52 {strides = array<i32>} : memref<1x8x8x1152xf32, #tpu.memory_space<vmem>>, vector<1x8x8x128xf32>,
    %c0_104 = arith.constant 0 : index
    %c0_105 = arith.constant 0 : index
    %c1_106 = arith.constant 1 : index
    %c0_107 = arith.constant 0 : index
    %54 = vector.load %arg21[%c0_104, %c0_105, %c1_106, %c0_107] : memref<1x10x10x128xf32, #tpu.memory_space<vmem>>, vector<1x8x8x128xf32>
    %c0_108 = arith.constant 0 : index
    %c0_109 = arith.constant 0 : index
    %c0_110 = arith.constant 0 : index
    %c128 = arith.constant 128 : index
    %55 = vector.load %arg22[%c0_108, %c0_109, %c0_110, %c128] : memref<1x8x8x1152xf32, #tpu.memory_space<vmem>>, vector<1x8x8x128xf32>
    tpu.vector_store %arg22[%c0_108, %c0_109, %c0_110, %c128], %54 {strides = array<i32>} : memref<1x8x8x1152xf32, #tpu.memory_space<vmem>>, vector<1x8x8x128xf32>,
    %c0_111 = arith.constant 0 : index
    %c0_112 = arith.constant 0 : index
    %c2_113 = arith.constant 2 : index
    %c0_114 = arith.constant 0 : index
    %56 = vector.load %arg21[%c0_111, %c0_112, %c2_113, %c0_114] : memref<1x10x10x128xf32, #tpu.memory_space<vmem>>, vector<1x8x8x128xf32>
    %c0_115 = arith.constant 0 : index
    %c0_116 = arith.constant 0 : index
    %c0_117 = arith.constant 0 : index
    %c256 = arith.constant 256 : index
    %57 = vector.load %arg22[%c0_115, %c0_116, %c0_117, %c256] : memref<1x8x8x1152xf32, #tpu.memory_space<vmem>>, vector<1x8x8x128xf32>
    tpu.vector_store %arg22[%c0_115, %c0_116, %c0_117, %c256], %56 {strides = array<i32>} : memref<1x8x8x1152xf32, #tpu.memory_space<vmem>>, vector<1x8x8x128xf32>,
    %c0_118 = arith.constant 0 : index
    %c1_119 = arith.constant 1 : index
    %c0_120 = arith.constant 0 : index
    %c0_121 = arith.constant 0 : index
    %58 = vector.load %arg21[%c0_118, %c1_119, %c0_120, %c0_121] : memref<1x10x10x128xf32, #tpu.memory_space<vmem>>, vector<1x8x8x128xf32>
    %c0_122 = arith.constant 0 : index
    %c0_123 = arith.constant 0 : index
    %c0_124 = arith.constant 0 : index
    %c384 = arith.constant 384 : index
    %59 = vector.load %arg22[%c0_122, %c0_123, %c0_124, %c384] : memref<1x8x8x1152xf32, #tpu.memory_space<vmem>>, vector<1x8x8x128xf32>
    tpu.vector_store %arg22[%c0_122, %c0_123, %c0_124, %c384], %58 {strides = array<i32>} : memref<1x8x8x1152xf32, #tpu.memory_space<vmem>>, vector<1x8x8x128xf32>,
    %c0_125 = arith.constant 0 : index
    %c1_126 = arith.constant 1 : index
    %c1_127 = arith.constant 1 : index
    %c0_128 = arith.constant 0 : index
    %60 = vector.load %arg21[%c0_125, %c1_126, %c1_127, %c0_128] : memref<1x10x10x128xf32, #tpu.memory_space<vmem>>, vector<1x8x8x128xf32>
    %c0_129 = arith.constant 0 : index
    %c0_130 = arith.constant 0 : index
    %c0_131 = arith.constant 0 : index
    %c512 = arith.constant 512 : index
    %61 = vector.load %arg22[%c0_129, %c0_130, %c0_131, %c512] : memref<1x8x8x1152xf32, #tpu.memory_space<vmem>>, vector<1x8x8x128xf32>
    tpu.vector_store %arg22[%c0_129, %c0_130, %c0_131, %c512], %60 {strides = array<i32>} : memref<1x8x8x1152xf32, #tpu.memory_space<vmem>>, vector<1x8x8x128xf32>,
    %c0_132 = arith.constant 0 : index
    %c1_133 = arith.constant 1 : index
    %c2_134 = arith.constant 2 : index
    %c0_135 = arith.constant 0 : index
    %62 = vector.load %arg21[%c0_132, %c1_133, %c2_134, %c0_135] : memref<1x10x10x128xf32, #tpu.memory_space<vmem>>, vector<1x8x8x128xf32>
    %c0_136 = arith.constant 0 : index
    %c0_137 = arith.constant 0 : index
    %c0_138 = arith.constant 0 : index
    %c640 = arith.constant 640 : index
    %63 = vector.load %arg22[%c0_136, %c0_137, %c0_138, %c640] : memref<1x8x8x1152xf32, #tpu.memory_space<vmem>>, vector<1x8x8x128xf32>
    tpu.vector_store %arg22[%c0_136, %c0_137, %c0_138, %c640], %62 {strides = array<i32>} : memref<1x8x8x1152xf32, #tpu.memory_space<vmem>>, vector<1x8x8x128xf32>,
    %c0_139 = arith.constant 0 : index
    %c2_140 = arith.constant 2 : index
    %c0_141 = arith.constant 0 : index
    %c0_142 = arith.constant 0 : index
    %64 = vector.load %arg21[%c0_139, %c2_140, %c0_141, %c0_142] : memref<1x10x10x128xf32, #tpu.memory_space<vmem>>, vector<1x8x8x128xf32>
    %c0_143 = arith.constant 0 : index
    %c0_144 = arith.constant 0 : index
    %c0_145 = arith.constant 0 : index
    %c768 = arith.constant 768 : index
    %65 = vector.load %arg22[%c0_143, %c0_144, %c0_145, %c768] : memref<1x8x8x1152xf32, #tpu.memory_space<vmem>>, vector<1x8x8x128xf32>
    tpu.vector_store %arg22[%c0_143, %c0_144, %c0_145, %c768], %64 {strides = array<i32>} : memref<1x8x8x1152xf32, #tpu.memory_space<vmem>>, vector<1x8x8x128xf32>,
    %c0_146 = arith.constant 0 : index
    %c2_147 = arith.constant 2 : index
    %c1_148 = arith.constant 1 : index
    %c0_149 = arith.constant 0 : index
    %66 = vector.load %arg21[%c0_146, %c2_147, %c1_148, %c0_149] : memref<1x10x10x128xf32, #tpu.memory_space<vmem>>, vector<1x8x8x128xf32>
    %c0_150 = arith.constant 0 : index
    %c0_151 = arith.constant 0 : index
    %c0_152 = arith.constant 0 : index
    %c896 = arith.constant 896 : index
    %67 = vector.load %arg22[%c0_150, %c0_151, %c0_152, %c896] : memref<1x8x8x1152xf32, #tpu.memory_space<vmem>>, vector<1x8x8x128xf32>
    tpu.vector_store %arg22[%c0_150, %c0_151, %c0_152, %c896], %66 {strides = array<i32>} : memref<1x8x8x1152xf32, #tpu.memory_space<vmem>>, vector<1x8x8x128xf32>,
    %c0_153 = arith.constant 0 : index
    %c2_154 = arith.constant 2 : index
    %c2_155 = arith.constant 2 : index
    %c0_156 = arith.constant 0 : index
    %68 = vector.load %arg21[%c0_153, %c2_154, %c2_155, %c0_156] : memref<1x10x10x128xf32, #tpu.memory_space<vmem>>, vector<1x8x8x128xf32>
    %c0_157 = arith.constant 0 : index
    %c0_158 = arith.constant 0 : index
    %c0_159 = arith.constant 0 : index
    %c1024 = arith.constant 1024 : index
    %69 = vector.load %arg22[%c0_157, %c0_158, %c0_159, %c1024] : memref<1x8x8x1152xf32, #tpu.memory_space<vmem>>, vector<1x8x8x128xf32>
    tpu.vector_store %arg22[%c0_157, %c0_158, %c0_159, %c1024], %68 {strides = array<i32>} : memref<1x8x8x1152xf32, #tpu.memory_space<vmem>>, vector<1x8x8x128xf32>,
    %c0_160 = arith.constant 0 : index
    %c0_161 = arith.constant 0 : index
    %c0_162 = arith.constant 0 : index
    %c0_163 = arith.constant 0 : index
    %70 = vector.load %arg22[%c0_160, %c0_161, %c0_162, %c0_163] : memref<1x8x8x1152xf32, #tpu.memory_space<vmem>>, vector<1x8x8x1152xf32>
    %71 = vector.shape_cast %70 : vector<1x8x8x1152xf32> to vector<64x1152xf32>
    %c0_164 = arith.constant 0 : index
    %c0_165 = arith.constant 0 : index
    %72 = vector.load %arg6[%c0_164, %c0_165] : memref<1152x128xf32, #tpu.memory_space<vmem>>, vector<1152x128xf32>
    %cst_166 = arith.constant dense<0.000000e+00> : vector<64x128xf32>
    %73 = tpu.matmul %71, %72, %cst_166 {dimension_numbers = #tpu.dot_dimension_numbers<[1], [0], [0], [1], [0, 0, 1, 1], [], []>} : vector<64x1152xf32>, vector<1152x128xf32>, vector<64x128xf32> -> vector<64x128xf32>
    %c0_167 = arith.constant 0 : index
    %c0_168 = arith.constant 0 : index
    %74 = vector.load %arg7[%c0_167, %c0_168] : memref<1x128xf32, #tpu.memory_space<vmem>>, vector<1x128xf32>
    %75 = vector.broadcast %74 : vector<1x128xf32> to vector<64x128xf32>
    %76 = arith.addf %73, %75 : vector<64x128xf32>
    %cst_169 = arith.constant 0.000000e+00 : f32
    %77 = vector.broadcast %cst_169 : f32 to vector<64x128xf32>
    %78 = arith.maximumf %76, %77 : vector<64x128xf32>
    %79 = vector.shape_cast %78 : vector<64x128xf32> to vector<1x8x4x256xf32>
    %80 = vector.extract_strided_slice %79 {offsets = [0, 0, 0, 0], sizes = [1, 8, 4, 128], strides = [1, 1, 1, 1]} : vector<1x8x4x256xf32> to vector<1x8x4x128xf32>
    %81 = vector.extract_strided_slice %79 {offsets = [0, 0, 0, 128], sizes = [1, 8, 4, 128], strides = [1, 1, 1, 1]} : vector<1x8x4x256xf32> to vector<1x8x4x128xf32>
    %82 = arith.addf %80, %81 : vector<1x8x4x128xf32>
    %83 = vector.shape_cast %82 : vector<1x8x4x128xf32> to vector<1x4x2x4x128xf32>
    %84 = vector.extract_strided_slice %83 {offsets = [0, 0, 0, 0, 0], sizes = [1, 4, 1, 4, 128], strides = [1, 1, 1, 1, 1]} : vector<1x4x2x4x128xf32> to vector<1x4x1x4x128xf32>
    %85 = vector.shape_cast %84 : vector<1x4x1x4x128xf32> to vector<1x4x4x128xf32>
    %86 = vector.extract_strided_slice %83 {offsets = [0, 0, 1, 0, 0], sizes = [1, 4, 1, 4, 128], strides = [1, 1, 1, 1, 1]} : vector<1x4x2x4x128xf32> to vector<1x4x1x4x128xf32>
    %87 = vector.shape_cast %86 : vector<1x4x1x4x128xf32> to vector<1x4x4x128xf32>
    %88 = arith.addf %85, %87 : vector<1x4x4x128xf32>
    %c0_170 = arith.constant 0 : index
    %c0_171 = arith.constant 0 : index
    %89 = vector.load %arg8[%c0_170, %c0_171] : memref<1x128xf32, #tpu.memory_space<vmem>>, vector<1x128xf32>
    %90 = vector.shape_cast %89 : vector<1x128xf32> to vector<1x1x1x128xf32>
    %91 = vector.broadcast %90 : vector<1x1x1x128xf32> to vector<1x4x4x128xf32>
    %92 = arith.mulf %88, %91 : vector<1x4x4x128xf32>
    %c0_172 = arith.constant 0 : index
    %c0_173 = arith.constant 0 : index
    %93 = vector.load %arg9[%c0_172, %c0_173] : memref<1x128xf32, #tpu.memory_space<vmem>>, vector<1x128xf32>
    %94 = vector.shape_cast %93 : vector<1x128xf32> to vector<1x1x1x128xf32>
    %95 = vector.broadcast %94 : vector<1x1x1x128xf32> to vector<1x4x4x128xf32>
    %96 = arith.addf %92, %95 : vector<1x4x4x128xf32>
    %cst_174 = arith.constant 0.000000e+00 : f32
    %97 = vector.broadcast %cst_174 : f32 to vector<1x6x6x128xf32>
    %c0_175 = arith.constant 0 : index
    %c0_176 = arith.constant 0 : index
    %c0_177 = arith.constant 0 : index
    %c0_178 = arith.constant 0 : index
    %98 = vector.load %arg23[%c0_175, %c0_176, %c0_177, %c0_178] : memref<1x6x6x128xf32, #tpu.memory_space<vmem>>, vector<1x6x6x128xf32>
    tpu.vector_store %arg23[%c0_175, %c0_176, %c0_177, %c0_178], %97 {strides = array<i32>} : memref<1x6x6x128xf32, #tpu.memory_space<vmem>>, vector<1x6x6x128xf32>,
    %c0_179 = arith.constant 0 : index
    %c1_180 = arith.constant 1 : index
    %c1_181 = arith.constant 1 : index
    %c0_182 = arith.constant 0 : index
    %99 = vector.load %arg23[%c0_179, %c1_180, %c1_181, %c0_182] : memref<1x6x6x128xf32, #tpu.memory_space<vmem>>, vector<1x4x4x128xf32>
    tpu.vector_store %arg23[%c0_179, %c1_180, %c1_181, %c0_182], %96 {strides = array<i32>} : memref<1x6x6x128xf32, #tpu.memory_space<vmem>>, vector<1x4x4x128xf32>,
    %c0_183 = arith.constant 0 : index
    %c0_184 = arith.constant 0 : index
    %c0_185 = arith.constant 0 : index
    %c0_186 = arith.constant 0 : index
    %100 = vector.load %arg23[%c0_183, %c0_184, %c0_185, %c0_186] : memref<1x6x6x128xf32, #tpu.memory_space<vmem>>, vector<1x4x4x128xf32>
    %c0_187 = arith.constant 0 : index
    %c0_188 = arith.constant 0 : index
    %c0_189 = arith.constant 0 : index
    %c0_190 = arith.constant 0 : index
    %101 = vector.load %arg24[%c0_187, %c0_188, %c0_189, %c0_190] : memref<1x4x4x1152xf32, #tpu.memory_space<vmem>>, vector<1x4x4x128xf32>
    tpu.vector_store %arg24[%c0_187, %c0_188, %c0_189, %c0_190], %100 {strides = array<i32>} : memref<1x4x4x1152xf32, #tpu.memory_space<vmem>>, vector<1x4x4x128xf32>,
    %c0_191 = arith.constant 0 : index
    %c0_192 = arith.constant 0 : index
    %c1_193 = arith.constant 1 : index
    %c0_194 = arith.constant 0 : index
    %102 = vector.load %arg23[%c0_191, %c0_192, %c1_193, %c0_194] : memref<1x6x6x128xf32, #tpu.memory_space<vmem>>, vector<1x4x4x128xf32>
    %c0_195 = arith.constant 0 : index
    %c0_196 = arith.constant 0 : index
    %c0_197 = arith.constant 0 : index
    %c128_198 = arith.constant 128 : index
    %103 = vector.load %arg24[%c0_195, %c0_196, %c0_197, %c128_198] : memref<1x4x4x1152xf32, #tpu.memory_space<vmem>>, vector<1x4x4x128xf32>
    tpu.vector_store %arg24[%c0_195, %c0_196, %c0_197, %c128_198], %102 {strides = array<i32>} : memref<1x4x4x1152xf32, #tpu.memory_space<vmem>>, vector<1x4x4x128xf32>,
    %c0_199 = arith.constant 0 : index
    %c0_200 = arith.constant 0 : index
    %c2_201 = arith.constant 2 : index
    %c0_202 = arith.constant 0 : index
    %104 = vector.load %arg23[%c0_199, %c0_200, %c2_201, %c0_202] : memref<1x6x6x128xf32, #tpu.memory_space<vmem>>, vector<1x4x4x128xf32>
    %c0_203 = arith.constant 0 : index
    %c0_204 = arith.constant 0 : index
    %c0_205 = arith.constant 0 : index
    %c256_206 = arith.constant 256 : index
    %105 = vector.load %arg24[%c0_203, %c0_204, %c0_205, %c256_206] : memref<1x4x4x1152xf32, #tpu.memory_space<vmem>>, vector<1x4x4x128xf32>
    tpu.vector_store %arg24[%c0_203, %c0_204, %c0_205, %c256_206], %104 {strides = array<i32>} : memref<1x4x4x1152xf32, #tpu.memory_space<vmem>>, vector<1x4x4x128xf32>,
    %c0_207 = arith.constant 0 : index
    %c1_208 = arith.constant 1 : index
    %c0_209 = arith.constant 0 : index
    %c0_210 = arith.constant 0 : index
    %106 = vector.load %arg23[%c0_207, %c1_208, %c0_209, %c0_210] : memref<1x6x6x128xf32, #tpu.memory_space<vmem>>, vector<1x4x4x128xf32>
    %c0_211 = arith.constant 0 : index
    %c0_212 = arith.constant 0 : index
    %c0_213 = arith.constant 0 : index
    %c384_214 = arith.constant 384 : index
    %107 = vector.load %arg24[%c0_211, %c0_212, %c0_213, %c384_214] : memref<1x4x4x1152xf32, #tpu.memory_space<vmem>>, vector<1x4x4x128xf32>
    tpu.vector_store %arg24[%c0_211, %c0_212, %c0_213, %c384_214], %106 {strides = array<i32>} : memref<1x4x4x1152xf32, #tpu.memory_space<vmem>>, vector<1x4x4x128xf32>,
    %c0_215 = arith.constant 0 : index
    %c1_216 = arith.constant 1 : index
    %c1_217 = arith.constant 1 : index
    %c0_218 = arith.constant 0 : index
    %108 = vector.load %arg23[%c0_215, %c1_216, %c1_217, %c0_218] : memref<1x6x6x128xf32, #tpu.memory_space<vmem>>, vector<1x4x4x128xf32>
    %c0_219 = arith.constant 0 : index
    %c0_220 = arith.constant 0 : index
    %c0_221 = arith.constant 0 : index
    %c512_222 = arith.constant 512 : index
    %109 = vector.load %arg24[%c0_219, %c0_220, %c0_221, %c512_222] : memref<1x4x4x1152xf32, #tpu.memory_space<vmem>>, vector<1x4x4x128xf32>
    tpu.vector_store %arg24[%c0_219, %c0_220, %c0_221, %c512_222], %108 {strides = array<i32>} : memref<1x4x4x1152xf32, #tpu.memory_space<vmem>>, vector<1x4x4x128xf32>,
    %c0_223 = arith.constant 0 : index
    %c1_224 = arith.constant 1 : index
    %c2_225 = arith.constant 2 : index
    %c0_226 = arith.constant 0 : index
    %110 = vector.load %arg23[%c0_223, %c1_224, %c2_225, %c0_226] : memref<1x6x6x128xf32, #tpu.memory_space<vmem>>, vector<1x4x4x128xf32>
    %c0_227 = arith.constant 0 : index
    %c0_228 = arith.constant 0 : index
    %c0_229 = arith.constant 0 : index
    %c640_230 = arith.constant 640 : index
    %111 = vector.load %arg24[%c0_227, %c0_228, %c0_229, %c640_230] : memref<1x4x4x1152xf32, #tpu.memory_space<vmem>>, vector<1x4x4x128xf32>
    tpu.vector_store %arg24[%c0_227, %c0_228, %c0_229, %c640_230], %110 {strides = array<i32>} : memref<1x4x4x1152xf32, #tpu.memory_space<vmem>>, vector<1x4x4x128xf32>,
    %c0_231 = arith.constant 0 : index
    %c2_232 = arith.constant 2 : index
    %c0_233 = arith.constant 0 : index
    %c0_234 = arith.constant 0 : index
    %112 = vector.load %arg23[%c0_231, %c2_232, %c0_233, %c0_234] : memref<1x6x6x128xf32, #tpu.memory_space<vmem>>, vector<1x4x4x128xf32>
    %c0_235 = arith.constant 0 : index
    %c0_236 = arith.constant 0 : index
    %c0_237 = arith.constant 0 : index
    %c768_238 = arith.constant 768 : index
    %113 = vector.load %arg24[%c0_235, %c0_236, %c0_237, %c768_238] : memref<1x4x4x1152xf32, #tpu.memory_space<vmem>>, vector<1x4x4x128xf32>
    tpu.vector_store %arg24[%c0_235, %c0_236, %c0_237, %c768_238], %112 {strides = array<i32>} : memref<1x4x4x1152xf32, #tpu.memory_space<vmem>>, vector<1x4x4x128xf32>,
    %c0_239 = arith.constant 0 : index
    %c2_240 = arith.constant 2 : index
    %c1_241 = arith.constant 1 : index
    %c0_242 = arith.constant 0 : index
    %114 = vector.load %arg23[%c0_239, %c2_240, %c1_241, %c0_242] : memref<1x6x6x128xf32, #tpu.memory_space<vmem>>, vector<1x4x4x128xf32>
    %c0_243 = arith.constant 0 : index
    %c0_244 = arith.constant 0 : index
    %c0_245 = arith.constant 0 : index
    %c896_246 = arith.constant 896 : index
    %115 = vector.load %arg24[%c0_243, %c0_244, %c0_245, %c896_246] : memref<1x4x4x1152xf32, #tpu.memory_space<vmem>>, vector<1x4x4x128xf32>
    tpu.vector_store %arg24[%c0_243, %c0_244, %c0_245, %c896_246], %114 {strides = array<i32>} : memref<1x4x4x1152xf32, #tpu.memory_space<vmem>>, vector<1x4x4x128xf32>,
    %c0_247 = arith.constant 0 : index
    %c2_248 = arith.constant 2 : index
    %c2_249 = arith.constant 2 : index
    %c0_250 = arith.constant 0 : index
    %116 = vector.load %arg23[%c0_247, %c2_248, %c2_249, %c0_250] : memref<1x6x6x128xf32, #tpu.memory_space<vmem>>, vector<1x4x4x128xf32>
    %c0_251 = arith.constant 0 : index
    %c0_252 = arith.constant 0 : index
    %c0_253 = arith.constant 0 : index
    %c1024_254 = arith.constant 1024 : index
    %117 = vector.load %arg24[%c0_251, %c0_252, %c0_253, %c1024_254] : memref<1x4x4x1152xf32, #tpu.memory_space<vmem>>, vector<1x4x4x128xf32>
    tpu.vector_store %arg24[%c0_251, %c0_252, %c0_253, %c1024_254], %116 {strides = array<i32>} : memref<1x4x4x1152xf32, #tpu.memory_space<vmem>>, vector<1x4x4x128xf32>,
    %c0_255 = arith.constant 0 : index
    %c0_256 = arith.constant 0 : index
    %c0_257 = arith.constant 0 : index
    %c0_258 = arith.constant 0 : index
    %118 = vector.load %arg24[%c0_255, %c0_256, %c0_257, %c0_258] : memref<1x4x4x1152xf32, #tpu.memory_space<vmem>>, vector<1x4x4x1152xf32>
    %119 = vector.shape_cast %118 : vector<1x4x4x1152xf32> to vector<16x1152xf32>
    %c0_259 = arith.constant 0 : index
    %c0_260 = arith.constant 0 : index
    %120 = vector.load %arg10[%c0_259, %c0_260] : memref<1152x128xf32, #tpu.memory_space<vmem>>, vector<1152x128xf32>
    %cst_261 = arith.constant dense<0.000000e+00> : vector<16x128xf32>
    %121 = tpu.matmul %119, %120, %cst_261 {dimension_numbers = #tpu.dot_dimension_numbers<[1], [0], [0], [1], [0, 0, 1, 1], [], []>} : vector<16x1152xf32>, vector<1152x128xf32>, vector<16x128xf32> -> vector<16x128xf32>
    %c0_262 = arith.constant 0 : index
    %c0_263 = arith.constant 0 : index
    %122 = vector.load %arg11[%c0_262, %c0_263] : memref<1x128xf32, #tpu.memory_space<vmem>>, vector<1x128xf32>
    %123 = vector.broadcast %122 : vector<1x128xf32> to vector<16x128xf32>
    %124 = arith.addf %121, %123 : vector<16x128xf32>
    %cst_264 = arith.constant 0.000000e+00 : f32
    %125 = vector.broadcast %cst_264 : f32 to vector<16x128xf32>
    %126 = arith.maximumf %124, %125 : vector<16x128xf32>
    %127 = vector.shape_cast %126 : vector<16x128xf32> to vector<1x4x2x256xf32>
    %128 = vector.extract_strided_slice %127 {offsets = [0, 0, 0, 0], sizes = [1, 4, 2, 128], strides = [1, 1, 1, 1]} : vector<1x4x2x256xf32> to vector<1x4x2x128xf32>
    %129 = vector.extract_strided_slice %127 {offsets = [0, 0, 0, 128], sizes = [1, 4, 2, 128], strides = [1, 1, 1, 1]} : vector<1x4x2x256xf32> to vector<1x4x2x128xf32>
    %130 = arith.addf %128, %129 : vector<1x4x2x128xf32>
    %131 = vector.shape_cast %130 : vector<1x4x2x128xf32> to vector<1x2x2x2x128xf32>
    %132 = vector.extract_strided_slice %131 {offsets = [0, 0, 0, 0, 0], sizes = [1, 2, 1, 2, 128], strides = [1, 1, 1, 1, 1]} : vector<1x2x2x2x128xf32> to vector<1x2x1x2x128xf32>
    %133 = vector.shape_cast %132 : vector<1x2x1x2x128xf32> to vector<1x2x2x128xf32>
    %134 = vector.extract_strided_slice %131 {offsets = [0, 0, 1, 0, 0], sizes = [1, 2, 1, 2, 128], strides = [1, 1, 1, 1, 1]} : vector<1x2x2x2x128xf32> to vector<1x2x1x2x128xf32>
    %135 = vector.shape_cast %134 : vector<1x2x1x2x128xf32> to vector<1x2x2x128xf32>
    %136 = arith.addf %133, %135 : vector<1x2x2x128xf32>
    %c0_265 = arith.constant 0 : index
    %c0_266 = arith.constant 0 : index
    %137 = vector.load %arg12[%c0_265, %c0_266] : memref<1x128xf32, #tpu.memory_space<vmem>>, vector<1x128xf32>
    %138 = vector.shape_cast %137 : vector<1x128xf32> to vector<1x1x1x128xf32>
    %139 = vector.broadcast %138 : vector<1x1x1x128xf32> to vector<1x2x2x128xf32>
    %140 = arith.mulf %136, %139 : vector<1x2x2x128xf32>
    %c0_267 = arith.constant 0 : index
    %c0_268 = arith.constant 0 : index
    %141 = vector.load %arg13[%c0_267, %c0_268] : memref<1x128xf32, #tpu.memory_space<vmem>>, vector<1x128xf32>
    %142 = vector.shape_cast %141 : vector<1x128xf32> to vector<1x1x1x128xf32>
    %143 = vector.broadcast %142 : vector<1x1x1x128xf32> to vector<1x2x2x128xf32>
    %144 = arith.addf %140, %143 : vector<1x2x2x128xf32>
    %145 = vector.shape_cast %144 : vector<1x2x2x128xf32> to vector<1x512xf32>
    %c0_269 = arith.constant 0 : index
    %c0_270 = arith.constant 0 : index
    %146 = vector.load %arg14[%c0_269, %c0_270] : memref<512x128xf32, #tpu.memory_space<vmem>>, vector<512x128xf32>
    %cst_271 = arith.constant dense<0.000000e+00> : vector<1x128xf32>
    %147 = tpu.matmul %145, %146, %cst_271 {dimension_numbers = #tpu.dot_dimension_numbers<[1], [0], [0], [1], [0, 0, 1, 1], [], []>} : vector<1x512xf32>, vector<512x128xf32>, vector<1x128xf32> -> vector<1x128xf32>
    %c0_272 = arith.constant 0 : index
    %c0_273 = arith.constant 0 : index
    %148 = vector.load %arg15[%c0_272, %c0_273] : memref<1x128xf32, #tpu.memory_space<vmem>>, vector<1x128xf32>
    %149 = arith.addf %147, %148 : vector<1x128xf32>
    %cst_274 = arith.constant 0.000000e+00 : f32
    %150 = vector.broadcast %cst_274 : f32 to vector<1x128xf32>
    %151 = arith.maximumf %149, %150 : vector<1x128xf32>
    %c0_275 = arith.constant 0 : index
    %c0_276 = arith.constant 0 : index
    %152 = vector.load %arg16[%c0_275, %c0_276] : memref<128x128xf32, #tpu.memory_space<vmem>>, vector<128x128xf32>
    %cst_277 = arith.constant dense<0.000000e+00> : vector<1x128xf32>
    %153 = tpu.matmul %151, %152, %cst_277 {dimension_numbers = #tpu.dot_dimension_numbers<[1], [0], [0], [1], [0, 0, 1, 1], [], []>} : vector<1x128xf32>, vector<128x128xf32>, vector<1x128xf32> -> vector<1x128xf32>
    %c0_278 = arith.constant 0 : index
    %c0_279 = arith.constant 0 : index
    %154 = vector.load %arg17[%c0_278, %c0_279] : memref<1x128xf32, #tpu.memory_space<vmem>>, vector<1x128xf32>
    %155 = arith.addf %153, %154 : vector<1x128xf32>
    %156 = vector.shape_cast %155 : vector<1x128xf32> to vector<1x1x128xf32>
    %c0_280 = arith.constant 0 : index
    %c0_281 = arith.constant 0 : index
    %c0_282 = arith.constant 0 : index
    %157 = vector.load %arg18[%c0_280, %c0_281, %c0_282] : memref<1x1x128xf32, #tpu.memory_space<vmem>>, vector<1x1x128xf32>
    tpu.vector_store %arg18[%c0_280, %c0_281, %c0_282], %156 {strides = array<i32>} : memref<1x1x128xf32, #tpu.memory_space<vmem>>, vector<1x1x128xf32>,
    return
  }
  func.func @transform_0(%arg0: i32) -> (i32, i32, i32, i32) {
    %c0_i32 = arith.constant 0 : i32
    %c0_i32_0 = arith.constant 0 : i32
    %c0_i32_1 = arith.constant 0 : i32
    %c0_i32_2 = arith.constant 0 : i32
    return %arg0, %c0_i32, %c0_i32_0, %c0_i32_1 : i32, i32, i32, i32
  }
  func.func @transform_1(%arg0: i32) -> (i32, i32) {
    %c0_i32 = arith.constant 0 : i32
    %c0_i32_0 = arith.constant 0 : i32
    %c0_i32_1 = arith.constant 0 : i32
    return %c0_i32, %c0_i32_0 : i32, i32
  }
  func.func @transform_2(%arg0: i32) -> (i32, i32) {
    %c0_i32 = arith.constant 0 : i32
    %c0_i32_0 = arith.constant 0 : i32
    %c0_i32_1 = arith.constant 0 : i32
    return %c0_i32, %c0_i32_0 : i32, i32
  }
  func.func @transform_3(%arg0: i32) -> (i32, i32) {
    %c0_i32 = arith.constant 0 : i32
    %c0_i32_0 = arith.constant 0 : i32
    %c0_i32_1 = arith.constant 0 : i32
    return %c0_i32, %c0_i32_0 : i32, i32
  }
  func.func @transform_4(%arg0: i32) -> (i32, i32) {
    %c0_i32 = arith.constant 0 : i32
    %c0_i32_0 = arith.constant 0 : i32
    %c0_i32_1 = arith.constant 0 : i32
    return %c0_i32, %c0_i32_0 : i32, i32
  }
  func.func @transform_5(%arg0: i32) -> (i32, i32) {
    %c0_i32 = arith.constant 0 : i32
    %c0_i32_0 = arith.constant 0 : i32
    %c0_i32_1 = arith.constant 0 : i32
    return %c0_i32, %c0_i32_0 : i32, i32
  }
  func.func @transform_6(%arg0: i32) -> (i32, i32) {
    %c0_i32 = arith.constant 0 : i32
    %c0_i32_0 = arith.constant 0 : i32
    %c0_i32_1 = arith.constant 0 : i32
    return %c0_i32, %c0_i32_0 : i32, i32
  }
  func.func @transform_7(%arg0: i32) -> (i32, i32) {
    %c0_i32 = arith.constant 0 : i32
    %c0_i32_0 = arith.constant 0 : i32
    %c0_i32_1 = arith.constant 0 : i32
    return %c0_i32, %c0_i32_0 : i32, i32
  }
  func.func @transform_8(%arg0: i32) -> (i32, i32) {
    %c0_i32 = arith.constant 0 : i32
    %c0_i32_0 = arith.constant 0 : i32
    %c0_i32_1 = arith.constant 0 : i32
    return %c0_i32, %c0_i32_0 : i32, i32
  }
  func.func @transform_9(%arg0: i32) -> (i32, i32) {
    %c0_i32 = arith.constant 0 : i32
    %c0_i32_0 = arith.constant 0 : i32
    %c0_i32_1 = arith.constant 0 : i32
    return %c0_i32, %c0_i32_0 : i32, i32
  }
  func.func @transform_10(%arg0: i32) -> (i32, i32) {
    %c0_i32 = arith.constant 0 : i32
    %c0_i32_0 = arith.constant 0 : i32
    %c0_i32_1 = arith.constant 0 : i32
    return %c0_i32, %c0_i32_0 : i32, i32
  }
  func.func @transform_11(%arg0: i32) -> (i32, i32) {
    %c0_i32 = arith.constant 0 : i32
    %c0_i32_0 = arith.constant 0 : i32
    %c0_i32_1 = arith.constant 0 : i32
    return %c0_i32, %c0_i32_0 : i32, i32
  }
  func.func @transform_12(%arg0: i32) -> (i32, i32) {
    %c0_i32 = arith.constant 0 : i32
    %c0_i32_0 = arith.constant 0 : i32
    %c0_i32_1 = arith.constant 0 : i32
    return %c0_i32, %c0_i32_0 : i32, i32
  }
  func.func @transform_13(%arg0: i32) -> (i32, i32) {
    %c0_i32 = arith.constant 0 : i32
    %c0_i32_0 = arith.constant 0 : i32
    %c0_i32_1 = arith.constant 0 : i32
    return %c0_i32, %c0_i32_0 : i32, i32
  }
  func.func @transform_14(%arg0: i32) -> (i32, i32) {
    %c0_i32 = arith.constant 0 : i32
    %c0_i32_0 = arith.constant 0 : i32
    %c0_i32_1 = arith.constant 0 : i32
    return %c0_i32, %c0_i32_0 : i32, i32
  }
  func.func @transform_15(%arg0: i32) -> (i32, i32) {
    %c0_i32 = arith.constant 0 : i32
    %c0_i32_0 = arith.constant 0 : i32
    %c0_i32_1 = arith.constant 0 : i32
    return %c0_i32, %c0_i32_0 : i32, i32
  }
  func.func @transform_16(%arg0: i32) -> (i32, i32) {
    %c0_i32 = arith.constant 0 : i32
    %c0_i32_0 = arith.constant 0 : i32
    %c0_i32_1 = arith.constant 0 : i32
    return %c0_i32, %c0_i32_0 : i32, i32
  }
  func.func @transform_17(%arg0: i32) -> (i32, i32, i32) {
    %c0_i32 = arith.constant 0 : i32
    %c0_i32_0 = arith.constant 0 : i32
    %c0_i32_1 = arith.constant 0 : i32
    return %arg0, %c0_i32, %c0_i32_0 : i32, i32, i32
  }
}

</mosaic_0001>

<llo_original>
// kernel: tpu_custom_call.1
$region0: #{tpu_custom_call.1}
  #allocation0 [shape = 'u32[]', space=smem, size = 0x4, offset = 0x4, fixed_abs, tag = 'smem constant byte address 0x4 - core index']
  #allocation1 [shape = 'u32[144,128]{1,0:T(1,128)}', space=vmem, size = 0x12000, scoped, tag = 'internal scratch']
  #allocation2 [shape = 'f32[1,18,18,4]{3,2,1,0:T(8,128)}', space=vmem, size = 0x36000, scoped, tag = 'scratch operand']
  #allocation3 [shape = 'f32[1,16,16,36]{3,2,1,0:T(8,128)}', space=vmem, size = 0x20000, scoped, tag = 'scratch operand']
  #allocation4 [shape = 'f32[1,10,10,128]{3,2,1,0:T(8,128)}', space=vmem, size = 0x14000, scoped, tag = 'scratch operand']
  #allocation5 [shape = 'f32[1,8,8,1152]{3,2,1,0:T(8,128)}', space=vmem, size = 0x48000, scoped, tag = 'scratch operand']
  #allocation6 [shape = 'f32[1,6,6,128]{3,2,1,0:T(8,128)}', space=vmem, size = 0x6000, scoped, tag = 'scratch operand']
  #allocation7 [shape = 'f32[1,4,4,1152]{3,2,1,0:T(4,128)}', space=vmem, size = 0x12000, scoped, tag = 'scratch operand']
  %s0 = inlined_call_operand.vmem [shape: f32[2,16,16,4], index: 0, kind: input, shape index: {}]
  %s1 = inlined_call_operand.vmem [shape: f32[36,128], index: 1, kind: input, shape index: {}]
  %s2 = inlined_call_operand.vmem [shape: f32[1,128], index: 2, kind: input, shape index: {}]
  %s3 = inlined_call_operand.vmem [shape: f32[1,128], index: 3, kind: input, shape index: {}]
  %s4 = inlined_call_operand.vmem [shape: f32[1,128], index: 4, kind: input, shape index: {}]
  %s5 = inlined_call_operand.hbm [shape: f32[1152,128], index: 5, kind: input, shape index: {}]
  %s6 = inlined_call_operand.vmem [shape: f32[1,128], index: 6, kind: input, shape index: {}]
  %s7 = inlined_call_operand.vmem [shape: f32[1,128], index: 7, kind: input, shape index: {}]
  %s8 = inlined_call_operand.vmem [shape: f32[1,128], index: 8, kind: input, shape index: {}]
  %s9 = inlined_call_operand.hbm [shape: f32[1152,128], index: 9, kind: input, shape index: {}]
  %s10 = inlined_call_operand.vmem [shape: f32[1,128], index: 10, kind: input, shape index: {}]
  %s11 = inlined_call_operand.vmem [shape: f32[1,128], index: 11, kind: input, shape index: {}]
  %s12 = inlined_call_operand.vmem [shape: f32[1,128], index: 12, kind: input, shape index: {}]
  %s13 = inlined_call_operand.vmem [shape: f32[512,128], index: 13, kind: input, shape index: {}]
  %s14 = inlined_call_operand.vmem [shape: f32[1,128], index: 14, kind: input, shape index: {}]
  %s15 = inlined_call_operand.vmem [shape: f32[128,128], index: 15, kind: input, shape index: {}]
  %s16 = inlined_call_operand.vmem [shape: f32[1,128], index: 16, kind: input, shape index: {}]
  %s17 = inlined_call_operand.hbm [shape: f32[2,1,128], index: 17, kind: output, shape index: {}]
  %s18 = sld [smem:[#allocation0]]
  $region109: #{tpu_custom_call.1} parent=0
    _
  %s20 = ssub.s32 1, %s18
  %s21 = scalar_select 0, %s20, %s18
  $region1: #{tpu_custom_call.1} parent=0
    #allocation8 [shape = 'u8[589824]{0}', space=vmem, size = 0x90000, scoped, tag = 'input window, operand 5, single buffered']
    #allocation9 [shape = 's32[2]{0}', space=sflag, size = 0x8, scoped, tag = 'scoped memory for tpu_custom_call.1']
    #allocation10 [shape = 's32[2]{0}', space=sflag, size = 0x8, scoped, tag = 'scoped memory for tpu_custom_call.1']
    #allocation11 [shape = 'u8[589824]{0}', space=vmem, size = 0x90000, scoped, tag = 'input window, operand 9, single buffered']
    #allocation12 [shape = 's32[1]{0}', space=sflag, size = 0x4, scoped, tag = 'scoped memory for tpu_custom_call.1']
    #allocation13 [shape = 'u8[1024]{0}', space=vmem, size = 0x400, scoped, tag = 'output window, operand 0']
    %22 = vsyncpa [#allocation9], 0
    %23 = vsyncpa [#allocation12], 0
    %24 = vsyncpa [#allocation10], 0
    %s25 = scalar_lea.sflag [#allocation10], 1
    %26 = vsyncpa %s25, 0
    loop: start=0, step=1, limit=4
    $region2: #{tpu_custom_call.1} parent=1 // loop_pre_header
      _
    $region3: #{tpu_custom_call.1} parent=1 // loop_header
      %s28 = sphi 0, %s32
      %p29 = scmp.ge.s32.totalorder %s28, 4
      %s38 = sphi 0, %s40
      %s41 = sphi 0, %s38
      %s42 = sphi 0, %s41
      %s58 = sphi 0, %s42
      %s62 = sphi 0, %s62
      %s64 = sphi 0, %s62
      %s65 = sphi 0, %s64
      %s79 = sphi 0, %s65
      %s83 = sphi 0, %s83
      %s85 = sphi 0, %s83
      %s86 = sphi 0, %s85
      %s100 = sphi 0, %s86
      %s104 = sphi 0, %s104
      %s106 = sphi 0, %s104
      %s107 = sphi 0, %s106
      %s121 = sphi 0, %s107
      %s125 = sphi 0, %s125
      %s127 = sphi 0, %s125
      %s128 = sphi 0, %s127
      %s142 = sphi 0, %s128
      %s146 = sphi 0, %s146
      %s148 = sphi 0, %s146
      %s149 = sphi 0, %s148
      %s163 = sphi 0, %s149
      %s167 = sphi 0, %s167
      %s169 = sphi 0, %s167
      %s170 = sphi 0, %s169
      %s184 = sphi 0, %s170
      %s188 = sphi 0, %s188
      %s190 = sphi 0, %s188
      %s191 = sphi 0, %s190
      %s205 = sphi 0, %s191
      %s209 = sphi 0, %s209
      %s211 = sphi 0, %s209
      %s212 = sphi 0, %s211
      %s226 = sphi 0, %s212
      %s230 = sphi 0, %s230
      %s232 = sphi 0, %s230
      %s233 = sphi 0, %s232
      %s247 = sphi 0, %s233
      %s251 = sphi 0, %s251
      %s253 = sphi 0, %s251
      %s254 = sphi 0, %s253
      %s268 = sphi 0, %s254
      %s272 = sphi 0, %s272
      %s274 = sphi 0, %s272
      %s275 = sphi 0, %s274
      %s289 = sphi 0, %s275
      %s293 = sphi 0, %s293
      %s295 = sphi 0, %s293
      %s296 = sphi 0, %s295
      %s310 = sphi 0, %s296
      %s314 = sphi 0, %s314
      %s316 = sphi 0, %s314
      %s317 = sphi 0, %s316
      %s331 = sphi 0, %s317
      %s335 = sphi 0, %s335
      %s337 = sphi 0, %s335
      %s338 = sphi 0, %s337
      %s352 = sphi 0, %s338
      %s356 = sphi 0, %s356
      %s358 = sphi 0, %s356
      %s359 = sphi 0, %s358
      %s373 = sphi 0, %s359
      %s377 = sphi 0, %s377
      %s379 = sphi 0, %s377
      %s380 = sphi 0, %s379
      %s394 = sphi 0, %s380
      %s400 = sphi 0, %s402
      %s403 = sphi 0, %s400
      %s404 = sphi 0, %s403
      %s420 = sphi 0, %s404
    $region4: #{tpu_custom_call.1} parent=1 // loop_header_branch
      %31 = sbr.rel (%p29) target = $region8
    $region5: #{tpu_custom_call.1} parent=1 // loop_body
      %s33 = ssub.s32 %s28, 1
      %s34 = ssub.s32 %s28, 2
      %s35 = sadd.s32 %s28, 1
      %s36 = ssub.s32 %s28, %s35
      %p37 = scmp.eq.s32.totalorder %s36, 0
      %s39 = sadd.s32 %s38, 1
      %s40 = scalar_select %p37, %s38, %s39
      %p43 = pneg %p37
      %p44 = scmp.eq.s32.totalorder %s28, 1
      %p45 = por %p43, %p44
      %p46 = scmp.ne.s32.totalorder %s38, %s41
      %p47 = scmp.eq.s32.totalorder %s28, 0
      %p48 = por %p46, %p47
      %p49 = scmp.ne.s32.totalorder %s38, %s41
      %p50 = scmp.eq.s32.totalorder %s33, 1
      %p51 = por %p49, %p50
      %p52 = scmp.ne.s32.totalorder %s41, %s42
      %p53 = scmp.eq.s32.totalorder %s33, 0
      %p54 = por %p52, %p53
      %p55 = scmp.ne.s32.totalorder %s41, %s42
      %p56 = scmp.eq.s32.totalorder %s34, 1
      %p57 = por %p55, %p56
      %p59 = scmp.ne.s32.totalorder %s42, %s58
      %p60 = scmp.eq.s32.totalorder %s34, 0
      %p61 = por %p59, %p60
      %s63 = sadd.s32 %s62, 1
      %p66 = scmp.eq.s32.totalorder %s28, 1
      %p67 = scmp.ne.s32.totalorder %s62, %s64
      %p68 = scmp.eq.s32.totalorder %s28, 0
      %p69 = por %p67, %p68
      %p70 = scmp.ne.s32.totalorder %s62, %s64
      %p71 = scmp.eq.s32.totalorder %s33, 1
      %p72 = por %p70, %p71
      %p73 = scmp.ne.s32.totalorder %s64, %s65
      %p74 = scmp.eq.s32.totalorder %s33, 0
      %p75 = por %p73, %p74
      %p76 = scmp.ne.s32.totalorder %s64, %s65
      %p77 = scmp.eq.s32.totalorder %s34, 1
      %p78 = por %p76, %p77
      %p80 = scmp.ne.s32.totalorder %s65, %s79
      %p81 = scmp.eq.s32.totalorder %s34, 0
      %p82 = por %p80, %p81
      %s84 = sadd.s32 %s83, 1
      %p87 = scmp.eq.s32.totalorder %s28, 1
      %p88 = scmp.ne.s32.totalorder %s83, %s85
      %p89 = scmp.eq.s32.totalorder %s28, 0
      %p90 = por %p88, %p89
      %p91 = scmp.ne.s32.totalorder %s83, %s85
      %p92 = scmp.eq.s32.totalorder %s33, 1
      %p93 = por %p91, %p92
      %p94 = scmp.ne.s32.totalorder %s85, %s86
      %p95 = scmp.eq.s32.totalorder %s33, 0
      %p96 = por %p94, %p95
      %p97 = scmp.ne.s32.totalorder %s85, %s86
      %p98 = scmp.eq.s32.totalorder %s34, 1
      %p99 = por %p97, %p98
      %p101 = scmp.ne.s32.totalorder %s86, %s100
      %p102 = scmp.eq.s32.totalorder %s34, 0
      %p103 = por %p101, %p102
      %s105 = sadd.s32 %s104, 1
      %p108 = scmp.eq.s32.totalorder %s28, 1
      %p109 = scmp.ne.s32.totalorder %s104, %s106
      %p110 = scmp.eq.s32.totalorder %s28, 0
      %p111 = por %p109, %p110
      %p112 = scmp.ne.s32.totalorder %s104, %s106
      %p113 = scmp.eq.s32.totalorder %s33, 1
      %p114 = por %p112, %p113
      %p115 = scmp.ne.s32.totalorder %s106, %s107
      %p116 = scmp.eq.s32.totalorder %s33, 0
      %p117 = por %p115, %p116
      %p118 = scmp.ne.s32.totalorder %s106, %s107
      %p119 = scmp.eq.s32.totalorder %s34, 1
      %p120 = por %p118, %p119
      %p122 = scmp.ne.s32.totalorder %s107, %s121
      %p123 = scmp.eq.s32.totalorder %s34, 0
      %p124 = por %p122, %p123
      %s126 = sadd.s32 %s125, 1
      %p129 = scmp.eq.s32.totalorder %s28, 1
      %p130 = scmp.ne.s32.totalorder %s125, %s127
      %p131 = scmp.eq.s32.totalorder %s28, 0
      %p132 = por %p130, %p131
      %p133 = scmp.ne.s32.totalorder %s125, %s127
      %p134 = scmp.eq.s32.totalorder %s33, 1
      %p135 = por %p133, %p134
      %p136 = scmp.ne.s32.totalorder %s127, %s128
      %p137 = scmp.eq.s32.totalorder %s33, 0
      %p138 = por %p136, %p137
      %p139 = scmp.ne.s32.totalorder %s127, %s128
      %p140 = scmp.eq.s32.totalorder %s34, 1
      %p141 = por %p139, %p140
      %p143 = scmp.ne.s32.totalorder %s128, %s142
      %p144 = scmp.eq.s32.totalorder %s34, 0
      %p145 = por %p143, %p144
      %s147 = sadd.s32 %s146, 1
      %p150 = scmp.eq.s32.totalorder %s28, 1
      %p151 = scmp.ne.s32.totalorder %s146, %s148
      %p152 = scmp.eq.s32.totalorder %s28, 0
      %p153 = por %p151, %p152
      %p154 = scmp.ne.s32.totalorder %s146, %s148
      %p155 = scmp.eq.s32.totalorder %s33, 1
      %p156 = por %p154, %p155
      %p157 = scmp.ne.s32.totalorder %s148, %s149
      %p158 = scmp.eq.s32.totalorder %s33, 0
      %p159 = por %p157, %p158
      %p160 = scmp.ne.s32.totalorder %s148, %s149
      %p161 = scmp.eq.s32.totalorder %s34, 1
      %p162 = por %p160, %p161
      %p164 = scmp.ne.s32.totalorder %s149, %s163
      %p165 = scmp.eq.s32.totalorder %s34, 0
      %p166 = por %p164, %p165
      %s168 = sadd.s32 %s167, 1
      %p171 = scmp.eq.s32.totalorder %s28, 1
      %p172 = scmp.ne.s32.totalorder %s167, %s169
      %p173 = scmp.eq.s32.totalorder %s28, 0
      %p174 = por %p172, %p173
      %p175 = scmp.ne.s32.totalorder %s167, %s169
      %p176 = scmp.eq.s32.totalorder %s33, 1
      %p177 = por %p175, %p176
      %p178 = scmp.ne.s32.totalorder %s169, %s170
      %p179 = scmp.eq.s32.totalorder %s33, 0
      %p180 = por %p178, %p179
      %p181 = scmp.ne.s32.totalorder %s169, %s170
      %p182 = scmp.eq.s32.totalorder %s34, 1
      %p183 = por %p181, %p182
      %p185 = scmp.ne.s32.totalorder %s170, %s184
      %p186 = scmp.eq.s32.totalorder %s34, 0
      %p187 = por %p185, %p186
      %s189 = sadd.s32 %s188, 1
      %p192 = scmp.eq.s32.totalorder %s28, 1
      %p193 = scmp.ne.s32.totalorder %s188, %s190
      %p194 = scmp.eq.s32.totalorder %s28, 0
      %p195 = por %p193, %p194
      %p196 = scmp.ne.s32.totalorder %s188, %s190
      %p197 = scmp.eq.s32.totalorder %s33, 1
      %p198 = por %p196, %p197
      %p199 = scmp.ne.s32.totalorder %s190, %s191
      %p200 = scmp.eq.s32.totalorder %s33, 0
      %p201 = por %p199, %p200
      %p202 = scmp.ne.s32.totalorder %s190, %s191
      %p203 = scmp.eq.s32.totalorder %s34, 1
      %p204 = por %p202, %p203
      %p206 = scmp.ne.s32.totalorder %s191, %s205
      %p207 = scmp.eq.s32.totalorder %s34, 0
      %p208 = por %p206, %p207
      %s210 = sadd.s32 %s209, 1
      %p213 = scmp.eq.s32.totalorder %s28, 1
      %p214 = scmp.ne.s32.totalorder %s209, %s211
      %p215 = scmp.eq.s32.totalorder %s28, 0
      %p216 = por %p214, %p215
      %p217 = scmp.ne.s32.totalorder %s209, %s211
      %p218 = scmp.eq.s32.totalorder %s33, 1
      %p219 = por %p217, %p218
      %p220 = scmp.ne.s32.totalorder %s211, %s212
      %p221 = scmp.eq.s32.totalorder %s33, 0
      %p222 = por %p220, %p221
      %p223 = scmp.ne.s32.totalorder %s211, %s212
      %p224 = scmp.eq.s32.totalorder %s34, 1
      %p225 = por %p223, %p224
      %p227 = scmp.ne.s32.totalorder %s212, %s226
      %p228 = scmp.eq.s32.totalorder %s34, 0
      %p229 = por %p227, %p228
      %s231 = sadd.s32 %s230, 1
      %p234 = scmp.eq.s32.totalorder %s28, 1
      %p235 = scmp.ne.s32.totalorder %s230, %s232
      %p236 = scmp.eq.s32.totalorder %s28, 0
      %p237 = por %p235, %p236
      %p238 = scmp.ne.s32.totalorder %s230, %s232
      %p239 = scmp.eq.s32.totalorder %s33, 1
      %p240 = por %p238, %p239
      %p241 = scmp.ne.s32.totalorder %s232, %s233
      %p242 = scmp.eq.s32.totalorder %s33, 0
      %p243 = por %p241, %p242
      %p244 = scmp.ne.s32.totalorder %s232, %s233
      %p245 = scmp.eq.s32.totalorder %s34, 1
      %p246 = por %p244, %p245
      %p248 = scmp.ne.s32.totalorder %s233, %s247
      %p249 = scmp.eq.s32.totalorder %s34, 0
      %p250 = por %p248, %p249
      %s252 = sadd.s32 %s251, 1
      %p255 = scmp.eq.s32.totalorder %s28, 1
      %p256 = scmp.ne.s32.totalorder %s251, %s253
      %p257 = scmp.eq.s32.totalorder %s28, 0
      %p258 = por %p256, %p257
      %p259 = scmp.ne.s32.totalorder %s251, %s253
      %p260 = scmp.eq.s32.totalorder %s33, 1
      %p261 = por %p259, %p260
      %p262 = scmp.ne.s32.totalorder %s253, %s254
      %p263 = scmp.eq.s32.totalorder %s33, 0
      %p264 = por %p262, %p263
      %p265 = scmp.ne.s32.totalorder %s253, %s254
      %p266 = scmp.eq.s32.totalorder %s34, 1
      %p267 = por %p265, %p266
      %p269 = scmp.ne.s32.totalorder %s254, %s268
      %p270 = scmp.eq.s32.totalorder %s34, 0
      %p271 = por %p269, %p270
      %s273 = sadd.s32 %s272, 1
      %p276 = scmp.eq.s32.totalorder %s28, 1
      %p277 = scmp.ne.s32.totalorder %s272, %s274
      %p278 = scmp.eq.s32.totalorder %s28, 0
      %p279 = por %p277, %p278
      %p280 = scmp.ne.s32.totalorder %s272, %s274
      %p281 = scmp.eq.s32.totalorder %s33, 1
      %p282 = por %p280, %p281
      %p283 = scmp.ne.s32.totalorder %s274, %s275
      %p284 = scmp.eq.s32.totalorder %s33, 0
      %p285 = por %p283, %p284
      %p286 = scmp.ne.s32.totalorder %s274, %s275
      %p287 = scmp.eq.s32.totalorder %s34, 1
      %p288 = por %p286, %p287
      %p290 = scmp.ne.s32.totalorder %s275, %s289
      %p291 = scmp.eq.s32.totalorder %s34, 0
      %p292 = por %p290, %p291
      %s294 = sadd.s32 %s293, 1
      %p297 = scmp.eq.s32.totalorder %s28, 1
      %p298 = scmp.ne.s32.totalorder %s293, %s295
      %p299 = scmp.eq.s32.totalorder %s28, 0
      %p300 = por %p298, %p299
      %p301 = scmp.ne.s32.totalorder %s293, %s295
      %p302 = scmp.eq.s32.totalorder %s33, 1
      %p303 = por %p301, %p302
      %p304 = scmp.ne.s32.totalorder %s295, %s296
      %p305 = scmp.eq.s32.totalorder %s33, 0
      %p306 = por %p304, %p305
      %p307 = scmp.ne.s32.totalorder %s295, %s296
      %p308 = scmp.eq.s32.totalorder %s34, 1
      %p309 = por %p307, %p308
      %p311 = scmp.ne.s32.totalorder %s296, %s310
      %p312 = scmp.eq.s32.totalorder %s34, 0
      %p313 = por %p311, %p312
      %s315 = sadd.s32 %s314, 1
      %p318 = scmp.eq.s32.totalorder %s28, 1
      %p319 = scmp.ne.s32.totalorder %s314, %s316
      %p320 = scmp.eq.s32.totalorder %s28, 0
      %p321 = por %p319, %p320
      %p322 = scmp.ne.s32.totalorder %s314, %s316
      %p323 = scmp.eq.s32.totalorder %s33, 1
      %p324 = por %p322, %p323
      %p325 = scmp.ne.s32.totalorder %s316, %s317
      %p326 = scmp.eq.s32.totalorder %s33, 0
      %p327 = por %p325, %p326
      %p328 = scmp.ne.s32.totalorder %s316, %s317
      %p329 = scmp.eq.s32.totalorder %s34, 1
      %p330 = por %p328, %p329
      %p332 = scmp.ne.s32.totalorder %s317, %s331
      %p333 = scmp.eq.s32.totalorder %s34, 0
      %p334 = por %p332, %p333
      %s336 = sadd.s32 %s335, 1
      %p339 = scmp.eq.s32.totalorder %s28, 1
      %p340 = scmp.ne.s32.totalorder %s335, %s337
      %p341 = scmp.eq.s32.totalorder %s28, 0
      %p342 = por %p340, %p341
      %p343 = scmp.ne.s32.totalorder %s335, %s337
      %p344 = scmp.eq.s32.totalorder %s33, 1
      %p345 = por %p343, %p344
      %p346 = scmp.ne.s32.totalorder %s337, %s338
      %p347 = scmp.eq.s32.totalorder %s33, 0
      %p348 = por %p346, %p347
      %p349 = scmp.ne.s32.totalorder %s337, %s338
      %p350 = scmp.eq.s32.totalorder %s34, 1
      %p351 = por %p349, %p350
      %p353 = scmp.ne.s32.totalorder %s338, %s352
      %p354 = scmp.eq.s32.totalorder %s34, 0
      %p355 = por %p353, %p354
      %s357 = sadd.s32 %s356, 1
      %p360 = scmp.eq.s32.totalorder %s28, 1
      %p361 = scmp.ne.s32.totalorder %s356, %s358
      %p362 = scmp.eq.s32.totalorder %s28, 0
      %p363 = por %p361, %p362
      %p364 = scmp.ne.s32.totalorder %s356, %s358
      %p365 = scmp.eq.s32.totalorder %s33, 1
      %p366 = por %p364, %p365
      %p367 = scmp.ne.s32.totalorder %s358, %s359
      %p368 = scmp.eq.s32.totalorder %s33, 0
      %p369 = por %p367, %p368
      %p370 = scmp.ne.s32.totalorder %s358, %s359
      %p371 = scmp.eq.s32.totalorder %s34, 1
      %p372 = por %p370, %p371
      %p374 = scmp.ne.s32.totalorder %s359, %s373
      %p375 = scmp.eq.s32.totalorder %s34, 0
      %p376 = por %p374, %p375
      %s378 = sadd.s32 %s377, 1
      %p381 = scmp.eq.s32.totalorder %s28, 1
      %p382 = scmp.ne.s32.totalorder %s377, %s379
      %p383 = scmp.eq.s32.totalorder %s28, 0
      %p384 = por %p382, %p383
      %p385 = scmp.ne.s32.totalorder %s377, %s379
      %p386 = scmp.eq.s32.totalorder %s33, 1
      %p387 = por %p385, %p386
      %p388 = scmp.ne.s32.totalorder %s379, %s380
      %p389 = scmp.eq.s32.totalorder %s33, 0
      %p390 = por %p388, %p389
      %p391 = scmp.ne.s32.totalorder %s379, %s380
      %p392 = scmp.eq.s32.totalorder %s34, 1
      %p393 = por %p391, %p392
      %p395 = scmp.ne.s32.totalorder %s380, %s394
      %p396 = scmp.eq.s32.totalorder %s34, 0
      %p397 = por %p395, %p396
      %s398 = ssub.s32 %s28, %s35
      %p399 = scmp.eq.s32.totalorder %s398, 0
      %s401 = sadd.s32 %s400, 1
      %s402 = scalar_select %p399, %s400, %s401
      %p405 = pneg %p399
      %p406 = scmp.eq.s32.totalorder %s28, 1
      %p407 = por %p405, %p406
      %p408 = scmp.ne.s32.totalorder %s400, %s403
      %p409 = scmp.eq.s32.totalorder %s28, 0
      %p410 = por %p408, %p409
      %p411 = scmp.ne.s32.totalorder %s400, %s403
      %p412 = scmp.eq.s32.totalorder %s33, 1
      %p413 = por %p411, %p412
      %p414 = scmp.ne.s32.totalorder %s403, %s404
      %p415 = scmp.eq.s32.totalorder %s33, 0
      %p416 = por %p414, %p415
      %p417 = scmp.ne.s32.totalorder %s403, %s404
      %p418 = scmp.eq.s32.totalorder %s34, 1
      %p419 = por %p417, %p418
      %p421 = scmp.ne.s32.totalorder %s404, %s420
      %p422 = scmp.eq.s32.totalorder %s34, 0
      %p423 = por %p421, %p422
      %p424 = scmp.le.s32.totalorder 1, %s28
      %p425 = scmp.lt.s32.totalorder %s28, 3
      %p426 = pnand %p424, %p425
      %p427 = pneg %p426
      // Predicated region
      $region9: #{tpu_custom_call.1} parent=5 // pred_check
        _
      $region10: #{tpu_custom_call.1} parent=5 // pred_check_branch
        %429 = sbr.rel (%p426) target = $region12
      $region11: #{tpu_custom_call.1} parent=5 // pred_region
        %s430 = ssub.s32 %s28, 1
        // Predicated region
        $region13: #{tpu_custom_call.1} parent=11 // pred_check
          %p431 = pneg %p75
        $region14: #{tpu_custom_call.1} parent=11 // pred_check_branch
          %433 = sbr.rel (%p431) target = $region16
        $region15: #{tpu_custom_call.1} parent=11 // pred_region
          _
        $region16: #{tpu_custom_call.1} parent=11 // pred_fallthru
          _
        // Predicated region
        $region17: #{tpu_custom_call.1} parent=11 // pred_check
          %p434 = pneg %p96
        $region18: #{tpu_custom_call.1} parent=11 // pred_check_branch
          %436 = sbr.rel (%p434) target = $region20
        $region19: #{tpu_custom_call.1} parent=11 // pred_region
          _
        $region20: #{tpu_custom_call.1} parent=11 // pred_fallthru
          _
        // Predicated region
        $region21: #{tpu_custom_call.1} parent=11 // pred_check
          %p437 = pneg %p117
        $region22: #{tpu_custom_call.1} parent=11 // pred_check_branch
          %439 = sbr.rel (%p437) target = $region24
        $region23: #{tpu_custom_call.1} parent=11 // pred_region
          _
        $region24: #{tpu_custom_call.1} parent=11 // pred_fallthru
          _
        // Predicated region
        $region25: #{tpu_custom_call.1} parent=11 // pred_check
          %p440 = pneg %p138
        $region26: #{tpu_custom_call.1} parent=11 // pred_check_branch
          %442 = sbr.rel (%p440) target = $region28
        $region27: #{tpu_custom_call.1} parent=11 // pred_region
          _
        $region28: #{tpu_custom_call.1} parent=11 // pred_fallthru
          _
        // Predicated region
        $region29: #{tpu_custom_call.1} parent=11 // pred_check
          %p443 = pneg %p159
        $region30: #{tpu_custom_call.1} parent=11 // pred_check_branch
          %445 = sbr.rel (%p443) target = $region32
        $region31: #{tpu_custom_call.1} parent=11 // pred_region
          %s447 = ssub.s32 18432, 18432
          %448 = vsyncadd [#allocation9], %s447
          %s449 = sshll.u32 [#allocation8], 4
          %s450 = int_to_ptr.vmem [resolvable:$true] %s449
          %455 = dma.hbm_to_vmem [thread:$0]  %s5, 18432, %s450, [#allocation9], 128, 128, 8
        $region32: #{tpu_custom_call.1} parent=11 // pred_fallthru
          _
        // Predicated region
        $region33: #{tpu_custom_call.1} parent=11 // pred_check
          %p456 = pneg %p180
        $region34: #{tpu_custom_call.1} parent=11 // pred_check_branch
          %458 = sbr.rel (%p456) target = $region36
        $region35: #{tpu_custom_call.1} parent=11 // pred_region
          _
        $region36: #{tpu_custom_call.1} parent=11 // pred_fallthru
          _
        // Predicated region
        $region37: #{tpu_custom_call.1} parent=11 // pred_check
          %p459 = pneg %p201
        $region38: #{tpu_custom_call.1} parent=11 // pred_check_branch
          %461 = sbr.rel (%p459) target = $region40
        $region39: #{tpu_custom_call.1} parent=11 // pred_region
          _
        $region40: #{tpu_custom_call.1} parent=11 // pred_fallthru
          _
        // Predicated region
        $region41: #{tpu_custom_call.1} parent=11 // pred_check
          %p462 = pneg %p222
        $region42: #{tpu_custom_call.1} parent=11 // pred_check_branch
          %464 = sbr.rel (%p462) target = $region44
        $region43: #{tpu_custom_call.1} parent=11 // pred_region
          _
        $region44: #{tpu_custom_call.1} parent=11 // pred_fallthru
          _
        // Predicated region
        $region45: #{tpu_custom_call.1} parent=11 // pred_check
          %p465 = pneg %p243
        $region46: #{tpu_custom_call.1} parent=11 // pred_check_branch
          %467 = sbr.rel (%p465) target = $region48
        $region47: #{tpu_custom_call.1} parent=11 // pred_region
          %s469 = ssub.s32 18432, 18432
          %470 = vsyncadd [#allocation12], %s469
          %s471 = sshll.u32 [#allocation11], 4
          %s472 = int_to_ptr.vmem [resolvable:$true] %s471
          %477 = dma.hbm_to_vmem [thread:$0]  %s9, 18432, %s472, [#allocation12], 128, 128, 8
        $region48: #{tpu_custom_call.1} parent=11 // pred_fallthru
          _
        // Predicated region
        $region49: #{tpu_custom_call.1} parent=11 // pred_check
          %p478 = pneg %p264
        $region50: #{tpu_custom_call.1} parent=11 // pred_check_branch
          %480 = sbr.rel (%p478) target = $region52
        $region51: #{tpu_custom_call.1} parent=11 // pred_region
          _
        $region52: #{tpu_custom_call.1} parent=11 // pred_fallthru
          _
        // Predicated region
        $region53: #{tpu_custom_call.1} parent=11 // pred_check
          %p481 = pneg %p285
        $region54: #{tpu_custom_call.1} parent=11 // pred_check_branch
          %483 = sbr.rel (%p481) target = $region56
        $region55: #{tpu_custom_call.1} parent=11 // pred_region
          _
        $region56: #{tpu_custom_call.1} parent=11 // pred_fallthru
          _
        // Predicated region
        $region57: #{tpu_custom_call.1} parent=11 // pred_check
          %p484 = pneg %p306
        $region58: #{tpu_custom_call.1} parent=11 // pred_check_branch
          %486 = sbr.rel (%p484) target = $region60
        $region59: #{tpu_custom_call.1} parent=11 // pred_region
          _
        $region60: #{tpu_custom_call.1} parent=11 // pred_fallthru
          _
        // Predicated region
        $region61: #{tpu_custom_call.1} parent=11 // pred_check
          %p487 = pneg %p327
        $region62: #{tpu_custom_call.1} parent=11 // pred_check_branch
          %489 = sbr.rel (%p487) target = $region64
        $region63: #{tpu_custom_call.1} parent=11 // pred_region
          _
        $region64: #{tpu_custom_call.1} parent=11 // pred_fallthru
          _
        // Predicated region
        $region65: #{tpu_custom_call.1} parent=11 // pred_check
          %p490 = pneg %p348
        $region66: #{tpu_custom_call.1} parent=11 // pred_check_branch
          %492 = sbr.rel (%p490) target = $region68
        $region67: #{tpu_custom_call.1} parent=11 // pred_region
          _
        $region68: #{tpu_custom_call.1} parent=11 // pred_fallthru
          _
        // Predicated region
        $region69: #{tpu_custom_call.1} parent=11 // pred_check
          %p493 = pneg %p369
        $region70: #{tpu_custom_call.1} parent=11 // pred_check_branch
          %495 = sbr.rel (%p493) target = $region72
        $region71: #{tpu_custom_call.1} parent=11 // pred_region
          _
        $region72: #{tpu_custom_call.1} parent=11 // pred_fallthru
          _
        // Predicated region
        $region73: #{tpu_custom_call.1} parent=11 // pred_check
          %p496 = pneg %p390
        $region74: #{tpu_custom_call.1} parent=11 // pred_check_branch
          %498 = sbr.rel (%p496) target = $region76
        $region75: #{tpu_custom_call.1} parent=11 // pred_region
          _
        $region76: #{tpu_custom_call.1} parent=11 // pred_fallthru
          _
      $region12: #{tpu_custom_call.1} parent=5 // pred_fallthru
        _
      %p499 = scmp.lt.s32.totalorder %s28, 2
      // Predicated region
      $region77: #{tpu_custom_call.1} parent=5 // pred_check
        %p500 = pneg %p499
      $region78: #{tpu_custom_call.1} parent=5 // pred_check_branch
        %502 = sbr.rel (%p500) target = $region80
      $region79: #{tpu_custom_call.1} parent=5 // pred_region
        // Predicated region
        $region81: #{tpu_custom_call.1} parent=79 // pred_check
          %p503 = pneg %p48
        $region82: #{tpu_custom_call.1} parent=79 // pred_check_branch
          %505 = sbr.rel (%p503) target = $region84
        $region83: #{tpu_custom_call.1} parent=79 // pred_region
          %p506 = scmp.lt.s32.totalorder %s28, 1
          %s507 = scalar_select %p506, %s28, 1
          %s508 = smul.addr %s507, 32
          %s509 = smul.addr %s508, 8
          %s510 = scalar_lea.vmem %s0, %s509
        $region84: #{tpu_custom_call.1} parent=79 // pred_fallthru
          _
      $region80: #{tpu_custom_call.1} parent=5 // pred_fallthru
        _
      %p511 = scmp.le.s32.totalorder 1, %s28
      %p512 = scmp.lt.s32.totalorder %s28, 3
      %p513 = pnand %p511, %p512
      %p514 = pneg %p513
      // Predicated region
      $region85: #{tpu_custom_call.1} parent=5 // pred_check
        _
      $region86: #{tpu_custom_call.1} parent=5 // pred_check_branch
        %516 = sbr.rel (%p513) target = $region88
      $region87: #{tpu_custom_call.1} parent=5 // pred_region
        %s517 = ssub.s32 %s28, 1
        // Predicated region
        $region89: #{tpu_custom_call.1} parent=87 // pred_check
          %p518 = pneg %p159
        $region90: #{tpu_custom_call.1} parent=87 // pred_check_branch
          %520 = sbr.rel (%p518) target = $region92
        $region91: #{tpu_custom_call.1} parent=87 // pred_region
          %521 = dma.done [#allocation9], 18432
        $region92: #{tpu_custom_call.1} parent=87 // pred_fallthru
          _
        // Predicated region
        $region93: #{tpu_custom_call.1} parent=87 // pred_check
          %p522 = pneg %p243
        $region94: #{tpu_custom_call.1} parent=87 // pred_check_branch
          %524 = sbr.rel (%p522) target = $region96
        $region95: #{tpu_custom_call.1} parent=87 // pred_region
          %525 = dma.done [#allocation12], 18432
        $region96: #{tpu_custom_call.1} parent=87 // pred_fallthru
          _
        %p526 = scmp.lt.s32.totalorder %s33, 1
        %s527 = scalar_select %p526, %s33, 1
        %s528 = smul.addr %s527, 32
        %s529 = smul.addr %s528, 8
        %s530 = scalar_lea.vmem %s0, %s529
        %p531 = pneg %p54
        %p532 = pneg %p51
        %p533 = pneg %p75
        %p534 = pneg %p72
        %p535 = pneg %p96
        %p536 = pneg %p93
        %p537 = pneg %p117
        %p538 = pneg %p114
        %p539 = pneg %p138
        %p540 = pneg %p135
        %p541 = pneg %p159
        %p542 = pneg %p156
        %p543 = pneg %p180
        %p544 = pneg %p177
        %p545 = pneg %p201
        %p546 = pneg %p198
        %p547 = pneg %p222
        %p548 = pneg %p219
        %p549 = pneg %p243
        %p550 = pneg %p240
        %p551 = pneg %p264
        %p552 = pneg %p261
        %p553 = pneg %p285
        %p554 = pneg %p282
        %p555 = pneg %p306
        %p556 = pneg %p303
        %p557 = pneg %p327
        %p558 = pneg %p324
        %p559 = pneg %p348
        %p560 = pneg %p345
        %p561 = pneg %p369
        %p562 = pneg %p366
        %p563 = pneg %p390
        %p564 = pneg %p387
        %p565 = pneg %p416
        %p566 = pneg %p413
        %s567 = sand.u32 %s403, 1
        %s568 = scalar_lea.sflag [#allocation10], %s567
        %s569 = sand.u32 %s403, 1
        %s570 = scalar_lea.vmem [#allocation13], %s569
        %p571 = scmp.lt.s32.totalorder %s33, 1
        %s572 = scalar_select %p571, %s33, 1
        %s573 = smul.addr %s572, 32
        %s574 = smul.addr %s573, 8
        %s575 = scalar_lea.vmem %s0, %s574
        %v576 = vld [vmem:[%s575] sm:$0xff]
        %v577 = vld [vmem:[%s575 + $0x8] sm:$0xff]
        %v578 = vld [vmem:[%s575 + $0x10] sm:$0xff]
        %v579 = vld [vmem:[%s575 + $0x18] sm:$0xff]
        %v580 = vld [vmem:[%s575 + $0x20] sm:$0xff]
        %v581 = vld [vmem:[%s575 + $0x28] sm:$0xff]
        %v582 = vld [vmem:[%s575 + $0x30] sm:$0xff]
        %v583 = vld [vmem:[%s575 + $0x38] sm:$0xff]
        %v584 = vld [vmem:[%s575 + $0x40] sm:$0xff]
        %v585 = vld [vmem:[%s575 + $0x48] sm:$0xff]
        %v586 = vld [vmem:[%s575 + $0x50] sm:$0xff]
        %v587 = vld [vmem:[%s575 + $0x58] sm:$0xff]
        %v588 = vld [vmem:[%s575 + $0x60] sm:$0xff]
        %v589 = vld [vmem:[%s575 + $0x68] sm:$0xff]
        %v590 = vld [vmem:[%s575 + $0x70] sm:$0xff]
        %v591 = vld [vmem:[%s575 + $0x78] sm:$0xff]
        %v592 = vld [vmem:[%s575 + $0x80] sm:$0xff]
        %v593 = vld [vmem:[%s575 + $0x88] sm:$0xff]
        %v594 = vld [vmem:[%s575 + $0x90] sm:$0xff]
        %v595 = vld [vmem:[%s575 + $0x98] sm:$0xff]
        %v596 = vld [vmem:[%s575 + $0xa0] sm:$0xff]
        %v597 = vld [vmem:[%s575 + $0xa8] sm:$0xff]
        %v598 = vld [vmem:[%s575 + $0xb0] sm:$0xff]
        %v599 = vld [vmem:[%s575 + $0xb8] sm:$0xff]
        %v600 = vld [vmem:[%s575 + $0xc0] sm:$0xff]
        %v601 = vld [vmem:[%s575 + $0xc8] sm:$0xff]
        %v602 = vld [vmem:[%s575 + $0xd0] sm:$0xff]
        %v603 = vld [vmem:[%s575 + $0xd8] sm:$0xff]
        %v604 = vld [vmem:[%s575 + $0xe0] sm:$0xff]
        %v605 = vld [vmem:[%s575 + $0xe8] sm:$0xff]
        %v606 = vld [vmem:[%s575 + $0xf0] sm:$0xff]
        %v607 = vld [vmem:[%s575 + $0xf8] sm:$0xff]
        %vm608 = vcmask 31744
        %609 = vst.msk [vmem:[#allocation2] sm:$0xff] %vm608, 0.0
        %610 = vst.msk [vmem:[#allocation2 + $0x8] sm:$0xff] %vm608, 0.0
        %vm611 = vcmask 25600
        %612 = vst.msk [vmem:[#allocation2 + $0x10] sm:$0x3] %vm611, 0.0
        %613 = vst.msk [vmem:[#allocation2 + $0x18] sm:$0xff] %vm608, 0.0
        %614 = vst.msk [vmem:[#allocation2 + $0x20] sm:$0xff] %vm608, 0.0
        %615 = vst.msk [vmem:[#allocation2 + $0x28] sm:$0x3] %vm611, 0.0
        %616 = vst.msk [vmem:[#allocation2 + $0x30] sm:$0xff] %vm608, 0.0
        %617 = vst.msk [vmem:[#allocation2 + $0x38] sm:$0xff] %vm608, 0.0
        %618 = vst.msk [vmem:[#allocation2 + $0x40] sm:$0x3] %vm611, 0.0
        %619 = vst.msk [vmem:[#allocation2 + $0x48] sm:$0xff] %vm608, 0.0
        %620 = vst.msk [vmem:[#allocation2 + $0x50] sm:$0xff] %vm608, 0.0
        %621 = vst.msk [vmem:[#allocation2 + $0x58] sm:$0x3] %vm611, 0.0
        %622 = vst.msk [vmem:[#allocation2 + $0x60] sm:$0xff] %vm608, 0.0
        %623 = vst.msk [vmem:[#allocation2 + $0x68] sm:$0xff] %vm608, 0.0
        %624 = vst.msk [vmem:[#allocation2 + $0x70] sm:$0x3] %vm611, 0.0
        %625 = vst.msk [vmem:[#allocation2 + $0x78] sm:$0xff] %vm608, 0.0
        %626 = vst.msk [vmem:[#allocation2 + $0x80] sm:$0xff] %vm608, 0.0
        %627 = vst.msk [vmem:[#allocation2 + $0x88] sm:$0x3] %vm611, 0.0
        %628 = vst.msk [vmem:[#allocation2 + $0x90] sm:$0xff] %vm608, 0.0
        %629 = vst.msk [vmem:[#allocation2 + $0x98] sm:$0xff] %vm608, 0.0
        %630 = vst.msk [vmem:[#allocation2 + $0xa0] sm:$0x3] %vm611, 0.0
        %631 = vst.msk [vmem:[#allocation2 + $0xa8] sm:$0xff] %vm608, 0.0
        %632 = vst.msk [vmem:[#allocation2 + $0xb0] sm:$0xff] %vm608, 0.0
        %633 = vst.msk [vmem:[#allocation2 + $0xb8] sm:$0x3] %vm611, 0.0
        %634 = vst.msk [vmem:[#allocation2 + $0xc0] sm:$0xff] %vm608, 0.0
        %635 = vst.msk [vmem:[#allocation2 + $0xc8] sm:$0xff] %vm608, 0.0
        %636 = vst.msk [vmem:[#allocation2 + $0xd0] sm:$0x3] %vm611, 0.0
        %637 = vst.msk [vmem:[#allocation2 + $0xd8] sm:$0xff] %vm608, 0.0
        %638 = vst.msk [vmem:[#allocation2 + $0xe0] sm:$0xff] %vm608, 0.0
        %639 = vst.msk [vmem:[#allocation2 + $0xe8] sm:$0x3] %vm611, 0.0
        %640 = vst.msk [vmem:[#allocation2 + $0xf0] sm:$0xff] %vm608, 0.0
        %641 = vst.msk [vmem:[#allocation2 + $0xf8] sm:$0xff] %vm608, 0.0
        %642 = vst.msk [vmem:[#allocation2 + $0x100] sm:$0x3] %vm611, 0.0
        %643 = vst.msk [vmem:[#allocation2 + $0x108] sm:$0xff] %vm608, 0.0
        %644 = vst.msk [vmem:[#allocation2 + $0x110] sm:$0xff] %vm608, 0.0
        %645 = vst.msk [vmem:[#allocation2 + $0x118] sm:$0x3] %vm611, 0.0
        %646 = vst.msk [vmem:[#allocation2 + $0x120] sm:$0xff] %vm608, 0.0
        %647 = vst.msk [vmem:[#allocation2 + $0x128] sm:$0xff] %vm608, 0.0
        %648 = vst.msk [vmem:[#allocation2 + $0x130] sm:$0x3] %vm611, 0.0
        %649 = vst.msk [vmem:[#allocation2 + $0x138] sm:$0xff] %vm608, 0.0
        %650 = vst.msk [vmem:[#allocation2 + $0x140] sm:$0xff] %vm608, 0.0
        %651 = vst.msk [vmem:[#allocation2 + $0x148] sm:$0x3] %vm611, 0.0
        %652 = vst.msk [vmem:[#allocation2 + $0x150] sm:$0xff] %vm608, 0.0
        %653 = vst.msk [vmem:[#allocation2 + $0x158] sm:$0xff] %vm608, 0.0
        %654 = vst.msk [vmem:[#allocation2 + $0x160] sm:$0x3] %vm611, 0.0
        %655 = vst.msk [vmem:[#allocation2 + $0x168] sm:$0xff] %vm608, 0.0
        %656 = vst.msk [vmem:[#allocation2 + $0x170] sm:$0xff] %vm608, 0.0
        %657 = vst.msk [vmem:[#allocation2 + $0x178] sm:$0x3] %vm611, 0.0
        %658 = vst.msk [vmem:[#allocation2 + $0x180] sm:$0xff] %vm608, 0.0
        %659 = vst.msk [vmem:[#allocation2 + $0x188] sm:$0xff] %vm608, 0.0
        %660 = vst.msk [vmem:[#allocation2 + $0x190] sm:$0x3] %vm611, 0.0
        %661 = vst.msk [vmem:[#allocation2 + $0x198] sm:$0xff] %vm608, 0.0
        %662 = vst.msk [vmem:[#allocation2 + $0x1a0] sm:$0xff] %vm608, 0.0
        %663 = vst.msk [vmem:[#allocation2 + $0x1a8] sm:$0x3] %vm611, 0.0
        %s664 = scalar_lea.vmem [#allocation2], 24
        %665 = vst.msk [vmem:[%s664 + $0x1] sm:$0xff] %vm608, %v576
        %666 = vst.msk [vmem:[%s664 + $0x9] sm:$0xff] %vm608, %v577
        %667 = vst.msk [vmem:[%s664 + $0x19] sm:$0xff] %vm608, %v578
        %668 = vst.msk [vmem:[%s664 + $0x21] sm:$0xff] %vm608, %v579
        %669 = vst.msk [vmem:[%s664 + $0x31] sm:$0xff] %vm608, %v580
        %670 = vst.msk [vmem:[%s664 + $0x39] sm:$0xff] %vm608, %v581
        %671 = vst.msk [vmem:[%s664 + $0x49] sm:$0xff] %vm608, %v582
        %672 = vst.msk [vmem:[%s664 + $0x51] sm:$0xff] %vm608, %v583
        %673 = vst.msk [vmem:[%s664 + $0x61] sm:$0xff] %vm608, %v584
        %674 = vst.msk [vmem:[%s664 + $0x69] sm:$0xff] %vm608, %v585
        %675 = vst.msk [vmem:[%s664 + $0x79] sm:$0xff] %vm608, %v586
        %676 = vst.msk [vmem:[%s664 + $0x81] sm:$0xff] %vm608, %v587
        %677 = vst.msk [vmem:[%s664 + $0x91] sm:$0xff] %vm608, %v588
        %678 = vst.msk [vmem:[%s664 + $0x99] sm:$0xff] %vm608, %v589
        %679 = vst.msk [vmem:[%s664 + $0xa9] sm:$0xff] %vm608, %v590
        %680 = vst.msk [vmem:[%s664 + $0xb1] sm:$0xff] %vm608, %v591
        %681 = vst.msk [vmem:[%s664 + $0xc1] sm:$0xff] %vm608, %v592
        %682 = vst.msk [vmem:[%s664 + $0xc9] sm:$0xff] %vm608, %v593
        %683 = vst.msk [vmem:[%s664 + $0xd9] sm:$0xff] %vm608, %v594
        %684 = vst.msk [vmem:[%s664 + $0xe1] sm:$0xff] %vm608, %v595
        %685 = vst.msk [vmem:[%s664 + $0xf1] sm:$0xff] %vm608, %v596
        %686 = vst.msk [vmem:[%s664 + $0xf9] sm:$0xff] %vm608, %v597
        %687 = vst.msk [vmem:[%s664 + $0x109] sm:$0xff] %vm608, %v598
        %688 = vst.msk [vmem:[%s664 + $0x111] sm:$0xff] %vm608, %v599
        %689 = vst.msk [vmem:[%s664 + $0x121] sm:$0xff] %vm608, %v600
        %690 = vst.msk [vmem:[%s664 + $0x129] sm:$0xff] %vm608, %v601
        %691 = vst.msk [vmem:[%s664 + $0x139] sm:$0xff] %vm608, %v602
        %692 = vst.msk [vmem:[%s664 + $0x141] sm:$0xff] %vm608, %v603
        %693 = vst.msk [vmem:[%s664 + $0x151] sm:$0xff] %vm608, %v604
        %694 = vst.msk [vmem:[%s664 + $0x159] sm:$0xff] %vm608, %v605
        %695 = vst.msk [vmem:[%s664 + $0x169] sm:$0xff] %vm608, %v606
        %696 = vst.msk [vmem:[%s664 + $0x171] sm:$0xff] %vm608, %v607
        %v697 = vld [vmem:[#allocation2] sm:$0xff]
        %v698 = vld [vmem:[#allocation2 + $0x8] sm:$0xff]
        %v699 = vld [vmem:[#allocation2 + $0x18] sm:$0xff]
        %v700 = vld [vmem:[#allocation2 + $0x20] sm:$0xff]
        %v701 = vld [vmem:[#allocation2 + $0x30] sm:$0xff]
        %v702 = vld [vmem:[#allocation2 + $0x38] sm:$0xff]
        %v703 = vld [vmem:[#allocation2 + $0x48] sm:$0xff]
        %v704 = vld [vmem:[#allocation2 + $0x50] sm:$0xff]
        %v705 = vld [vmem:[#allocation2 + $0x60] sm:$0xff]
        %v706 = vld [vmem:[#allocation2 + $0x68] sm:$0xff]
        %v707 = vld [vmem:[#allocation2 + $0x78] sm:$0xff]
        %v708 = vld [vmem:[#allocation2 + $0x80] sm:$0xff]
        %v709 = vld [vmem:[#allocation2 + $0x90] sm:$0xff]
        %v710 = vld [vmem:[#allocation2 + $0x98] sm:$0xff]
        %v711 = vld [vmem:[#allocation2 + $0xa8] sm:$0xff]
        %v712 = vld [vmem:[#allocation2 + $0xb0] sm:$0xff]
        %v713 = vld [vmem:[#allocation2 + $0xc0] sm:$0xff]
        %v714 = vld [vmem:[#allocation2 + $0xc8] sm:$0xff]
        %v715 = vld [vmem:[#allocation2 + $0xd8] sm:$0xff]
        %v716 = vld [vmem:[#allocation2 + $0xe0] sm:$0xff]
        %v717 = vld [vmem:[#allocation2 + $0xf0] sm:$0xff]
        %v718 = vld [vmem:[#allocation2 + $0xf8] sm:$0xff]
        %v719 = vld [vmem:[#allocation2 + $0x108] sm:$0xff]
        %v720 = vld [vmem:[#allocation2 + $0x110] sm:$0xff]
        %v721 = vld [vmem:[#allocation2 + $0x120] sm:$0xff]
        %v722 = vld [vmem:[#allocation2 + $0x128] sm:$0xff]
        %v723 = vld [vmem:[#allocation2 + $0x138] sm:$0xff]
        %v724 = vld [vmem:[#allocation2 + $0x140] sm:$0xff]
        %v725 = vld [vmem:[#allocation2 + $0x150] sm:$0xff]
        %v726 = vld [vmem:[#allocation2 + $0x158] sm:$0xff]
        %v727 = vld [vmem:[#allocation2 + $0x168] sm:$0xff]
        %v728 = vld [vmem:[#allocation2 + $0x170] sm:$0xff]
        %729 = vst.msk [vmem:[#allocation3] sm:$0xff] %vm608, %v697
        %730 = vst.msk [vmem:[#allocation3 + $0x8] sm:$0xff] %vm608, %v698
        %731 = vst.msk [vmem:[#allocation3 + $0x10] sm:$0xff] %vm608, %v699
        %732 = vst.msk [vmem:[#allocation3 + $0x18] sm:$0xff] %vm608, %v700
        %733 = vst.msk [vmem:[#allocation3 + $0x20] sm:$0xff] %vm608, %v701
        %734 = vst.msk [vmem:[#allocation3 + $0x28] sm:$0xff] %vm608, %v702
        %735 = vst.msk [vmem:[#allocation3 + $0x30] sm:$0xff] %vm608, %v703
        %736 = vst.msk [vmem:[#allocation3 + $0x38] sm:$0xff] %vm608, %v704
        %737 = vst.msk [vmem:[#allocation3 + $0x40] sm:$0xff] %vm608, %v705
        %738 = vst.msk [vmem:[#allocation3 + $0x48] sm:$0xff] %vm608, %v706
        %739 = vst.msk [vmem:[#allocation3 + $0x50] sm:$0xff] %vm608, %v707
        %740 = vst.msk [vmem:[#allocation3 + $0x58] sm:$0xff] %vm608, %v708
        %741 = vst.msk [vmem:[#allocation3 + $0x60] sm:$0xff] %vm608, %v709
        %742 = vst.msk [vmem:[#allocation3 + $0x68] sm:$0xff] %vm608, %v710
        %743 = vst.msk [vmem:[#allocation3 + $0x70] sm:$0xff] %vm608, %v711
        %744 = vst.msk [vmem:[#allocation3 + $0x78] sm:$0xff] %vm608, %v712
        %745 = vst.msk [vmem:[#allocation3 + $0x80] sm:$0xff] %vm608, %v713
        %746 = vst.msk [vmem:[#allocation3 + $0x88] sm:$0xff] %vm608, %v714
        %747 = vst.msk [vmem:[#allocation3 + $0x90] sm:$0xff] %vm608, %v715
        %748 = vst.msk [vmem:[#allocation3 + $0x98] sm:$0xff] %vm608, %v716
        %749 = vst.msk [vmem:[#allocation3 + $0xa0] sm:$0xff] %vm608, %v717
        %750 = vst.msk [vmem:[#allocation3 + $0xa8] sm:$0xff] %vm608, %v718
        %751 = vst.msk [vmem:[#allocation3 + $0xb0] sm:$0xff] %vm608, %v719
        %752 = vst.msk [vmem:[#allocation3 + $0xb8] sm:$0xff] %vm608, %v720
        %753 = vst.msk [vmem:[#allocation3 + $0xc0] sm:$0xff] %vm608, %v721
        %754 = vst.msk [vmem:[#allocation3 + $0xc8] sm:$0xff] %vm608, %v722
        %755 = vst.msk [vmem:[#allocation3 + $0xd0] sm:$0xff] %vm608, %v723
        %756 = vst.msk [vmem:[#allocation3 + $0xd8] sm:$0xff] %vm608, %v724
        %757 = vst.msk [vmem:[#allocation3 + $0xe0] sm:$0xff] %vm608, %v725
        %758 = vst.msk [vmem:[#allocation3 + $0xe8] sm:$0xff] %vm608, %v726
        %759 = vst.msk [vmem:[#allocation3 + $0xf0] sm:$0xff] %vm608, %v727
        %760 = vst.msk [vmem:[#allocation3 + $0xf8] sm:$0xff] %vm608, %v728
        %v761 = vld [vmem:[#allocation2 + $0x1] sm:$0xff]
        %v762 = vld [vmem:[#allocation2 + $0x9] sm:$0xff]
        %v763 = vld [vmem:[#allocation2 + $0x19] sm:$0xff]
        %v764 = vld [vmem:[#allocation2 + $0x21] sm:$0xff]
        %v765 = vld [vmem:[#allocation2 + $0x31] sm:$0xff]
        %v766 = vld [vmem:[#allocation2 + $0x39] sm:$0xff]
        %v767 = vld [vmem:[#allocation2 + $0x49] sm:$0xff]
        %v768 = vld [vmem:[#allocation2 + $0x51] sm:$0xff]
        %v769 = vld [vmem:[#allocation2 + $0x61] sm:$0xff]
        %v770 = vld [vmem:[#allocation2 + $0x69] sm:$0xff]
        %v771 = vld [vmem:[#allocation2 + $0x79] sm:$0xff]
        %v772 = vld [vmem:[#allocation2 + $0x81] sm:$0xff]
        %v773 = vld [vmem:[#allocation2 + $0x91] sm:$0xff]
        %v774 = vld [vmem:[#allocation2 + $0x99] sm:$0xff]
        %v775 = vld [vmem:[#allocation2 + $0xa9] sm:$0xff]
        %v776 = vld [vmem:[#allocation2 + $0xb1] sm:$0xff]
        %v777 = vld [vmem:[#allocation2 + $0xc1] sm:$0xff]
        %v778 = vld [vmem:[#allocation2 + $0xc9] sm:$0xff]
        %v779 = vld [vmem:[#allocation2 + $0xd9] sm:$0xff]
        %v780 = vld [vmem:[#allocation2 + $0xe1] sm:$0xff]
        %v781 = vld [vmem:[#allocation2 + $0xf1] sm:$0xff]
        %v782 = vld [vmem:[#allocation2 + $0xf9] sm:$0xff]
        %v783 = vld [vmem:[#allocation2 + $0x109] sm:$0xff]
        %v784 = vld [vmem:[#allocation2 + $0x111] sm:$0xff]
        %v785 = vld [vmem:[#allocation2 + $0x121] sm:$0xff]
        %v786 = vld [vmem:[#allocation2 + $0x129] sm:$0xff]
        %v787 = vld [vmem:[#allocation2 + $0x139] sm:$0xff]
        %v788 = vld [vmem:[#allocation2 + $0x141] sm:$0xff]
        %v789 = vld [vmem:[#allocation2 + $0x151] sm:$0xff]
        %v790 = vld [vmem:[#allocation2 + $0x159] sm:$0xff]
        %v791 = vld [vmem:[#allocation2 + $0x169] sm:$0xff]
        %v792 = vld [vmem:[#allocation2 + $0x171] sm:$0xff]
        %825 = vrot.lane.b32.xlu0 %v761, 4
        %v826 = vpop.permute.xlu0 %825
        %827 = vrot.lane.b32.xlu0 %v762, 4
        %v828 = vpop.permute.xlu0 %827
        %829 = vrot.lane.b32.xlu0 %v763, 4
        %v830 = vpop.permute.xlu0 %829
        %831 = vrot.lane.b32.xlu0 %v764, 4
        %v832 = vpop.permute.xlu0 %831
        %833 = vrot.lane.b32.xlu0 %v765, 4
        %v834 = vpop.permute.xlu0 %833
        %835 = vrot.lane.b32.xlu0 %v766, 4
        %v836 = vpop.permute.xlu0 %835
        %837 = vrot.lane.b32.xlu0 %v767, 4
        %v838 = vpop.permute.xlu0 %837
        %839 = vrot.lane.b32.xlu0 %v768, 4
        %v840 = vpop.permute.xlu0 %839
        %841 = vrot.lane.b32.xlu0 %v769, 4
        %v842 = vpop.permute.xlu0 %841
        %843 = vrot.lane.b32.xlu0 %v770, 4
        %v844 = vpop.permute.xlu0 %843
        %845 = vrot.lane.b32.xlu0 %v771, 4
        %v846 = vpop.permute.xlu0 %845
        %847 = vrot.lane.b32.xlu0 %v772, 4
        %v848 = vpop.permute.xlu0 %847
        %849 = vrot.lane.b32.xlu0 %v773, 4
        %v850 = vpop.permute.xlu0 %849
        %851 = vrot.lane.b32.xlu0 %v774, 4
        %v852 = vpop.permute.xlu0 %851
        %853 = vrot.lane.b32.xlu0 %v775, 4
        %v854 = vpop.permute.xlu0 %853
        %855 = vrot.lane.b32.xlu0 %v776, 4
        %v856 = vpop.permute.xlu0 %855
        %857 = vrot.lane.b32.xlu0 %v777, 4
        %v858 = vpop.permute.xlu0 %857
        %859 = vrot.lane.b32.xlu0 %v778, 4
        %v860 = vpop.permute.xlu0 %859
        %861 = vrot.lane.b32.xlu0 %v779, 4
        %v862 = vpop.permute.xlu0 %861
        %863 = vrot.lane.b32.xlu0 %v780, 4
        %v864 = vpop.permute.xlu0 %863
        %865 = vrot.lane.b32.xlu0 %v781, 4
        %v866 = vpop.permute.xlu0 %865
        %867 = vrot.lane.b32.xlu0 %v782, 4
        %v868 = vpop.permute.xlu0 %867
        %869 = vrot.lane.b32.xlu0 %v783, 4
        %v870 = vpop.permute.xlu0 %869
        %871 = vrot.lane.b32.xlu0 %v784, 4
        %v872 = vpop.permute.xlu0 %871
        %873 = vrot.lane.b32.xlu0 %v785, 4
        %v874 = vpop.permute.xlu0 %873
        %875 = vrot.lane.b32.xlu0 %v786, 4
        %v876 = vpop.permute.xlu0 %875
        %877 = vrot.lane.b32.xlu0 %v787, 4
        %v878 = vpop.permute.xlu0 %877
        %879 = vrot.lane.b32.xlu0 %v788, 4
        %v880 = vpop.permute.xlu0 %879
        %881 = vrot.lane.b32.xlu0 %v789, 4
        %v882 = vpop.permute.xlu0 %881
        %883 = vrot.lane.b32.xlu0 %v790, 4
        %v884 = vpop.permute.xlu0 %883
        %885 = vrot.lane.b32.xlu0 %v791, 4
        %v886 = vpop.permute.xlu0 %885
        %887 = vrot.lane.b32.xlu0 %v792, 4
        %v888 = vpop.permute.xlu0 %887
        %vm921 = vcmask 64544
        %922 = vst.msk [vmem:[#allocation3] sm:$0xff] %vm921, %v826
        %923 = vst.msk [vmem:[#allocation3 + $0x8] sm:$0xff] %vm921, %v828
        %924 = vst.msk [vmem:[#allocation3 + $0x10] sm:$0xff] %vm921, %v830
        %925 = vst.msk [vmem:[#allocation3 + $0x18] sm:$0xff] %vm921, %v832
        %926 = vst.msk [vmem:[#allocation3 + $0x20] sm:$0xff] %vm921, %v834
        %927 = vst.msk [vmem:[#allocation3 + $0x28] sm:$0xff] %vm921, %v836
        %928 = vst.msk [vmem:[#allocation3 + $0x30] sm:$0xff] %vm921, %v838
        %929 = vst.msk [vmem:[#allocation3 + $0x38] sm:$0xff] %vm921, %v840
        %930 = vst.msk [vmem:[#allocation3 + $0x40] sm:$0xff] %vm921, %v842
        %931 = vst.msk [vmem:[#allocation3 + $0x48] sm:$0xff] %vm921, %v844
        %932 = vst.msk [vmem:[#allocation3 + $0x50] sm:$0xff] %vm921, %v846
        %933 = vst.msk [vmem:[#allocation3 + $0x58] sm:$0xff] %vm921, %v848
        %934 = vst.msk [vmem:[#allocation3 + $0x60] sm:$0xff] %vm921, %v850
        %935 = vst.msk [vmem:[#allocation3 + $0x68] sm:$0xff] %vm921, %v852
        %936 = vst.msk [vmem:[#allocation3 + $0x70] sm:$0xff] %vm921, %v854
        %937 = vst.msk [vmem:[#allocation3 + $0x78] sm:$0xff] %vm921, %v856
        %938 = vst.msk [vmem:[#allocation3 + $0x80] sm:$0xff] %vm921, %v858
        %939 = vst.msk [vmem:[#allocation3 + $0x88] sm:$0xff] %vm921, %v860
        %940 = vst.msk [vmem:[#allocation3 + $0x90] sm:$0xff] %vm921, %v862
        %941 = vst.msk [vmem:[#allocation3 + $0x98] sm:$0xff] %vm921, %v864
        %942 = vst.msk [vmem:[#allocation3 + $0xa0] sm:$0xff] %vm921, %v866
        %943 = vst.msk [vmem:[#allocation3 + $0xa8] sm:$0xff] %vm921, %v868
        %944 = vst.msk [vmem:[#allocation3 + $0xb0] sm:$0xff] %vm921, %v870
        %945 = vst.msk [vmem:[#allocation3 + $0xb8] sm:$0xff] %vm921, %v872
        %946 = vst.msk [vmem:[#allocation3 + $0xc0] sm:$0xff] %vm921, %v874
        %947 = vst.msk [vmem:[#allocation3 + $0xc8] sm:$0xff] %vm921, %v876
        %948 = vst.msk [vmem:[#allocation3 + $0xd0] sm:$0xff] %vm921, %v878
        %949 = vst.msk [vmem:[#allocation3 + $0xd8] sm:$0xff] %vm921, %v880
        %950 = vst.msk [vmem:[#allocation3 + $0xe0] sm:$0xff] %vm921, %v882
        %951 = vst.msk [vmem:[#allocation3 + $0xe8] sm:$0xff] %vm921, %v884
        %952 = vst.msk [vmem:[#allocation3 + $0xf0] sm:$0xff] %vm921, %v886
        %953 = vst.msk [vmem:[#allocation3 + $0xf8] sm:$0xff] %vm921, %v888
        %v954 = vld [vmem:[#allocation2 + $0x2] sm:$0xff]
        %v955 = vld [vmem:[#allocation2 + $0xa] sm:$0xff]
        %v956 = vld [vmem:[#allocation2 + $0x1a] sm:$0xff]
        %v957 = vld [vmem:[#allocation2 + $0x22] sm:$0xff]
        %v958 = vld [vmem:[#allocation2 + $0x32] sm:$0xff]
        %v959 = vld [vmem:[#allocation2 + $0x3a] sm:$0xff]
        %v960 = vld [vmem:[#allocation2 + $0x4a] sm:$0xff]
        %v961 = vld [vmem:[#allocation2 + $0x52] sm:$0xff]
        %v962 = vld [vmem:[#allocation2 + $0x62] sm:$0xff]
        %v963 = vld [vmem:[#allocation2 + $0x6a] sm:$0xff]
        %v964 = vld [vmem:[#allocation2 + $0x7a] sm:$0xff]
        %v965 = vld [vmem:[#allocation2 + $0x82] sm:$0xff]
        %v966 = vld [vmem:[#allocation2 + $0x92] sm:$0xff]
        %v967 = vld [vmem:[#allocation2 + $0x9a] sm:$0xff]
        %v968 = vld [vmem:[#allocation2 + $0xaa] sm:$0xff]
        %v969 = vld [vmem:[#allocation2 + $0xb2] sm:$0xff]
        %v970 = vld [vmem:[#allocation2 + $0xc2] sm:$0xff]
        %v971 = vld [vmem:[#allocation2 + $0xca] sm:$0xff]
        %v972 = vld [vmem:[#allocation2 + $0xda] sm:$0xff]
        %v973 = vld [vmem:[#allocation2 + $0xe2] sm:$0xff]
        %v974 = vld [vmem:[#allocation2 + $0xf2] sm:$0xff]
        %v975 = vld [vmem:[#allocation2 + $0xfa] sm:$0xff]
        %v976 = vld [vmem:[#allocation2 + $0x10a] sm:$0xff]
        %v977 = vld [vmem:[#allocation2 + $0x112] sm:$0xff]
        %v978 = vld [vmem:[#allocation2 + $0x122] sm:$0xff]
        %v979 = vld [vmem:[#allocation2 + $0x12a] sm:$0xff]
        %v980 = vld [vmem:[#allocation2 + $0x13a] sm:$0xff]
        %v981 = vld [vmem:[#allocation2 + $0x142] sm:$0xff]
        %v982 = vld [vmem:[#allocation2 + $0x152] sm:$0xff]
        %v983 = vld [vmem:[#allocation2 + $0x15a] sm:$0xff]
        %v984 = vld [vmem:[#allocation2 + $0x16a] sm:$0xff]
        %v985 = vld [vmem:[#allocation2 + $0x172] sm:$0xff]
        %1018 = vrot.lane.b32.xlu0 %v954, 8
        %v1019 = vpop.permute.xlu0 %1018
        %1020 = vrot.lane.b32.xlu0 %v955, 8
        %v1021 = vpop.permute.xlu0 %1020
        %1022 = vrot.lane.b32.xlu0 %v956, 8
        %v1023 = vpop.permute.xlu0 %1022
        %1024 = vrot.lane.b32.xlu0 %v957, 8
        %v1025 = vpop.permute.xlu0 %1024
        %1026 = vrot.lane.b32.xlu0 %v958, 8
        %v1027 = vpop.permute.xlu0 %1026
        %1028 = vrot.lane.b32.xlu0 %v959, 8
        %v1029 = vpop.permute.xlu0 %1028
        %1030 = vrot.lane.b32.xlu0 %v960, 8
        %v1031 = vpop.permute.xlu0 %1030
        %1032 = vrot.lane.b32.xlu0 %v961, 8
        %v1033 = vpop.permute.xlu0 %1032
        %1034 = vrot.lane.b32.xlu0 %v962, 8
        %v1035 = vpop.permute.xlu0 %1034
        %1036 = vrot.lane.b32.xlu0 %v963, 8
        %v1037 = vpop.permute.xlu0 %1036
        %1038 = vrot.lane.b32.xlu0 %v964, 8
        %v1039 = vpop.permute.xlu0 %1038
        %1040 = vrot.lane.b32.xlu0 %v965, 8
        %v1041 = vpop.permute.xlu0 %1040
        %1042 = vrot.lane.b32.xlu0 %v966, 8
        %v1043 = vpop.permute.xlu0 %1042
        %1044 = vrot.lane.b32.xlu0 %v967, 8
        %v1045 = vpop.permute.xlu0 %1044
        %1046 = vrot.lane.b32.xlu0 %v968, 8
        %v1047 = vpop.permute.xlu0 %1046
        %1048 = vrot.lane.b32.xlu0 %v969, 8
        %v1049 = vpop.permute.xlu0 %1048
        %1050 = vrot.lane.b32.xlu0 %v970, 8
        %v1051 = vpop.permute.xlu0 %1050
        %1052 = vrot.lane.b32.xlu0 %v971, 8
        %v1053 = vpop.permute.xlu0 %1052
        %1054 = vrot.lane.b32.xlu0 %v972, 8
        %v1055 = vpop.permute.xlu0 %1054
        %1056 = vrot.lane.b32.xlu0 %v973, 8
        %v1057 = vpop.permute.xlu0 %1056
        %1058 = vrot.lane.b32.xlu0 %v974, 8
        %v1059 = vpop.permute.xlu0 %1058
        %1060 = vrot.lane.b32.xlu0 %v975, 8
        %v1061 = vpop.permute.xlu0 %1060
        %1062 = vrot.lane.b32.xlu0 %v976, 8
        %v1063 = vpop.permute.xlu0 %1062
        %1064 = vrot.lane.b32.xlu0 %v977, 8
        %v1065 = vpop.permute.xlu0 %1064
        %1066 = vrot.lane.b32.xlu0 %v978, 8
        %v1067 = vpop.permute.xlu0 %1066
        %1068 = vrot.lane.b32.xlu0 %v979, 8
        %v1069 = vpop.permute.xlu0 %1068
        %1070 = vrot.lane.b32.xlu0 %v980, 8
        %v1071 = vpop.permute.xlu0 %1070
        %1072 = vrot.lane.b32.xlu0 %v981, 8
        %v1073 = vpop.permute.xlu0 %1072
        %1074 = vrot.lane.b32.xlu0 %v982, 8
        %v1075 = vpop.permute.xlu0 %1074
        %1076 = vrot.lane.b32.xlu0 %v983, 8
        %v1077 = vpop.permute.xlu0 %1076
        %1078 = vrot.lane.b32.xlu0 %v984, 8
        %v1079 = vpop.permute.xlu0 %1078
        %1080 = vrot.lane.b32.xlu0 %v985, 8
        %v1081 = vpop.permute.xlu0 %1080
        %vm1114 = vcmask 97344
        %1115 = vst.msk [vmem:[#allocation3] sm:$0xff] %vm1114, %v1019
        %1116 = vst.msk [vmem:[#allocation3 + $0x8] sm:$0xff] %vm1114, %v1021
        %1117 = vst.msk [vmem:[#allocation3 + $0x10] sm:$0xff] %vm1114, %v1023
        %1118 = vst.msk [vmem:[#allocation3 + $0x18] sm:$0xff] %vm1114, %v1025
        %1119 = vst.msk [vmem:[#allocation3 + $0x20] sm:$0xff] %vm1114, %v1027
        %1120 = vst.msk [vmem:[#allocation3 + $0x28] sm:$0xff] %vm1114, %v1029
        %1121 = vst.msk [vmem:[#allocation3 + $0x30] sm:$0xff] %vm1114, %v1031
        %1122 = vst.msk [vmem:[#allocation3 + $0x38] sm:$0xff] %vm1114, %v1033
        %1123 = vst.msk [vmem:[#allocation3 + $0x40] sm:$0xff] %vm1114, %v1035
        %1124 = vst.msk [vmem:[#allocation3 + $0x48] sm:$0xff] %vm1114, %v1037
        %1125 = vst.msk [vmem:[#allocation3 + $0x50] sm:$0xff] %vm1114, %v1039
        %1126 = vst.msk [vmem:[#allocation3 + $0x58] sm:$0xff] %vm1114, %v1041
        %1127 = vst.msk [vmem:[#allocation3 + $0x60] sm:$0xff] %vm1114, %v1043
        %1128 = vst.msk [vmem:[#allocation3 + $0x68] sm:$0xff] %vm1114, %v1045
        %1129 = vst.msk [vmem:[#allocation3 + $0x70] sm:$0xff] %vm1114, %v1047
        %1130 = vst.msk [vmem:[#allocation3 + $0x78] sm:$0xff] %vm1114, %v1049
        %1131 = vst.msk [vmem:[#allocation3 + $0x80] sm:$0xff] %vm1114, %v1051
        %1132 = vst.msk [vmem:[#allocation3 + $0x88] sm:$0xff] %vm1114, %v1053
        %1133 = vst.msk [vmem:[#allocation3 + $0x90] sm:$0xff] %vm1114, %v1055
        %1134 = vst.msk [vmem:[#allocation3 + $0x98] sm:$0xff] %vm1114, %v1057
        %1135 = vst.msk [vmem:[#allocation3 + $0xa0] sm:$0xff] %vm1114, %v1059
        %1136 = vst.msk [vmem:[#allocation3 + $0xa8] sm:$0xff] %vm1114, %v1061
        %1137 = vst.msk [vmem:[#allocation3 + $0xb0] sm:$0xff] %vm1114, %v1063
        %1138 = vst.msk [vmem:[#allocation3 + $0xb8] sm:$0xff] %vm1114, %v1065
        %1139 = vst.msk [vmem:[#allocation3 + $0xc0] sm:$0xff] %vm1114, %v1067
        %1140 = vst.msk [vmem:[#allocation3 + $0xc8] sm:$0xff] %vm1114, %v1069
        %1141 = vst.msk [vmem:[#allocation3 + $0xd0] sm:$0xff] %vm1114, %v1071
        %1142 = vst.msk [vmem:[#allocation3 + $0xd8] sm:$0xff] %vm1114, %v1073
        %1143 = vst.msk [vmem:[#allocation3 + $0xe0] sm:$0xff] %vm1114, %v1075
        %1144 = vst.msk [vmem:[#allocation3 + $0xe8] sm:$0xff] %vm1114, %v1077
        %1145 = vst.msk [vmem:[#allocation3 + $0xf0] sm:$0xff] %vm1114, %v1079
        %1146 = vst.msk [vmem:[#allocation3 + $0xf8] sm:$0xff] %vm1114, %v1081
        %v1147 = vld [vmem:[%s664] sm:$0xff]
        %v1148 = vld [vmem:[%s664 + $0x8] sm:$0xff]
        %v1149 = vld [vmem:[%s664 + $0x18] sm:$0xff]
        %v1150 = vld [vmem:[%s664 + $0x20] sm:$0xff]
        %v1151 = vld [vmem:[%s664 + $0x30] sm:$0xff]
        %v1152 = vld [vmem:[%s664 + $0x38] sm:$0xff]
        %v1153 = vld [vmem:[%s664 + $0x48] sm:$0xff]
        %v1154 = vld [vmem:[%s664 + $0x50] sm:$0xff]
        %v1155 = vld [vmem:[%s664 + $0x60] sm:$0xff]
        %v1156 = vld [vmem:[%s664 + $0x68] sm:$0xff]
        %v1157 = vld [vmem:[%s664 + $0x78] sm:$0xff]
        %v1158 = vld [vmem:[%s664 + $0x80] sm:$0xff]
        %v1159 = vld [vmem:[%s664 + $0x90] sm:$0xff]
        %v1160 = vld [vmem:[%s664 + $0x98] sm:$0xff]
        %v1161 = vld [vmem:[%s664 + $0xa8] sm:$0xff]
        %v1162 = vld [vmem:[%s664 + $0xb0] sm:$0xff]
        %v1163 = vld [vmem:[%s664 + $0xc0] sm:$0xff]
        %v1164 = vld [vmem:[%s664 + $0xc8] sm:$0xff]
        %v1165 = vld [vmem:[%s664 + $0xd8] sm:$0xff]
        %v1166 = vld [vmem:[%s664 + $0xe0] sm:$0xff]
        %v1167 = vld [vmem:[%s664 + $0xf0] sm:$0xff]
        %v1168 = vld [vmem:[%s664 + $0xf8] sm:$0xff]
        %v1169 = vld [vmem:[%s664 + $0x108] sm:$0xff]
        %v1170 = vld [vmem:[%s664 + $0x110] sm:$0xff]
        %v1171 = vld [vmem:[%s664 + $0x120] sm:$0xff]
        %v1172 = vld [vmem:[%s664 + $0x128] sm:$0xff]
        %v1173 = vld [vmem:[%s664 + $0x138] sm:$0xff]
        %v1174 = vld [vmem:[%s664 + $0x140] sm:$0xff]
        %v1175 = vld [vmem:[%s664 + $0x150] sm:$0xff]
        %v1176 = vld [vmem:[%s664 + $0x158] sm:$0xff]
        %v1177 = vld [vmem:[%s664 + $0x168] sm:$0xff]
        %v1178 = vld [vmem:[%s664 + $0x170] sm:$0xff]
        %1211 = vrot.lane.b32.xlu0 %v1147, 12
        %v1212 = vpop.permute.xlu0 %1211
        %1213 = vrot.lane.b32.xlu0 %v1148, 12
        %v1214 = vpop.permute.xlu0 %1213
        %1215 = vrot.lane.b32.xlu0 %v1149, 12
        %v1216 = vpop.permute.xlu0 %1215
        %1217 = vrot.lane.b32.xlu0 %v1150, 12
        %v1218 = vpop.permute.xlu0 %1217
        %1219 = vrot.lane.b32.xlu0 %v1151, 12
        %v1220 = vpop.permute.xlu0 %1219
        %1221 = vrot.lane.b32.xlu0 %v1152, 12
        %v1222 = vpop.permute.xlu0 %1221
        %1223 = vrot.lane.b32.xlu0 %v1153, 12
        %v1224 = vpop.permute.xlu0 %1223
        %1225 = vrot.lane.b32.xlu0 %v1154, 12
        %v1226 = vpop.permute.xlu0 %1225
        %1227 = vrot.lane.b32.xlu0 %v1155, 12
        %v1228 = vpop.permute.xlu0 %1227
        %1229 = vrot.lane.b32.xlu0 %v1156, 12
        %v1230 = vpop.permute.xlu0 %1229
        %1231 = vrot.lane.b32.xlu0 %v1157, 12
        %v1232 = vpop.permute.xlu0 %1231
        %1233 = vrot.lane.b32.xlu0 %v1158, 12
        %v1234 = vpop.permute.xlu0 %1233
        %1235 = vrot.lane.b32.xlu0 %v1159, 12
        %v1236 = vpop.permute.xlu0 %1235
        %1237 = vrot.lane.b32.xlu0 %v1160, 12
        %v1238 = vpop.permute.xlu0 %1237
        %1239 = vrot.lane.b32.xlu0 %v1161, 12
        %v1240 = vpop.permute.xlu0 %1239
        %1241 = vrot.lane.b32.xlu0 %v1162, 12
        %v1242 = vpop.permute.xlu0 %1241
        %1243 = vrot.lane.b32.xlu0 %v1163, 12
        %v1244 = vpop.permute.xlu0 %1243
        %1245 = vrot.lane.b32.xlu0 %v1164, 12
        %v1246 = vpop.permute.xlu0 %1245
        %1247 = vrot.lane.b32.xlu0 %v1165, 12
        %v1248 = vpop.permute.xlu0 %1247
        %1249 = vrot.lane.b32.xlu0 %v1166, 12
        %v1250 = vpop.permute.xlu0 %1249
        %1251 = vrot.lane.b32.xlu0 %v1167, 12
        %v1252 = vpop.permute.xlu0 %1251
        %1253 = vrot.lane.b32.xlu0 %v1168, 12
        %v1254 = vpop.permute.xlu0 %1253
        %1255 = vrot.lane.b32.xlu0 %v1169, 12
        %v1256 = vpop.permute.xlu0 %1255
        %1257 = vrot.lane.b32.xlu0 %v1170, 12
        %v1258 = vpop.permute.xlu0 %1257
        %1259 = vrot.lane.b32.xlu0 %v1171, 12
        %v1260 = vpop.permute.xlu0 %1259
        %1261 = vrot.lane.b32.xlu0 %v1172, 12
        %v1262 = vpop.permute.xlu0 %1261
        %1263 = vrot.lane.b32.xlu0 %v1173, 12
        %v1264 = vpop.permute.xlu0 %1263
        %1265 = vrot.lane.b32.xlu0 %v1174, 12
        %v1266 = vpop.permute.xlu0 %1265
        %1267 = vrot.lane.b32.xlu0 %v1175, 12
        %v1268 = vpop.permute.xlu0 %1267
        %1269 = vrot.lane.b32.xlu0 %v1176, 12
        %v1270 = vpop.permute.xlu0 %1269
        %1271 = vrot.lane.b32.xlu0 %v1177, 12
        %v1272 = vpop.permute.xlu0 %1271
        %1273 = vrot.lane.b32.xlu0 %v1178, 12
        %v1274 = vpop.permute.xlu0 %1273
        %vm1307 = vcmask 130144
        %1308 = vst.msk [vmem:[#allocation3] sm:$0xff] %vm1307, %v1212
        %1309 = vst.msk [vmem:[#allocation3 + $0x8] sm:$0xff] %vm1307, %v1214
        %1310 = vst.msk [vmem:[#allocation3 + $0x10] sm:$0xff] %vm1307, %v1216
        %1311 = vst.msk [vmem:[#allocation3 + $0x18] sm:$0xff] %vm1307, %v1218
        %1312 = vst.msk [vmem:[#allocation3 + $0x20] sm:$0xff] %vm1307, %v1220
        %1313 = vst.msk [vmem:[#allocation3 + $0x28] sm:$0xff] %vm1307, %v1222
        %1314 = vst.msk [vmem:[#allocation3 + $0x30] sm:$0xff] %vm1307, %v1224
        %1315 = vst.msk [vmem:[#allocation3 + $0x38] sm:$0xff] %vm1307, %v1226
        %1316 = vst.msk [vmem:[#allocation3 + $0x40] sm:$0xff] %vm1307, %v1228
        %1317 = vst.msk [vmem:[#allocation3 + $0x48] sm:$0xff] %vm1307, %v1230
        %1318 = vst.msk [vmem:[#allocation3 + $0x50] sm:$0xff] %vm1307, %v1232
        %1319 = vst.msk [vmem:[#allocation3 + $0x58] sm:$0xff] %vm1307, %v1234
        %1320 = vst.msk [vmem:[#allocation3 + $0x60] sm:$0xff] %vm1307, %v1236
        %1321 = vst.msk [vmem:[#allocation3 + $0x68] sm:$0xff] %vm1307, %v1238
        %1322 = vst.msk [vmem:[#allocation3 + $0x70] sm:$0xff] %vm1307, %v1240
        %1323 = vst.msk [vmem:[#allocation3 + $0x78] sm:$0xff] %vm1307, %v1242
        %1324 = vst.msk [vmem:[#allocation3 + $0x80] sm:$0xff] %vm1307, %v1244
        %1325 = vst.msk [vmem:[#allocation3 + $0x88] sm:$0xff] %vm1307, %v1246
        %1326 = vst.msk [vmem:[#allocation3 + $0x90] sm:$0xff] %vm1307, %v1248
        %1327 = vst.msk [vmem:[#allocation3 + $0x98] sm:$0xff] %vm1307, %v1250
        %1328 = vst.msk [vmem:[#allocation3 + $0xa0] sm:$0xff] %vm1307, %v1252
        %1329 = vst.msk [vmem:[#allocation3 + $0xa8] sm:$0xff] %vm1307, %v1254
        %1330 = vst.msk [vmem:[#allocation3 + $0xb0] sm:$0xff] %vm1307, %v1256
        %1331 = vst.msk [vmem:[#allocation3 + $0xb8] sm:$0xff] %vm1307, %v1258
        %1332 = vst.msk [vmem:[#allocation3 + $0xc0] sm:$0xff] %vm1307, %v1260
        %1333 = vst.msk [vmem:[#allocation3 + $0xc8] sm:$0xff] %vm1307, %v1262
        %1334 = vst.msk [vmem:[#allocation3 + $0xd0] sm:$0xff] %vm1307, %v1264
        %1335 = vst.msk [vmem:[#allocation3 + $0xd8] sm:$0xff] %vm1307, %v1266
        %1336 = vst.msk [vmem:[#allocation3 + $0xe0] sm:$0xff] %vm1307, %v1268
        %1337 = vst.msk [vmem:[#allocation3 + $0xe8] sm:$0xff] %vm1307, %v1270
        %1338 = vst.msk [vmem:[#allocation3 + $0xf0] sm:$0xff] %vm1307, %v1272
        %1339 = vst.msk [vmem:[#allocation3 + $0xf8] sm:$0xff] %vm1307, %v1274
        %v1340 = vld [vmem:[%s664 + $0x1] sm:$0xff]
        %v1341 = vld [vmem:[%s664 + $0x9] sm:$0xff]
        %v1342 = vld [vmem:[%s664 + $0x19] sm:$0xff]
        %v1343 = vld [vmem:[%s664 + $0x21] sm:$0xff]
        %v1344 = vld [vmem:[%s664 + $0x31] sm:$0xff]
        %v1345 = vld [vmem:[%s664 + $0x39] sm:$0xff]
        %v1346 = vld [vmem:[%s664 + $0x49] sm:$0xff]
        %v1347 = vld [vmem:[%s664 + $0x51] sm:$0xff]
        %v1348 = vld [vmem:[%s664 + $0x61] sm:$0xff]
        %v1349 = vld [vmem:[%s664 + $0x69] sm:$0xff]
        %v1350 = vld [vmem:[%s664 + $0x79] sm:$0xff]
        %v1351 = vld [vmem:[%s664 + $0x81] sm:$0xff]
        %v1352 = vld [vmem:[%s664 + $0x91] sm:$0xff]
        %v1353 = vld [vmem:[%s664 + $0x99] sm:$0xff]
        %v1354 = vld [vmem:[%s664 + $0xa9] sm:$0xff]
        %v1355 = vld [vmem:[%s664 + $0xb1] sm:$0xff]
        %v1356 = vld [vmem:[%s664 + $0xc1] sm:$0xff]
        %v1357 = vld [vmem:[%s664 + $0xc9] sm:$0xff]
        %v1358 = vld [vmem:[%s664 + $0xd9] sm:$0xff]
        %v1359 = vld [vmem:[%s664 + $0xe1] sm:$0xff]
        %v1360 = vld [vmem:[%s664 + $0xf1] sm:$0xff]
        %v1361 = vld [vmem:[%s664 + $0xf9] sm:$0xff]
        %v1362 = vld [vmem:[%s664 + $0x109] sm:$0xff]
        %v1363 = vld [vmem:[%s664 + $0x111] sm:$0xff]
        %v1364 = vld [vmem:[%s664 + $0x121] sm:$0xff]
        %v1365 = vld [vmem:[%s664 + $0x129] sm:$0xff]
        %v1366 = vld [vmem:[%s664 + $0x139] sm:$0xff]
        %v1367 = vld [vmem:[%s664 + $0x141] sm:$0xff]
        %v1368 = vld [vmem:[%s664 + $0x151] sm:$0xff]
        %v1369 = vld [vmem:[%s664 + $0x159] sm:$0xff]
        %v1370 = vld [vmem:[%s664 + $0x169] sm:$0xff]
        %v1371 = vld [vmem:[%s664 + $0x171] sm:$0xff]
        %1404 = vrot.lane.b32.xlu0 %v1340, 16
        %v1405 = vpop.permute.xlu0 %1404
        %1406 = vrot.lane.b32.xlu0 %v1341, 16
        %v1407 = vpop.permute.xlu0 %1406
        %1408 = vrot.lane.b32.xlu0 %v1342, 16
        %v1409 = vpop.permute.xlu0 %1408
        %1410 = vrot.lane.b32.xlu0 %v1343, 16
        %v1411 = vpop.permute.xlu0 %1410
        %1412 = vrot.lane.b32.xlu0 %v1344, 16
        %v1413 = vpop.permute.xlu0 %1412
        %1414 = vrot.lane.b32.xlu0 %v1345, 16
        %v1415 = vpop.permute.xlu0 %1414
        %1416 = vrot.lane.b32.xlu0 %v1346, 16
        %v1417 = vpop.permute.xlu0 %1416
        %1418 = vrot.lane.b32.xlu0 %v1347, 16
        %v1419 = vpop.permute.xlu0 %1418
        %1420 = vrot.lane.b32.xlu0 %v1348, 16
        %v1421 = vpop.permute.xlu0 %1420
        %1422 = vrot.lane.b32.xlu0 %v1349, 16
        %v1423 = vpop.permute.xlu0 %1422
        %1424 = vrot.lane.b32.xlu0 %v1350, 16
        %v1425 = vpop.permute.xlu0 %1424
        %1426 = vrot.lane.b32.xlu0 %v1351, 16
        %v1427 = vpop.permute.xlu0 %1426
        %1428 = vrot.lane.b32.xlu0 %v1352, 16
        %v1429 = vpop.permute.xlu0 %1428
        %1430 = vrot.lane.b32.xlu0 %v1353, 16
        %v1431 = vpop.permute.xlu0 %1430
        %1432 = vrot.lane.b32.xlu0 %v1354, 16
        %v1433 = vpop.permute.xlu0 %1432
        %1434 = vrot.lane.b32.xlu0 %v1355, 16
        %v1435 = vpop.permute.xlu0 %1434
        %1436 = vrot.lane.b32.xlu0 %v1356, 16
        %v1437 = vpop.permute.xlu0 %1436
        %1438 = vrot.lane.b32.xlu0 %v1357, 16
        %v1439 = vpop.permute.xlu0 %1438
        %1440 = vrot.lane.b32.xlu0 %v1358, 16
        %v1441 = vpop.permute.xlu0 %1440
        %1442 = vrot.lane.b32.xlu0 %v1359, 16
        %v1443 = vpop.permute.xlu0 %1442
        %1444 = vrot.lane.b32.xlu0 %v1360, 16
        %v1445 = vpop.permute.xlu0 %1444
        %1446 = vrot.lane.b32.xlu0 %v1361, 16
        %v1447 = vpop.permute.xlu0 %1446
        %1448 = vrot.lane.b32.xlu0 %v1362, 16
        %v1449 = vpop.permute.xlu0 %1448
        %1450 = vrot.lane.b32.xlu0 %v1363, 16
        %v1451 = vpop.permute.xlu0 %1450
        %1452 = vrot.lane.b32.xlu0 %v1364, 16
        %v1453 = vpop.permute.xlu0 %1452
        %1454 = vrot.lane.b32.xlu0 %v1365, 16
        %v1455 = vpop.permute.xlu0 %1454
        %1456 = vrot.lane.b32.xlu0 %v1366, 16
        %v1457 = vpop.permute.xlu0 %1456
        %1458 = vrot.lane.b32.xlu0 %v1367, 16
        %v1459 = vpop.permute.xlu0 %1458
        %1460 = vrot.lane.b32.xlu0 %v1368, 16
        %v1461 = vpop.permute.xlu0 %1460
        %1462 = vrot.lane.b32.xlu0 %v1369, 16
        %v1463 = vpop.permute.xlu0 %1462
        %1464 = vrot.lane.b32.xlu0 %v1370, 16
        %v1465 = vpop.permute.xlu0 %1464
        %1466 = vrot.lane.b32.xlu0 %v1371, 16
        %v1467 = vpop.permute.xlu0 %1466
        %vm1500 = vcmask 162944
        %1501 = vst.msk [vmem:[#allocation3] sm:$0xff] %vm1500, %v1405
        %1502 = vst.msk [vmem:[#allocation3 + $0x8] sm:$0xff] %vm1500, %v1407
        %1503 = vst.msk [vmem:[#allocation3 + $0x10] sm:$0xff] %vm1500, %v1409
        %1504 = vst.msk [vmem:[#allocation3 + $0x18] sm:$0xff] %vm1500, %v1411
        %1505 = vst.msk [vmem:[#allocation3 + $0x20] sm:$0xff] %vm1500, %v1413
        %1506 = vst.msk [vmem:[#allocation3 + $0x28] sm:$0xff] %vm1500, %v1415
        %1507 = vst.msk [vmem:[#allocation3 + $0x30] sm:$0xff] %vm1500, %v1417
        %1508 = vst.msk [vmem:[#allocation3 + $0x38] sm:$0xff] %vm1500, %v1419
        %1509 = vst.msk [vmem:[#allocation3 + $0x40] sm:$0xff] %vm1500, %v1421
        %1510 = vst.msk [vmem:[#allocation3 + $0x48] sm:$0xff] %vm1500, %v1423
        %1511 = vst.msk [vmem:[#allocation3 + $0x50] sm:$0xff] %vm1500, %v1425
        %1512 = vst.msk [vmem:[#allocation3 + $0x58] sm:$0xff] %vm1500, %v1427
        %1513 = vst.msk [vmem:[#allocation3 + $0x60] sm:$0xff] %vm1500, %v1429
        %1514 = vst.msk [vmem:[#allocation3 + $0x68] sm:$0xff] %vm1500, %v1431
        %1515 = vst.msk [vmem:[#allocation3 + $0x70] sm:$0xff] %vm1500, %v1433
        %1516 = vst.msk [vmem:[#allocation3 + $0x78] sm:$0xff] %vm1500, %v1435
        %1517 = vst.msk [vmem:[#allocation3 + $0x80] sm:$0xff] %vm1500, %v1437
        %1518 = vst.msk [vmem:[#allocation3 + $0x88] sm:$0xff] %vm1500, %v1439
        %1519 = vst.msk [vmem:[#allocation3 + $0x90] sm:$0xff] %vm1500, %v1441
        %1520 = vst.msk [vmem:[#allocation3 + $0x98] sm:$0xff] %vm1500, %v1443
        %1521 = vst.msk [vmem:[#allocation3 + $0xa0] sm:$0xff] %vm1500, %v1445
        %1522 = vst.msk [vmem:[#allocation3 + $0xa8] sm:$0xff] %vm1500, %v1447
        %1523 = vst.msk [vmem:[#allocation3 + $0xb0] sm:$0xff] %vm1500, %v1449
        %1524 = vst.msk [vmem:[#allocation3 + $0xb8] sm:$0xff] %vm1500, %v1451
        %1525 = vst.msk [vmem:[#allocation3 + $0xc0] sm:$0xff] %vm1500, %v1453
        %1526 = vst.msk [vmem:[#allocation3 + $0xc8] sm:$0xff] %vm1500, %v1455
        %1527 = vst.msk [vmem:[#allocation3 + $0xd0] sm:$0xff] %vm1500, %v1457
        %1528 = vst.msk [vmem:[#allocation3 + $0xd8] sm:$0xff] %vm1500, %v1459
        %1529 = vst.msk [vmem:[#allocation3 + $0xe0] sm:$0xff] %vm1500, %v1461
        %1530 = vst.msk [vmem:[#allocation3 + $0xe8] sm:$0xff] %vm1500, %v1463
        %1531 = vst.msk [vmem:[#allocation3 + $0xf0] sm:$0xff] %vm1500, %v1465
        %1532 = vst.msk [vmem:[#allocation3 + $0xf8] sm:$0xff] %vm1500, %v1467
        %v1533 = vld [vmem:[%s664 + $0x2] sm:$0xff]
        %v1534 = vld [vmem:[%s664 + $0xa] sm:$0xff]
        %v1535 = vld [vmem:[%s664 + $0x1a] sm:$0xff]
        %v1536 = vld [vmem:[%s664 + $0x22] sm:$0xff]
        %v1537 = vld [vmem:[%s664 + $0x32] sm:$0xff]
        %v1538 = vld [vmem:[%s664 + $0x3a] sm:$0xff]
        %v1539 = vld [vmem:[%s664 + $0x4a] sm:$0xff]
        %v1540 = vld [vmem:[%s664 + $0x52] sm:$0xff]
        %v1541 = vld [vmem:[%s664 + $0x62] sm:$0xff]
        %v1542 = vld [vmem:[%s664 + $0x6a] sm:$0xff]
        %v1543 = vld [vmem:[%s664 + $0x7a] sm:$0xff]
        %v1544 = vld [vmem:[%s664 + $0x82] sm:$0xff]
        %v1545 = vld [vmem:[%s664 + $0x92] sm:$0xff]
        %v1546 = vld [vmem:[%s664 + $0x9a] sm:$0xff]
        %v1547 = vld [vmem:[%s664 + $0xaa] sm:$0xff]
        %v1548 = vld [vmem:[%s664 + $0xb2] sm:$0xff]
        %v1549 = vld [vmem:[%s664 + $0xc2] sm:$0xff]
        %v1550 = vld [vmem:[%s664 + $0xca] sm:$0xff]
        %v1551 = vld [vmem:[%s664 + $0xda] sm:$0xff]
        %v1552 = vld [vmem:[%s664 + $0xe2] sm:$0xff]
        %v1553 = vld [vmem:[%s664 + $0xf2] sm:$0xff]
        %v1554 = vld [vmem:[%s664 + $0xfa] sm:$0xff]
        %v1555 = vld [vmem:[%s664 + $0x10a] sm:$0xff]
        %v1556 = vld [vmem:[%s664 + $0x112] sm:$0xff]
        %v1557 = vld [vmem:[%s664 + $0x122] sm:$0xff]
        %v1558 = vld [vmem:[%s664 + $0x12a] sm:$0xff]
        %v1559 = vld [vmem:[%s664 + $0x13a] sm:$0xff]
        %v1560 = vld [vmem:[%s664 + $0x142] sm:$0xff]
        %v1561 = vld [vmem:[%s664 + $0x152] sm:$0xff]
        %v1562 = vld [vmem:[%s664 + $0x15a] sm:$0xff]
        %v1563 = vld [vmem:[%s664 + $0x16a] sm:$0xff]
        %v1564 = vld [vmem:[%s664 + $0x172] sm:$0xff]
        %1597 = vrot.lane.b32.xlu0 %v1533, 20
        %v1598 = vpop.permute.xlu0 %1597
        %1599 = vrot.lane.b32.xlu0 %v1534, 20
        %v1600 = vpop.permute.xlu0 %1599
        %1601 = vrot.lane.b32.xlu0 %v1535, 20
        %v1602 = vpop.permute.xlu0 %1601
        %1603 = vrot.lane.b32.xlu0 %v1536, 20
        %v1604 = vpop.permute.xlu0 %1603
        %1605 = vrot.lane.b32.xlu0 %v1537, 20
        %v1606 = vpop.permute.xlu0 %1605
        %1607 = vrot.lane.b32.xlu0 %v1538, 20
        %v1608 = vpop.permute.xlu0 %1607
        %1609 = vrot.lane.b32.xlu0 %v1539, 20
        %v1610 = vpop.permute.xlu0 %1609
        %1611 = vrot.lane.b32.xlu0 %v1540, 20
        %v1612 = vpop.permute.xlu0 %1611
        %1613 = vrot.lane.b32.xlu0 %v1541, 20
        %v1614 = vpop.permute.xlu0 %1613
        %1615 = vrot.lane.b32.xlu0 %v1542, 20
        %v1616 = vpop.permute.xlu0 %1615
        %1617 = vrot.lane.b32.xlu0 %v1543, 20
        %v1618 = vpop.permute.xlu0 %1617
        %1619 = vrot.lane.b32.xlu0 %v1544, 20
        %v1620 = vpop.permute.xlu0 %1619
        %1621 = vrot.lane.b32.xlu0 %v1545, 20
        %v1622 = vpop.permute.xlu0 %1621
        %1623 = vrot.lane.b32.xlu0 %v1546, 20
        %v1624 = vpop.permute.xlu0 %1623
        %1625 = vrot.lane.b32.xlu0 %v1547, 20
        %v1626 = vpop.permute.xlu0 %1625
        %1627 = vrot.lane.b32.xlu0 %v1548, 20
        %v1628 = vpop.permute.xlu0 %1627
        %1629 = vrot.lane.b32.xlu0 %v1549, 20
        %v1630 = vpop.permute.xlu0 %1629
        %1631 = vrot.lane.b32.xlu0 %v1550, 20
        %v1632 = vpop.permute.xlu0 %1631
        %1633 = vrot.lane.b32.xlu0 %v1551, 20
        %v1634 = vpop.permute.xlu0 %1633
        %1635 = vrot.lane.b32.xlu0 %v1552, 20
        %v1636 = vpop.permute.xlu0 %1635
        %1637 = vrot.lane.b32.xlu0 %v1553, 20
        %v1638 = vpop.permute.xlu0 %1637
        %1639 = vrot.lane.b32.xlu0 %v1554, 20
        %v1640 = vpop.permute.xlu0 %1639
        %1641 = vrot.lane.b32.xlu0 %v1555, 20
        %v1642 = vpop.permute.xlu0 %1641
        %1643 = vrot.lane.b32.xlu0 %v1556, 20
        %v1644 = vpop.permute.xlu0 %1643
        %1645 = vrot.lane.b32.xlu0 %v1557, 20
        %v1646 = vpop.permute.xlu0 %1645
        %1647 = vrot.lane.b32.xlu0 %v1558, 20
        %v1648 = vpop.permute.xlu0 %1647
        %1649 = vrot.lane.b32.xlu0 %v1559, 20
        %v1650 = vpop.permute.xlu0 %1649
        %1651 = vrot.lane.b32.xlu0 %v1560, 20
        %v1652 = vpop.permute.xlu0 %1651
        %1653 = vrot.lane.b32.xlu0 %v1561, 20
        %v1654 = vpop.permute.xlu0 %1653
        %1655 = vrot.lane.b32.xlu0 %v1562, 20
        %v1656 = vpop.permute.xlu0 %1655
        %1657 = vrot.lane.b32.xlu0 %v1563, 20
        %v1658 = vpop.permute.xlu0 %1657
        %1659 = vrot.lane.b32.xlu0 %v1564, 20
        %v1660 = vpop.permute.xlu0 %1659
        %vm1693 = vcmask 195744
        %1694 = vst.msk [vmem:[#allocation3] sm:$0xff] %vm1693, %v1598
        %1695 = vst.msk [vmem:[#allocation3 + $0x8] sm:$0xff] %vm1693, %v1600
        %1696 = vst.msk [vmem:[#allocation3 + $0x10] sm:$0xff] %vm1693, %v1602
        %1697 = vst.msk [vmem:[#allocation3 + $0x18] sm:$0xff] %vm1693, %v1604
        %1698 = vst.msk [vmem:[#allocation3 + $0x20] sm:$0xff] %vm1693, %v1606
        %1699 = vst.msk [vmem:[#allocation3 + $0x28] sm:$0xff] %vm1693, %v1608
        %1700 = vst.msk [vmem:[#allocation3 + $0x30] sm:$0xff] %vm1693, %v1610
        %1701 = vst.msk [vmem:[#allocation3 + $0x38] sm:$0xff] %vm1693, %v1612
        %1702 = vst.msk [vmem:[#allocation3 + $0x40] sm:$0xff] %vm1693, %v1614
        %1703 = vst.msk [vmem:[#allocation3 + $0x48] sm:$0xff] %vm1693, %v1616
        %1704 = vst.msk [vmem:[#allocation3 + $0x50] sm:$0xff] %vm1693, %v1618
        %1705 = vst.msk [vmem:[#allocation3 + $0x58] sm:$0xff] %vm1693, %v1620
        %1706 = vst.msk [vmem:[#allocation3 + $0x60] sm:$0xff] %vm1693, %v1622
        %1707 = vst.msk [vmem:[#allocation3 + $0x68] sm:$0xff] %vm1693, %v1624
        %1708 = vst.msk [vmem:[#allocation3 + $0x70] sm:$0xff] %vm1693, %v1626
        %1709 = vst.msk [vmem:[#allocation3 + $0x78] sm:$0xff] %vm1693, %v1628
        %1710 = vst.msk [vmem:[#allocation3 + $0x80] sm:$0xff] %vm1693, %v1630
        %1711 = vst.msk [vmem:[#allocation3 + $0x88] sm:$0xff] %vm1693, %v1632
        %1712 = vst.msk [vmem:[#allocation3 + $0x90] sm:$0xff] %vm1693, %v1634
        %1713 = vst.msk [vmem:[#allocation3 + $0x98] sm:$0xff] %vm1693, %v1636
        %1714 = vst.msk [vmem:[#allocation3 + $0xa0] sm:$0xff] %vm1693, %v1638
        %1715 = vst.msk [vmem:[#allocation3 + $0xa8] sm:$0xff] %vm1693, %v1640
        %1716 = vst.msk [vmem:[#allocation3 + $0xb0] sm:$0xff] %vm1693, %v1642
        %1717 = vst.msk [vmem:[#allocation3 + $0xb8] sm:$0xff] %vm1693, %v1644
        %1718 = vst.msk [vmem:[#allocation3 + $0xc0] sm:$0xff] %vm1693, %v1646
        %1719 = vst.msk [vmem:[#allocation3 + $0xc8] sm:$0xff] %vm1693, %v1648
        %1720 = vst.msk [vmem:[#allocation3 + $0xd0] sm:$0xff] %vm1693, %v1650
        %1721 = vst.msk [vmem:[#allocation3 + $0xd8] sm:$0xff] %vm1693, %v1652
        %1722 = vst.msk [vmem:[#allocation3 + $0xe0] sm:$0xff] %vm1693, %v1654
        %1723 = vst.msk [vmem:[#allocation3 + $0xe8] sm:$0xff] %vm1693, %v1656
        %1724 = vst.msk [vmem:[#allocation3 + $0xf0] sm:$0xff] %vm1693, %v1658
        %1725 = vst.msk [vmem:[#allocation3 + $0xf8] sm:$0xff] %vm1693, %v1660
        %s1726 = scalar_lea.vmem [#allocation2], 48
        %v1727 = vld [vmem:[%s1726] sm:$0xff]
        %v1728 = vld [vmem:[%s1726 + $0x8] sm:$0xff]
        %v1729 = vld [vmem:[%s1726 + $0x18] sm:$0xff]
        %v1730 = vld [vmem:[%s1726 + $0x20] sm:$0xff]
        %v1731 = vld [vmem:[%s1726 + $0x30] sm:$0xff]
        %v1732 = vld [vmem:[%s1726 + $0x38] sm:$0xff]
        %v1733 = vld [vmem:[%s1726 + $0x48] sm:$0xff]
        %v1734 = vld [vmem:[%s1726 + $0x50] sm:$0xff]
        %v1735 = vld [vmem:[%s1726 + $0x60] sm:$0xff]
        %v1736 = vld [vmem:[%s1726 + $0x68] sm:$0xff]
        %v1737 = vld [vmem:[%s1726 + $0x78] sm:$0xff]
        %v1738 = vld [vmem:[%s1726 + $0x80] sm:$0xff]
        %v1739 = vld [vmem:[%s1726 + $0x90] sm:$0xff]
        %v1740 = vld [vmem:[%s1726 + $0x98] sm:$0xff]
        %v1741 = vld [vmem:[%s1726 + $0xa8] sm:$0xff]
        %v1742 = vld [vmem:[%s1726 + $0xb0] sm:$0xff]
        %v1743 = vld [vmem:[%s1726 + $0xc0] sm:$0xff]
        %v1744 = vld [vmem:[%s1726 + $0xc8] sm:$0xff]
        %v1745 = vld [vmem:[%s1726 + $0xd8] sm:$0xff]
        %v1746 = vld [vmem:[%s1726 + $0xe0] sm:$0xff]
        %v1747 = vld [vmem:[%s1726 + $0xf0] sm:$0xff]
        %v1748 = vld [vmem:[%s1726 + $0xf8] sm:$0xff]
        %v1749 = vld [vmem:[%s1726 + $0x108] sm:$0xff]
        %v1750 = vld [vmem:[%s1726 + $0x110] sm:$0xff]
        %v1751 = vld [vmem:[%s1726 + $0x120] sm:$0xff]
        %v1752 = vld [vmem:[%s1726 + $0x128] sm:$0xff]
        %v1753 = vld [vmem:[%s1726 + $0x138] sm:$0xff]
        %v1754 = vld [vmem:[%s1726 + $0x140] sm:$0xff]
        %v1755 = vld [vmem:[%s1726 + $0x150] sm:$0xff]
        %v1756 = vld [vmem:[%s1726 + $0x158] sm:$0xff]
        %v1757 = vld [vmem:[%s1726 + $0x168] sm:$0xff]
        %v1758 = vld [vmem:[%s1726 + $0x170] sm:$0xff]
        %1791 = vrot.lane.b32.xlu0 %v1727, 24
        %v1792 = vpop.permute.xlu0 %1791
        %1793 = vrot.lane.b32.xlu0 %v1728, 24
        %v1794 = vpop.permute.xlu0 %1793
        %1795 = vrot.lane.b32.xlu0 %v1729, 24
        %v1796 = vpop.permute.xlu0 %1795
        %1797 = vrot.lane.b32.xlu0 %v1730, 24
        %v1798 = vpop.permute.xlu0 %1797
        %1799 = vrot.lane.b32.xlu0 %v1731, 24
        %v1800 = vpop.permute.xlu0 %1799
        %1801 = vrot.lane.b32.xlu0 %v1732, 24
        %v1802 = vpop.permute.xlu0 %1801
        %1803 = vrot.lane.b32.xlu0 %v1733, 24
        %v1804 = vpop.permute.xlu0 %1803
        %1805 = vrot.lane.b32.xlu0 %v1734, 24
        %v1806 = vpop.permute.xlu0 %1805
        %1807 = vrot.lane.b32.xlu0 %v1735, 24
        %v1808 = vpop.permute.xlu0 %1807
        %1809 = vrot.lane.b32.xlu0 %v1736, 24
        %v1810 = vpop.permute.xlu0 %1809
        %1811 = vrot.lane.b32.xlu0 %v1737, 24
        %v1812 = vpop.permute.xlu0 %1811
        %1813 = vrot.lane.b32.xlu0 %v1738, 24
        %v1814 = vpop.permute.xlu0 %1813
        %1815 = vrot.lane.b32.xlu0 %v1739, 24
        %v1816 = vpop.permute.xlu0 %1815
        %1817 = vrot.lane.b32.xlu0 %v1740, 24
        %v1818 = vpop.permute.xlu0 %1817
        %1819 = vrot.lane.b32.xlu0 %v1741, 24
        %v1820 = vpop.permute.xlu0 %1819
        %1821 = vrot.lane.b32.xlu0 %v1742, 24
        %v1822 = vpop.permute.xlu0 %1821
        %1823 = vrot.lane.b32.xlu0 %v1743, 24
        %v1824 = vpop.permute.xlu0 %1823
        %1825 = vrot.lane.b32.xlu0 %v1744, 24
        %v1826 = vpop.permute.xlu0 %1825
        %1827 = vrot.lane.b32.xlu0 %v1745, 24
        %v1828 = vpop.permute.xlu0 %1827
        %1829 = vrot.lane.b32.xlu0 %v1746, 24
        %v1830 = vpop.permute.xlu0 %1829
        %1831 = vrot.lane.b32.xlu0 %v1747, 24
        %v1832 = vpop.permute.xlu0 %1831
        %1833 = vrot.lane.b32.xlu0 %v1748, 24
        %v1834 = vpop.permute.xlu0 %1833
        %1835 = vrot.lane.b32.xlu0 %v1749, 24
        %v1836 = vpop.permute.xlu0 %1835
        %1837 = vrot.lane.b32.xlu0 %v1750, 24
        %v1838 = vpop.permute.xlu0 %1837
        %1839 = vrot.lane.b32.xlu0 %v1751, 24
        %v1840 = vpop.permute.xlu0 %1839
        %1841 = vrot.lane.b32.xlu0 %v1752, 24
        %v1842 = vpop.permute.xlu0 %1841
        %1843 = vrot.lane.b32.xlu0 %v1753, 24
        %v1844 = vpop.permute.xlu0 %1843
        %1845 = vrot.lane.b32.xlu0 %v1754, 24
        %v1846 = vpop.permute.xlu0 %1845
        %1847 = vrot.lane.b32.xlu0 %v1755, 24
        %v1848 = vpop.permute.xlu0 %1847
        %1849 = vrot.lane.b32.xlu0 %v1756, 24
        %v1850 = vpop.permute.xlu0 %1849
        %1851 = vrot.lane.b32.xlu0 %v1757, 24
        %v1852 = vpop.permute.xlu0 %1851
        %1853 = vrot.lane.b32.xlu0 %v1758, 24
        %v1854 = vpop.permute.xlu0 %1853
        %vm1887 = vcmask 228544
        %1888 = vst.msk [vmem:[#allocation3] sm:$0xff] %vm1887, %v1792
        %1889 = vst.msk [vmem:[#allocation3 + $0x8] sm:$0xff] %vm1887, %v1794
        %1890 = vst.msk [vmem:[#allocation3 + $0x10] sm:$0xff] %vm1887, %v1796
        %1891 = vst.msk [vmem:[#allocation3 + $0x18] sm:$0xff] %vm1887, %v1798
        %1892 = vst.msk [vmem:[#allocation3 + $0x20] sm:$0xff] %vm1887, %v1800
        %1893 = vst.msk [vmem:[#allocation3 + $0x28] sm:$0xff] %vm1887, %v1802
        %1894 = vst.msk [vmem:[#allocation3 + $0x30] sm:$0xff] %vm1887, %v1804
        %1895 = vst.msk [vmem:[#allocation3 + $0x38] sm:$0xff] %vm1887, %v1806
        %1896 = vst.msk [vmem:[#allocation3 + $0x40] sm:$0xff] %vm1887, %v1808
        %1897 = vst.msk [vmem:[#allocation3 + $0x48] sm:$0xff] %vm1887, %v1810
        %1898 = vst.msk [vmem:[#allocation3 + $0x50] sm:$0xff] %vm1887, %v1812
        %1899 = vst.msk [vmem:[#allocation3 + $0x58] sm:$0xff] %vm1887, %v1814
        %1900 = vst.msk [vmem:[#allocation3 + $0x60] sm:$0xff] %vm1887, %v1816
        %1901 = vst.msk [vmem:[#allocation3 + $0x68] sm:$0xff] %vm1887, %v1818
        %1902 = vst.msk [vmem:[#allocation3 + $0x70] sm:$0xff] %vm1887, %v1820
        %1903 = vst.msk [vmem:[#allocation3 + $0x78] sm:$0xff] %vm1887, %v1822
        %1904 = vst.msk [vmem:[#allocation3 + $0x80] sm:$0xff] %vm1887, %v1824
        %1905 = vst.msk [vmem:[#allocation3 + $0x88] sm:$0xff] %vm1887, %v1826
        %1906 = vst.msk [vmem:[#allocation3 + $0x90] sm:$0xff] %vm1887, %v1828
        %1907 = vst.msk [vmem:[#allocation3 + $0x98] sm:$0xff] %vm1887, %v1830
        %1908 = vst.msk [vmem:[#allocation3 + $0xa0] sm:$0xff] %vm1887, %v1832
        %1909 = vst.msk [vmem:[#allocation3 + $0xa8] sm:$0xff] %vm1887, %v1834
        %1910 = vst.msk [vmem:[#allocation3 + $0xb0] sm:$0xff] %vm1887, %v1836
        %1911 = vst.msk [vmem:[#allocation3 + $0xb8] sm:$0xff] %vm1887, %v1838
        %1912 = vst.msk [vmem:[#allocation3 + $0xc0] sm:$0xff] %vm1887, %v1840
        %1913 = vst.msk [vmem:[#allocation3 + $0xc8] sm:$0xff] %vm1887, %v1842
        %1914 = vst.msk [vmem:[#allocation3 + $0xd0] sm:$0xff] %vm1887, %v1844
        %1915 = vst.msk [vmem:[#allocation3 + $0xd8] sm:$0xff] %vm1887, %v1846
        %1916 = vst.msk [vmem:[#allocation3 + $0xe0] sm:$0xff] %vm1887, %v1848
        %1917 = vst.msk [vmem:[#allocation3 + $0xe8] sm:$0xff] %vm1887, %v1850
        %1918 = vst.msk [vmem:[#allocation3 + $0xf0] sm:$0xff] %vm1887, %v1852
        %1919 = vst.msk [vmem:[#allocation3 + $0xf8] sm:$0xff] %vm1887, %v1854
        %v1920 = vld [vmem:[%s1726 + $0x1] sm:$0xff]
        %v1921 = vld [vmem:[%s1726 + $0x9] sm:$0xff]
        %v1922 = vld [vmem:[%s1726 + $0x19] sm:$0xff]
        %v1923 = vld [vmem:[%s1726 + $0x21] sm:$0xff]
        %v1924 = vld [vmem:[%s1726 + $0x31] sm:$0xff]
        %v1925 = vld [vmem:[%s1726 + $0x39] sm:$0xff]
        %v1926 = vld [vmem:[%s1726 + $0x49] sm:$0xff]
        %v1927 = vld [vmem:[%s1726 + $0x51] sm:$0xff]
        %v1928 = vld [vmem:[%s1726 + $0x61] sm:$0xff]
        %v1929 = vld [vmem:[%s1726 + $0x69] sm:$0xff]
        %v1930 = vld [vmem:[%s1726 + $0x79] sm:$0xff]
        %v1931 = vld [vmem:[%s1726 + $0x81] sm:$0xff]
        %v1932 = vld [vmem:[%s1726 + $0x91] sm:$0xff]
        %v1933 = vld [vmem:[%s1726 + $0x99] sm:$0xff]
        %v1934 = vld [vmem:[%s1726 + $0xa9] sm:$0xff]
        %v1935 = vld [vmem:[%s1726 + $0xb1] sm:$0xff]
        %v1936 = vld [vmem:[%s1726 + $0xc1] sm:$0xff]
        %v1937 = vld [vmem:[%s1726 + $0xc9] sm:$0xff]
        %v1938 = vld [vmem:[%s1726 + $0xd9] sm:$0xff]
        %v1939 = vld [vmem:[%s1726 + $0xe1] sm:$0xff]
        %v1940 = vld [vmem:[%s1726 + $0xf1] sm:$0xff]
        %v1941 = vld [vmem:[%s1726 + $0xf9] sm:$0xff]
        %v1942 = vld [vmem:[%s1726 + $0x109] sm:$0xff]
        %v1943 = vld [vmem:[%s1726 + $0x111] sm:$0xff]
        %v1944 = vld [vmem:[%s1726 + $0x121] sm:$0xff]
        %v1945 = vld [vmem:[%s1726 + $0x129] sm:$0xff]
        %v1946 = vld [vmem:[%s1726 + $0x139] sm:$0xff]
        %v1947 = vld [vmem:[%s1726 + $0x141] sm:$0xff]
        %v1948 = vld [vmem:[%s1726 + $0x151] sm:$0xff]
        %v1949 = vld [vmem:[%s1726 + $0x159] sm:$0xff]
        %v1950 = vld [vmem:[%s1726 + $0x169] sm:$0xff]
        %v1951 = vld [vmem:[%s1726 + $0x171] sm:$0xff]
        %1984 = vrot.lane.b32.xlu0 %v1920, 28
        %v1985 = vpop.permute.xlu0 %1984
        %1986 = vrot.lane.b32.xlu0 %v1921, 28
        %v1987 = vpop.permute.xlu0 %1986
        %1988 = vrot.lane.b32.xlu0 %v1922, 28
        %v1989 = vpop.permute.xlu0 %1988
        %1990 = vrot.lane.b32.xlu0 %v1923, 28
        %v1991 = vpop.permute.xlu0 %1990
        %1992 = vrot.lane.b32.xlu0 %v1924, 28
        %v1993 = vpop.permute.xlu0 %1992
        %1994 = vrot.lane.b32.xlu0 %v1925, 28
        %v1995 = vpop.permute.xlu0 %1994
        %1996 = vrot.lane.b32.xlu0 %v1926, 28
        %v1997 = vpop.permute.xlu0 %1996
        %1998 = vrot.lane.b32.xlu0 %v1927, 28
        %v1999 = vpop.permute.xlu0 %1998
        %2000 = vrot.lane.b32.xlu0 %v1928, 28
        %v2001 = vpop.permute.xlu0 %2000
        %2002 = vrot.lane.b32.xlu0 %v1929, 28
        %v2003 = vpop.permute.xlu0 %2002
        %2004 = vrot.lane.b32.xlu0 %v1930, 28
        %v2005 = vpop.permute.xlu0 %2004
        %2006 = vrot.lane.b32.xlu0 %v1931, 28
        %v2007 = vpop.permute.xlu0 %2006
        %2008 = vrot.lane.b32.xlu0 %v1932, 28
        %v2009 = vpop.permute.xlu0 %2008
        %2010 = vrot.lane.b32.xlu0 %v1933, 28
        %v2011 = vpop.permute.xlu0 %2010
        %2012 = vrot.lane.b32.xlu0 %v1934, 28
        %v2013 = vpop.permute.xlu0 %2012
        %2014 = vrot.lane.b32.xlu0 %v1935, 28
        %v2015 = vpop.permute.xlu0 %2014
        %2016 = vrot.lane.b32.xlu0 %v1936, 28
        %v2017 = vpop.permute.xlu0 %2016
        %2018 = vrot.lane.b32.xlu0 %v1937, 28
        %v2019 = vpop.permute.xlu0 %2018
        %2020 = vrot.lane.b32.xlu0 %v1938, 28
        %v2021 = vpop.permute.xlu0 %2020
        %2022 = vrot.lane.b32.xlu0 %v1939, 28
        %v2023 = vpop.permute.xlu0 %2022
        %2024 = vrot.lane.b32.xlu0 %v1940, 28
        %v2025 = vpop.permute.xlu0 %2024
        %2026 = vrot.lane.b32.xlu0 %v1941, 28
        %v2027 = vpop.permute.xlu0 %2026
        %2028 = vrot.lane.b32.xlu0 %v1942, 28
        %v2029 = vpop.permute.xlu0 %2028
        %2030 = vrot.lane.b32.xlu0 %v1943, 28
        %v2031 = vpop.permute.xlu0 %2030
        %2032 = vrot.lane.b32.xlu0 %v1944, 28
        %v2033 = vpop.permute.xlu0 %2032
        %2034 = vrot.lane.b32.xlu0 %v1945, 28
        %v2035 = vpop.permute.xlu0 %2034
        %2036 = vrot.lane.b32.xlu0 %v1946, 28
        %v2037 = vpop.permute.xlu0 %2036
        %2038 = vrot.lane.b32.xlu0 %v1947, 28
        %v2039 = vpop.permute.xlu0 %2038
        %2040 = vrot.lane.b32.xlu0 %v1948, 28
        %v2041 = vpop.permute.xlu0 %2040
        %2042 = vrot.lane.b32.xlu0 %v1949, 28
        %v2043 = vpop.permute.xlu0 %2042
        %2044 = vrot.lane.b32.xlu0 %v1950, 28
        %v2045 = vpop.permute.xlu0 %2044
        %2046 = vrot.lane.b32.xlu0 %v1951, 28
        %v2047 = vpop.permute.xlu0 %2046
        %vm2080 = vcmask 261344
        %2081 = vst.msk [vmem:[#allocation3] sm:$0xff] %vm2080, %v1985
        %2082 = vst.msk [vmem:[#allocation3 + $0x8] sm:$0xff] %vm2080, %v1987
        %2083 = vst.msk [vmem:[#allocation3 + $0x10] sm:$0xff] %vm2080, %v1989
        %2084 = vst.msk [vmem:[#allocation3 + $0x18] sm:$0xff] %vm2080, %v1991
        %2085 = vst.msk [vmem:[#allocation3 + $0x20] sm:$0xff] %vm2080, %v1993
        %2086 = vst.msk [vmem:[#allocation3 + $0x28] sm:$0xff] %vm2080, %v1995
        %2087 = vst.msk [vmem:[#allocation3 + $0x30] sm:$0xff] %vm2080, %v1997
        %2088 = vst.msk [vmem:[#allocation3 + $0x38] sm:$0xff] %vm2080, %v1999
        %2089 = vst.msk [vmem:[#allocation3 + $0x40] sm:$0xff] %vm2080, %v2001
        %2090 = vst.msk [vmem:[#allocation3 + $0x48] sm:$0xff] %vm2080, %v2003
        %2091 = vst.msk [vmem:[#allocation3 + $0x50] sm:$0xff] %vm2080, %v2005
        %2092 = vst.msk [vmem:[#allocation3 + $0x58] sm:$0xff] %vm2080, %v2007
        %2093 = vst.msk [vmem:[#allocation3 + $0x60] sm:$0xff] %vm2080, %v2009
        %2094 = vst.msk [vmem:[#allocation3 + $0x68] sm:$0xff] %vm2080, %v2011
        %2095 = vst.msk [vmem:[#allocation3 + $0x70] sm:$0xff] %vm2080, %v2013
        %2096 = vst.msk [vmem:[#allocation3 + $0x78] sm:$0xff] %vm2080, %v2015
        %2097 = vst.msk [vmem:[#allocation3 + $0x80] sm:$0xff] %vm2080, %v2017
        %2098 = vst.msk [vmem:[#allocation3 + $0x88] sm:$0xff] %vm2080, %v2019
        %2099 = vst.msk [vmem:[#allocation3 + $0x90] sm:$0xff] %vm2080, %v2021
        %2100 = vst.msk [vmem:[#allocation3 + $0x98] sm:$0xff] %vm2080, %v2023
        %2101 = vst.msk [vmem:[#allocation3 + $0xa0] sm:$0xff] %vm2080, %v2025
        %2102 = vst.msk [vmem:[#allocation3 + $0xa8] sm:$0xff] %vm2080, %v2027
        %2103 = vst.msk [vmem:[#allocation3 + $0xb0] sm:$0xff] %vm2080, %v2029
        %2104 = vst.msk [vmem:[#allocation3 + $0xb8] sm:$0xff] %vm2080, %v2031
        %2105 = vst.msk [vmem:[#allocation3 + $0xc0] sm:$0xff] %vm2080, %v2033
        %2106 = vst.msk [vmem:[#allocation3 + $0xc8] sm:$0xff] %vm2080, %v2035
        %2107 = vst.msk [vmem:[#allocation3 + $0xd0] sm:$0xff] %vm2080, %v2037
        %2108 = vst.msk [vmem:[#allocation3 + $0xd8] sm:$0xff] %vm2080, %v2039
        %2109 = vst.msk [vmem:[#allocation3 + $0xe0] sm:$0xff] %vm2080, %v2041
        %2110 = vst.msk [vmem:[#allocation3 + $0xe8] sm:$0xff] %vm2080, %v2043
        %2111 = vst.msk [vmem:[#allocation3 + $0xf0] sm:$0xff] %vm2080, %v2045
        %2112 = vst.msk [vmem:[#allocation3 + $0xf8] sm:$0xff] %vm2080, %v2047
        %v2113 = vld [vmem:[%s1726 + $0x2] sm:$0xff]
        %v2114 = vld [vmem:[%s1726 + $0xa] sm:$0xff]
        %v2115 = vld [vmem:[%s1726 + $0x1a] sm:$0xff]
        %v2116 = vld [vmem:[%s1726 + $0x22] sm:$0xff]
        %v2117 = vld [vmem:[%s1726 + $0x32] sm:$0xff]
        %v2118 = vld [vmem:[%s1726 + $0x3a] sm:$0xff]
        %v2119 = vld [vmem:[%s1726 + $0x4a] sm:$0xff]
        %v2120 = vld [vmem:[%s1726 + $0x52] sm:$0xff]
        %v2121 = vld [vmem:[%s1726 + $0x62] sm:$0xff]
        %v2122 = vld [vmem:[%s1726 + $0x6a] sm:$0xff]
        %v2123 = vld [vmem:[%s1726 + $0x7a] sm:$0xff]
        %v2124 = vld [vmem:[%s1726 + $0x82] sm:$0xff]
        %v2125 = vld [vmem:[%s1726 + $0x92] sm:$0xff]
        %v2126 = vld [vmem:[%s1726 + $0x9a] sm:$0xff]
        %v2127 = vld [vmem:[%s1726 + $0xaa] sm:$0xff]
        %v2128 = vld [vmem:[%s1726 + $0xb2] sm:$0xff]
        %v2129 = vld [vmem:[%s1726 + $0xc2] sm:$0xff]
        %v2130 = vld [vmem:[%s1726 + $0xca] sm:$0xff]
        %v2131 = vld [vmem:[%s1726 + $0xda] sm:$0xff]
        %v2132 = vld [vmem:[%s1726 + $0xe2] sm:$0xff]
        %v2133 = vld [vmem:[%s1726 + $0xf2] sm:$0xff]
        %v2134 = vld [vmem:[%s1726 + $0xfa] sm:$0xff]
        %v2135 = vld [vmem:[%s1726 + $0x10a] sm:$0xff]
        %v2136 = vld [vmem:[%s1726 + $0x112] sm:$0xff]
        %v2137 = vld [vmem:[%s1726 + $0x122] sm:$0xff]
        %v2138 = vld [vmem:[%s1726 + $0x12a] sm:$0xff]
        %v2139 = vld [vmem:[%s1726 + $0x13a] sm:$0xff]
        %v2140 = vld [vmem:[%s1726 + $0x142] sm:$0xff]
        %v2141 = vld [vmem:[%s1726 + $0x152] sm:$0xff]
        %v2142 = vld [vmem:[%s1726 + $0x15a] sm:$0xff]
        %v2143 = vld [vmem:[%s1726 + $0x16a] sm:$0xff]
        %v2144 = vld [vmem:[%s1726 + $0x172] sm:$0xff]
        %2177 = vrot.lane.b32.xlu0 %v2113, 32
        %v2178 = vpop.permute.xlu0 %2177
        %2179 = vrot.lane.b32.xlu0 %v2114, 32
        %v2180 = vpop.permute.xlu0 %2179
        %2181 = vrot.lane.b32.xlu0 %v2115, 32
        %v2182 = vpop.permute.xlu0 %2181
        %2183 = vrot.lane.b32.xlu0 %v2116, 32
        %v2184 = vpop.permute.xlu0 %2183
        %2185 = vrot.lane.b32.xlu0 %v2117, 32
        %v2186 = vpop.permute.xlu0 %2185
        %2187 = vrot.lane.b32.xlu0 %v2118, 32
        %v2188 = vpop.permute.xlu0 %2187
        %2189 = vrot.lane.b32.xlu0 %v2119, 32
        %v2190 = vpop.permute.xlu0 %2189
        %2191 = vrot.lane.b32.xlu0 %v2120, 32
        %v2192 = vpop.permute.xlu0 %2191
        %2193 = vrot.lane.b32.xlu0 %v2121, 32
        %v2194 = vpop.permute.xlu0 %2193
        %2195 = vrot.lane.b32.xlu0 %v2122, 32
        %v2196 = vpop.permute.xlu0 %2195
        %2197 = vrot.lane.b32.xlu0 %v2123, 32
        %v2198 = vpop.permute.xlu0 %2197
        %2199 = vrot.lane.b32.xlu0 %v2124, 32
        %v2200 = vpop.permute.xlu0 %2199
        %2201 = vrot.lane.b32.xlu0 %v2125, 32
        %v2202 = vpop.permute.xlu0 %2201
        %2203 = vrot.lane.b32.xlu0 %v2126, 32
        %v2204 = vpop.permute.xlu0 %2203
        %2205 = vrot.lane.b32.xlu0 %v2127, 32
        %v2206 = vpop.permute.xlu0 %2205
        %2207 = vrot.lane.b32.xlu0 %v2128, 32
        %v2208 = vpop.permute.xlu0 %2207
        %2209 = vrot.lane.b32.xlu0 %v2129, 32
        %v2210 = vpop.permute.xlu0 %2209
        %2211 = vrot.lane.b32.xlu0 %v2130, 32
        %v2212 = vpop.permute.xlu0 %2211
        %2213 = vrot.lane.b32.xlu0 %v2131, 32
        %v2214 = vpop.permute.xlu0 %2213
        %2215 = vrot.lane.b32.xlu0 %v2132, 32
        %v2216 = vpop.permute.xlu0 %2215
        %2217 = vrot.lane.b32.xlu0 %v2133, 32
        %v2218 = vpop.permute.xlu0 %2217
        %2219 = vrot.lane.b32.xlu0 %v2134, 32
        %v2220 = vpop.permute.xlu0 %2219
        %2221 = vrot.lane.b32.xlu0 %v2135, 32
        %v2222 = vpop.permute.xlu0 %2221
        %2223 = vrot.lane.b32.xlu0 %v2136, 32
        %v2224 = vpop.permute.xlu0 %2223
        %2225 = vrot.lane.b32.xlu0 %v2137, 32
        %v2226 = vpop.permute.xlu0 %2225
        %2227 = vrot.lane.b32.xlu0 %v2138, 32
        %v2228 = vpop.permute.xlu0 %2227
        %2229 = vrot.lane.b32.xlu0 %v2139, 32
        %v2230 = vpop.permute.xlu0 %2229
        %2231 = vrot.lane.b32.xlu0 %v2140, 32
        %v2232 = vpop.permute.xlu0 %2231
        %2233 = vrot.lane.b32.xlu0 %v2141, 32
        %v2234 = vpop.permute.xlu0 %2233
        %2235 = vrot.lane.b32.xlu0 %v2142, 32
        %v2236 = vpop.permute.xlu0 %2235
        %2237 = vrot.lane.b32.xlu0 %v2143, 32
        %v2238 = vpop.permute.xlu0 %2237
        %2239 = vrot.lane.b32.xlu0 %v2144, 32
        %v2240 = vpop.permute.xlu0 %2239
        %vm2273 = vcmask 294144
        %2274 = vst.msk [vmem:[#allocation3] sm:$0xff] %vm2273, %v2178
        %2275 = vst.msk [vmem:[#allocation3 + $0x8] sm:$0xff] %vm2273, %v2180
        %2276 = vst.msk [vmem:[#allocation3 + $0x10] sm:$0xff] %vm2273, %v2182
        %2277 = vst.msk [vmem:[#allocation3 + $0x18] sm:$0xff] %vm2273, %v2184
        %2278 = vst.msk [vmem:[#allocation3 + $0x20] sm:$0xff] %vm2273, %v2186
        %2279 = vst.msk [vmem:[#allocation3 + $0x28] sm:$0xff] %vm2273, %v2188
        %2280 = vst.msk [vmem:[#allocation3 + $0x30] sm:$0xff] %vm2273, %v2190
        %2281 = vst.msk [vmem:[#allocation3 + $0x38] sm:$0xff] %vm2273, %v2192
        %2282 = vst.msk [vmem:[#allocation3 + $0x40] sm:$0xff] %vm2273, %v2194
        %2283 = vst.msk [vmem:[#allocation3 + $0x48] sm:$0xff] %vm2273, %v2196
        %2284 = vst.msk [vmem:[#allocation3 + $0x50] sm:$0xff] %vm2273, %v2198
        %2285 = vst.msk [vmem:[#allocation3 + $0x58] sm:$0xff] %vm2273, %v2200
        %2286 = vst.msk [vmem:[#allocation3 + $0x60] sm:$0xff] %vm2273, %v2202
        %2287 = vst.msk [vmem:[#allocation3 + $0x68] sm:$0xff] %vm2273, %v2204
        %2288 = vst.msk [vmem:[#allocation3 + $0x70] sm:$0xff] %vm2273, %v2206
        %2289 = vst.msk [vmem:[#allocation3 + $0x78] sm:$0xff] %vm2273, %v2208
        %2290 = vst.msk [vmem:[#allocation3 + $0x80] sm:$0xff] %vm2273, %v2210
        %2291 = vst.msk [vmem:[#allocation3 + $0x88] sm:$0xff] %vm2273, %v2212
        %2292 = vst.msk [vmem:[#allocation3 + $0x90] sm:$0xff] %vm2273, %v2214
        %2293 = vst.msk [vmem:[#allocation3 + $0x98] sm:$0xff] %vm2273, %v2216
        %2294 = vst.msk [vmem:[#allocation3 + $0xa0] sm:$0xff] %vm2273, %v2218
        %2295 = vst.msk [vmem:[#allocation3 + $0xa8] sm:$0xff] %vm2273, %v2220
        %2296 = vst.msk [vmem:[#allocation3 + $0xb0] sm:$0xff] %vm2273, %v2222
        %2297 = vst.msk [vmem:[#allocation3 + $0xb8] sm:$0xff] %vm2273, %v2224
        %2298 = vst.msk [vmem:[#allocation3 + $0xc0] sm:$0xff] %vm2273, %v2226
        %2299 = vst.msk [vmem:[#allocation3 + $0xc8] sm:$0xff] %vm2273, %v2228
        %2300 = vst.msk [vmem:[#allocation3 + $0xd0] sm:$0xff] %vm2273, %v2230
        %2301 = vst.msk [vmem:[#allocation3 + $0xd8] sm:$0xff] %vm2273, %v2232
        %2302 = vst.msk [vmem:[#allocation3 + $0xe0] sm:$0xff] %vm2273, %v2234
        %2303 = vst.msk [vmem:[#allocation3 + $0xe8] sm:$0xff] %vm2273, %v2236
        %2304 = vst.msk [vmem:[#allocation3 + $0xf0] sm:$0xff] %vm2273, %v2238
        %2305 = vst.msk [vmem:[#allocation3 + $0xf8] sm:$0xff] %vm2273, %v2240
        %v2306 = vld [vmem:[#allocation3] sm:$0xff]
        %v2307 = vld [vmem:[#allocation3 + $0x8] sm:$0xff]
        %v2308 = vld [vmem:[#allocation3 + $0x10] sm:$0xff]
        %v2309 = vld [vmem:[#allocation3 + $0x18] sm:$0xff]
        %v2310 = vld [vmem:[#allocation3 + $0x20] sm:$0xff]
        %v2311 = vld [vmem:[#allocation3 + $0x28] sm:$0xff]
        %v2312 = vld [vmem:[#allocation3 + $0x30] sm:$0xff]
        %v2313 = vld [vmem:[#allocation3 + $0x38] sm:$0xff]
        %v2314 = vld [vmem:[#allocation3 + $0x40] sm:$0xff]
        %v2315 = vld [vmem:[#allocation3 + $0x48] sm:$0xff]
        %v2316 = vld [vmem:[#allocation3 + $0x50] sm:$0xff]
        %v2317 = vld [vmem:[#allocation3 + $0x58] sm:$0xff]
        %v2318 = vld [vmem:[#allocation3 + $0x60] sm:$0xff]
        %v2319 = vld [vmem:[#allocation3 + $0x68] sm:$0xff]
        %v2320 = vld [vmem:[#allocation3 + $0x70] sm:$0xff]
        %v2321 = vld [vmem:[#allocation3 + $0x78] sm:$0xff]
        %v2322 = vld [vmem:[#allocation3 + $0x80] sm:$0xff]
        %v2323 = vld [vmem:[#allocation3 + $0x88] sm:$0xff]
        %v2324 = vld [vmem:[#allocation3 + $0x90] sm:$0xff]
        %v2325 = vld [vmem:[#allocation3 + $0x98] sm:$0xff]
        %v2326 = vld [vmem:[#allocation3 + $0xa0] sm:$0xff]
        %v2327 = vld [vmem:[#allocation3 + $0xa8] sm:$0xff]
        %v2328 = vld [vmem:[#allocation3 + $0xb0] sm:$0xff]
        %v2329 = vld [vmem:[#allocation3 + $0xb8] sm:$0xff]
        %v2330 = vld [vmem:[#allocation3 + $0xc0] sm:$0xff]
        %v2331 = vld [vmem:[#allocation3 + $0xc8] sm:$0xff]
        %v2332 = vld [vmem:[#allocation3 + $0xd0] sm:$0xff]
        %v2333 = vld [vmem:[#allocation3 + $0xd8] sm:$0xff]
        %v2334 = vld [vmem:[#allocation3 + $0xe0] sm:$0xff]
        %v2335 = vld [vmem:[#allocation3 + $0xe8] sm:$0xff]
        %v2336 = vld [vmem:[#allocation3 + $0xf0] sm:$0xff]
        %v2337 = vld [vmem:[#allocation3 + $0xf8] sm:$0xff]
        %v2338 = vld [vmem:[%s1] sm:$0xff]
        %v2339 = vld [vmem:[%s1 + $0x8] sm:$0xff]
        %v2340 = vld [vmem:[%s1 + $0x10] sm:$0xff]
        %v2341 = vld [vmem:[%s1 + $0x18] sm:$0xff]
        %v2342 = vld [vmem:[%s1 + $0x20] sm:$0xf]
        %v2343 = vld [vmem:[%s2] sm:$0x1]
        %v2345 = vlaneseq
        %v2346 = vshrl.u32 %v2345, 7
        %v2347 = vsub.s32 0, %v2346
        %v2348 = vrot.slane %v2343, %v2347
        %vm2350 = vcmask 293888
        %v2352 = vsel %vm2350, %v2306, 0
        %v2355 = vsel %vm2350, %v2307, 0
        %v2358 = vsel %vm2350, %v2308, 0
        %v2361 = vsel %vm2350, %v2309, 0
        %v2364 = vsel %vm2350, %v2310, 0
        %v2367 = vsel %vm2350, %v2311, 0
        %v2370 = vsel %vm2350, %v2312, 0
        %v2373 = vsel %vm2350, %v2313, 0
        %v2376 = vsel %vm2350, %v2314, 0
        %v2379 = vsel %vm2350, %v2315, 0
        %v2382 = vsel %vm2350, %v2316, 0
        %v2385 = vsel %vm2350, %v2317, 0
        %v2388 = vsel %vm2350, %v2318, 0
        %v2391 = vsel %vm2350, %v2319, 0
        %v2394 = vsel %vm2350, %v2320, 0
        %v2397 = vsel %vm2350, %v2321, 0
        %v2400 = vsel %vm2350, %v2322, 0
        %v2403 = vsel %vm2350, %v2323, 0
        %v2406 = vsel %vm2350, %v2324, 0
        %v2409 = vsel %vm2350, %v2325, 0
        %v2412 = vsel %vm2350, %v2326, 0
        %v2415 = vsel %vm2350, %v2327, 0
        %v2418 = vsel %vm2350, %v2328, 0
        %v2421 = vsel %vm2350, %v2329, 0
        %v2424 = vsel %vm2350, %v2330, 0
        %v2427 = vsel %vm2350, %v2331, 0
        %v2430 = vsel %vm2350, %v2332, 0
        %v2433 = vsel %vm2350, %v2333, 0
        %v2436 = vsel %vm2350, %v2334, 0
        %v2439 = vsel %vm2350, %v2335, 0
        %v2442 = vsel %vm2350, %v2336, 0
        %v2445 = vsel %vm2350, %v2337, 0
        %vm2447 = vcmask 1043456
        %v2449 = vsel %vm2447, %v2342, 0
        %2451 = vmatprep.subr.mxu0 0.0
        %2452 = vmatpush1.msra.mxu0 %v2338
        %2453 = vmatprep.subr.mxu0 0.0
        %2454 = vmatpush1.msra.mxu0 %v2339
        %2455 = vmatprep.subr.mxu0 0.0
        %2456 = vmatpush1.msra.mxu0 %v2340
        %2457 = vmatprep.subr.mxu0 0.0
        %2458 = vmatpush1.msra.mxu0 %v2341
        %2459 = vmatprep.subr.mxu0 0.0
        %2460 = vmatpush1.msra.mxu0 %v2449
        %2461 = vmatprep.subr.mxu0 0.0
        %2462 = vmatpush1.msra.mxu0 0.0
        %2463 = vmatprep.subr.mxu0 0.0
        %2464 = vmatpush1.msra.mxu0 0.0
        %2465 = vmatprep.subr.mxu0 0.0
        %2466 = vmatpush1.msra.mxu0 0.0
        %2467 = vmatprep.subr.mxu0 0.0
        %2468 = vmatpush1.msra.mxu0 0.0
        %2469 = vmatprep.subr.mxu0 0.0
        %2470 = vmatpush1.msra.mxu0 0.0
        %2471 = vmatprep.subr.mxu0 0.0
        %2472 = vmatpush1.msra.mxu0 0.0
        %2473 = vmatprep.subr.mxu0 0.0
        %2474 = vmatpush1.msra.mxu0 0.0
        %2475 = vmatprep.subr.mxu0 0.0
        %2476 = vmatpush1.msra.mxu0 0.0
        %2477 = vmatprep.subr.mxu0 0.0
        %2478 = vmatpush1.msra.mxu0 0.0
        %2479 = vmatprep.subr.mxu0 0.0
        %2480 = vmatpush1.msra.mxu0 0.0
        %2481 = vmatprep.subr.mxu0 0.0
        %2482 = vmatpush1.msra.mxu0 0.0
        %2483 = vmatprep.subr.mxu0 0.0
        %2484 = vmatpush1.msra.mxu0 0.0
        %2485 = vmatprep.subr.mxu0 0.0
        %2486 = vmatpush1.msra.mxu0 0.0
        %2487 = vmatprep.subr.mxu0 0.0
        %2488 = vmatpush1.msra.mxu0 0.0
        %2489 = vmatprep.subr.mxu0 0.0
        %2490 = vmatpush1.msra.mxu0 0.0
        %2491 = vmatprep.subr.mxu0 0.0
        %2492 = vmatpush1.msra.mxu0 0.0
        %2493 = vmatprep.subr.mxu0 0.0
        %2494 = vmatpush1.msra.mxu0 0.0
        %2495 = vmatprep.subr.mxu0 0.0
        %2496 = vmatpush1.msra.mxu0 0.0
        %2497 = vmatprep.subr.mxu0 0.0
        %2498 = vmatpush1.msra.mxu0 0.0
        %2499 = vmatprep.subr.mxu0 0.0
        %2500 = vmatpush1.msra.mxu0 0.0
        %2501 = vmatprep.subr.mxu0 0.0
        %2502 = vmatpush1.msra.mxu0 0.0
        %2503 = vmatprep.subr.mxu0 0.0
        %2504 = vmatpush1.msra.mxu0 0.0
        %2505 = vmatprep.subr.mxu0 0.0
        %2506 = vmatpush1.msra.mxu0 0.0
        %2507 = vmatprep.subr.mxu0 0.0
        %2508 = vmatpush1.msra.mxu0 0.0
        %2509 = vmatprep.subr.mxu0 0.0
        %2510 = vmatpush1.msra.mxu0 0.0
        %2511 = vmatprep.subr.mxu0 0.0
        %2512 = vmatpush1.msra.mxu0 0.0
        %2513 = vmatprep.subr.mxu0 0.0
        %2514 = vmatpush1.msra.mxu0 0.0
        %2515 = vmatprep.mubr.f32.mxu0 0.0
        %2516 = vmatmul.mubr.f32.gmra.mrb[0].mxu0 %v2352
        %v2517 = vpop.f32.mrb[0].mxu0
        %v2518 = vadd.f32 %v2348, %v2517
        %v2519 = vpop.f32.mrb[0].mxu0
        %2520 = vmatprep.mubr.f32.mxu0 0.0
        %2521 = vmatmul.mubr.f32.gmra.mrb[0].mxu0 %v2355
        %v2522 = vpop.f32.mrb[0].mxu0
        %v2523 = vadd.f32 %v2348, %v2522
        %v2524 = vpop.f32.mrb[0].mxu0
        %2525 = vmatprep.mubr.f32.mxu0 0.0
        %2526 = vmatmul.mubr.f32.gmra.mrb[0].mxu0 %v2358
        %v2527 = vpop.f32.mrb[0].mxu0
        %v2528 = vadd.f32 %v2348, %v2527
        %v2529 = vpop.f32.mrb[0].mxu0
        %2530 = vmatprep.mubr.f32.mxu0 0.0
        %2531 = vmatmul.mubr.f32.gmra.mrb[0].mxu0 %v2361
        %v2532 = vpop.f32.mrb[0].mxu0
        %v2533 = vadd.f32 %v2348, %v2532
        %v2534 = vpop.f32.mrb[0].mxu0
        %2535 = vmatprep.mubr.f32.mxu0 0.0
        %2536 = vmatmul.mubr.f32.gmra.mrb[0].mxu0 %v2364
        %v2537 = vpop.f32.mrb[0].mxu0
        %v2538 = vadd.f32 %v2348, %v2537
        %v2539 = vpop.f32.mrb[0].mxu0
        %2540 = vmatprep.mubr.f32.mxu0 0.0
        %2541 = vmatmul.mubr.f32.gmra.mrb[0].mxu0 %v2367
        %v2542 = vpop.f32.mrb[0].mxu0
        %v2543 = vadd.f32 %v2348, %v2542
        %v2544 = vpop.f32.mrb[0].mxu0
        %2545 = vmatprep.mubr.f32.mxu0 0.0
        %2546 = vmatmul.mubr.f32.gmra.mrb[0].mxu0 %v2370
        %v2547 = vpop.f32.mrb[0].mxu0
        %v2548 = vadd.f32 %v2348, %v2547
        %v2549 = vpop.f32.mrb[0].mxu0
        %2550 = vmatprep.mubr.f32.mxu0 0.0
        %2551 = vmatmul.mubr.f32.gmra.mrb[0].mxu0 %v2373
        %v2552 = vpop.f32.mrb[0].mxu0
        %v2553 = vadd.f32 %v2348, %v2552
        %v2554 = vpop.f32.mrb[0].mxu0
        %2555 = vmatprep.mubr.f32.mxu0 0.0
        %2556 = vmatmul.mubr.f32.gmra.mrb[0].mxu0 %v2376
        %v2557 = vpop.f32.mrb[0].mxu0
        %v2558 = vadd.f32 %v2348, %v2557
        %v2559 = vpop.f32.mrb[0].mxu0
        %2560 = vmatprep.mubr.f32.mxu0 0.0
        %2561 = vmatmul.mubr.f32.gmra.mrb[0].mxu0 %v2379
        %v2562 = vpop.f32.mrb[0].mxu0
        %v2563 = vadd.f32 %v2348, %v2562
        %v2564 = vpop.f32.mrb[0].mxu0
        %2565 = vmatprep.mubr.f32.mxu0 0.0
        %2566 = vmatmul.mubr.f32.gmra.mrb[0].mxu0 %v2382
        %v2567 = vpop.f32.mrb[0].mxu0
        %v2568 = vadd.f32 %v2348, %v2567
        %v2569 = vpop.f32.mrb[0].mxu0
        %2570 = vmatprep.mubr.f32.mxu0 0.0
        %2571 = vmatmul.mubr.f32.gmra.mrb[0].mxu0 %v2385
        %v2572 = vpop.f32.mrb[0].mxu0
        %v2573 = vadd.f32 %v2348, %v2572
        %v2574 = vpop.f32.mrb[0].mxu0
        %2575 = vmatprep.mubr.f32.mxu0 0.0
        %2576 = vmatmul.mubr.f32.gmra.mrb[0].mxu0 %v2388
        %v2577 = vpop.f32.mrb[0].mxu0
        %v2578 = vadd.f32 %v2348, %v2577
        %v2579 = vpop.f32.mrb[0].mxu0
        %2580 = vmatprep.mubr.f32.mxu0 0.0
        %2581 = vmatmul.mubr.f32.gmra.mrb[0].mxu0 %v2391
        %v2582 = vpop.f32.mrb[0].mxu0
        %v2583 = vadd.f32 %v2348, %v2582
        %v2584 = vpop.f32.mrb[0].mxu0
        %2585 = vmatprep.mubr.f32.mxu0 0.0
        %2586 = vmatmul.mubr.f32.gmra.mrb[0].mxu0 %v2394
        %v2587 = vpop.f32.mrb[0].mxu0
        %v2588 = vadd.f32 %v2348, %v2587
        %v2589 = vpop.f32.mrb[0].mxu0
        %2590 = vmatprep.mubr.f32.mxu0 0.0
        %2591 = vmatmul.mubr.f32.gmra.mrb[0].mxu0 %v2397
        %v2592 = vpop.f32.mrb[0].mxu0
        %v2593 = vadd.f32 %v2348, %v2592
        %v2594 = vpop.f32.mrb[0].mxu0
        %2595 = vmatprep.mubr.f32.mxu0 0.0
        %2596 = vmatmul.mubr.f32.gmra.mrb[0].mxu0 %v2400
        %v2597 = vpop.f32.mrb[0].mxu0
        %v2598 = vadd.f32 %v2348, %v2597
        %v2599 = vpop.f32.mrb[0].mxu0
        %2600 = vmatprep.mubr.f32.mxu0 0.0
        %2601 = vmatmul.mubr.f32.gmra.mrb[0].mxu0 %v2403
        %v2602 = vpop.f32.mrb[0].mxu0
        %v2603 = vadd.f32 %v2348, %v2602
        %v2604 = vpop.f32.mrb[0].mxu0
        %2605 = vmatprep.mubr.f32.mxu0 0.0
        %2606 = vmatmul.mubr.f32.gmra.mrb[0].mxu0 %v2406
        %v2607 = vpop.f32.mrb[0].mxu0
        %v2608 = vadd.f32 %v2348, %v2607
        %v2609 = vpop.f32.mrb[0].mxu0
        %2610 = vmatprep.mubr.f32.mxu0 0.0
        %2611 = vmatmul.mubr.f32.gmra.mrb[0].mxu0 %v2409
        %v2612 = vpop.f32.mrb[0].mxu0
        %v2613 = vadd.f32 %v2348, %v2612
        %v2614 = vpop.f32.mrb[0].mxu0
        %2615 = vmatprep.mubr.f32.mxu0 0.0
        %2616 = vmatmul.mubr.f32.gmra.mrb[0].mxu0 %v2412
        %v2617 = vpop.f32.mrb[0].mxu0
        %v2618 = vadd.f32 %v2348, %v2617
        %v2619 = vpop.f32.mrb[0].mxu0
        %2620 = vmatprep.mubr.f32.mxu0 0.0
        %2621 = vmatmul.mubr.f32.gmra.mrb[0].mxu0 %v2415
        %v2622 = vpop.f32.mrb[0].mxu0
        %v2623 = vadd.f32 %v2348, %v2622
        %v2624 = vpop.f32.mrb[0].mxu0
        %2625 = vmatprep.mubr.f32.mxu0 0.0
        %2626 = vmatmul.mubr.f32.gmra.mrb[0].mxu0 %v2418
        %v2627 = vpop.f32.mrb[0].mxu0
        %v2628 = vadd.f32 %v2348, %v2627
        %v2629 = vpop.f32.mrb[0].mxu0
        %2630 = vmatprep.mubr.f32.mxu0 0.0
        %2631 = vmatmul.mubr.f32.gmra.mrb[0].mxu0 %v2421
        %v2632 = vpop.f32.mrb[0].mxu0
        %v2633 = vadd.f32 %v2348, %v2632
        %v2634 = vpop.f32.mrb[0].mxu0
        %2635 = vmatprep.mubr.f32.mxu0 0.0
        %2636 = vmatmul.mubr.f32.gmra.mrb[0].mxu0 %v2424
        %v2637 = vpop.f32.mrb[0].mxu0
        %v2638 = vadd.f32 %v2348, %v2637
        %v2639 = vpop.f32.mrb[0].mxu0
        %2640 = vmatprep.mubr.f32.mxu0 0.0
        %2641 = vmatmul.mubr.f32.gmra.mrb[0].mxu0 %v2427
        %v2642 = vpop.f32.mrb[0].mxu0
        %v2643 = vadd.f32 %v2348, %v2642
        %v2644 = vpop.f32.mrb[0].mxu0
        %2645 = vmatprep.mubr.f32.mxu0 0.0
        %2646 = vmatmul.mubr.f32.gmra.mrb[0].mxu0 %v2430
        %v2647 = vpop.f32.mrb[0].mxu0
        %v2648 = vadd.f32 %v2348, %v2647
        %v2649 = vpop.f32.mrb[0].mxu0
        %2650 = vmatprep.mubr.f32.mxu0 0.0
        %2651 = vmatmul.mubr.f32.gmra.mrb[0].mxu0 %v2433
        %v2652 = vpop.f32.mrb[0].mxu0
        %v2653 = vadd.f32 %v2348, %v2652
        %v2654 = vpop.f32.mrb[0].mxu0
        %2655 = vmatprep.mubr.f32.mxu0 0.0
        %2656 = vmatmul.mubr.f32.gmra.mrb[0].mxu0 %v2436
        %v2657 = vpop.f32.mrb[0].mxu0
        %v2658 = vadd.f32 %v2348, %v2657
        %v2659 = vpop.f32.mrb[0].mxu0
        %2660 = vmatprep.mubr.f32.mxu0 0.0
        %2661 = vmatmul.mubr.f32.gmra.mrb[0].mxu0 %v2439
        %v2662 = vpop.f32.mrb[0].mxu0
        %v2663 = vadd.f32 %v2348, %v2662
        %v2664 = vpop.f32.mrb[0].mxu0
        %2665 = vmatprep.mubr.f32.mxu0 0.0
        %2666 = vmatmul.mubr.f32.gmra.mrb[0].mxu0 %v2442
        %v2667 = vpop.f32.mrb[0].mxu0
        %v2668 = vadd.f32 %v2348, %v2667
        %v2669 = vpop.f32.mrb[0].mxu0
        %2670 = vmatprep.mubr.f32.mxu0 0.0
        %2671 = vmatmul.mubr.f32.gmra.mrb[0].mxu0 %v2445
        %v2672 = vpop.f32.mrb[0].mxu0
        %v2673 = vadd.f32 %v2348, %v2672
        %v2674 = vpop.f32.mrb[0].mxu0
        %2675 = vdwg.mxu0
        %v2676 = vmax.f32 %v2518, 0.0
        %v2677 = vmax.f32 %v2523, 0.0
        %v2678 = vmax.f32 %v2528, 0.0
        %v2679 = vmax.f32 %v2533, 0.0
        %v2680 = vmax.f32 %v2538, 0.0
        %v2681 = vmax.f32 %v2543, 0.0
        %v2682 = vmax.f32 %v2548, 0.0
        %v2683 = vmax.f32 %v2553, 0.0
        %v2684 = vmax.f32 %v2558, 0.0
        %v2685 = vmax.f32 %v2563, 0.0
        %v2686 = vmax.f32 %v2568, 0.0
        %v2687 = vmax.f32 %v2573, 0.0
        %v2688 = vmax.f32 %v2578, 0.0
        %v2689 = vmax.f32 %v2583, 0.0
        %v2690 = vmax.f32 %v2588, 0.0
        %v2691 = vmax.f32 %v2593, 0.0
        %v2692 = vmax.f32 %v2598, 0.0
        %v2693 = vmax.f32 %v2603, 0.0
        %v2694 = vmax.f32 %v2608, 0.0
        %v2695 = vmax.f32 %v2613, 0.0
        %v2696 = vmax.f32 %v2618, 0.0
        %v2697 = vmax.f32 %v2623, 0.0
        %v2698 = vmax.f32 %v2628, 0.0
        %v2699 = vmax.f32 %v2633, 0.0
        %v2700 = vmax.f32 %v2638, 0.0
        %v2701 = vmax.f32 %v2643, 0.0
        %v2702 = vmax.f32 %v2648, 0.0
        %v2703 = vmax.f32 %v2653, 0.0
        %v2704 = vmax.f32 %v2658, 0.0
        %v2705 = vmax.f32 %v2663, 0.0
        %v2706 = vmax.f32 %v2668, 0.0
        %v2707 = vmax.f32 %v2673, 0.0
        %v2709 = vunpack.c.l.s4 1966171168
        %v2710 = vunpack.c.0.s8 %v2709
        %v2711 = vlaneseq
        %v2712 = vshrl.u32 %v2711, 7
        %v2713 = vsub.s32 %v2710, %v2712
        %v2714 = vrot.slane %v2676, %v2713
        %v2716 = vunpack.c.l.s4 1966171168
        %v2717 = vunpack.c.0.s8 %v2716
        %v2718 = vlaneseq
        %v2719 = vshrl.u32 %v2718, 7
        %v2720 = vsub.s32 %v2717, %v2719
        %v2721 = vrot.slane %v2677, %v2720
        %v2723 = vunpack.c.l.s4 1966171168
        %v2724 = vunpack.c.0.s8 %v2723
        %v2725 = vlaneseq
        %v2726 = vshrl.u32 %v2725, 7
        %v2727 = vsub.s32 %v2724, %v2726
        %v2728 = vrot.slane %v2678, %v2727
        %v2730 = vunpack.c.l.s4 1966171168
        %v2731 = vunpack.c.0.s8 %v2730
        %v2732 = vlaneseq
        %v2733 = vshrl.u32 %v2732, 7
        %v2734 = vsub.s32 %v2731, %v2733
        %v2735 = vrot.slane %v2679, %v2734
        %v2737 = vunpack.c.l.s4 1966171168
        %v2738 = vunpack.c.0.s8 %v2737
        %v2739 = vlaneseq
        %v2740 = vshrl.u32 %v2739, 7
        %v2741 = vsub.s32 %v2738, %v2740
        %v2742 = vrot.slane %v2680, %v2741
        %v2744 = vunpack.c.l.s4 1966171168
        %v2745 = vunpack.c.0.s8 %v2744
        %v2746 = vlaneseq
        %v2747 = vshrl.u32 %v2746, 7
        %v2748 = vsub.s32 %v2745, %v2747
        %v2749 = vrot.slane %v2681, %v2748
        %v2751 = vunpack.c.l.s4 1966171168
        %v2752 = vunpack.c.0.s8 %v2751
        %v2753 = vlaneseq
        %v2754 = vshrl.u32 %v2753, 7
        %v2755 = vsub.s32 %v2752, %v2754
        %v2756 = vrot.slane %v2682, %v2755
        %v2758 = vunpack.c.l.s4 1966171168
        %v2759 = vunpack.c.0.s8 %v2758
        %v2760 = vlaneseq
        %v2761 = vshrl.u32 %v2760, 7
        %v2762 = vsub.s32 %v2759, %v2761
        %v2763 = vrot.slane %v2683, %v2762
        %v2765 = vunpack.c.l.s4 1966171168
        %v2766 = vunpack.c.0.s8 %v2765
        %v2767 = vlaneseq
        %v2768 = vshrl.u32 %v2767, 7
        %v2769 = vsub.s32 %v2766, %v2768
        %v2770 = vrot.slane %v2684, %v2769
        %v2772 = vunpack.c.l.s4 1966171168
        %v2773 = vunpack.c.0.s8 %v2772
        %v2774 = vlaneseq
        %v2775 = vshrl.u32 %v2774, 7
        %v2776 = vsub.s32 %v2773, %v2775
        %v2777 = vrot.slane %v2685, %v2776
        %v2779 = vunpack.c.l.s4 1966171168
        %v2780 = vunpack.c.0.s8 %v2779
        %v2781 = vlaneseq
        %v2782 = vshrl.u32 %v2781, 7
        %v2783 = vsub.s32 %v2780, %v2782
        %v2784 = vrot.slane %v2686, %v2783
        %v2786 = vunpack.c.l.s4 1966171168
        %v2787 = vunpack.c.0.s8 %v2786
        %v2788 = vlaneseq
        %v2789 = vshrl.u32 %v2788, 7
        %v2790 = vsub.s32 %v2787, %v2789
        %v2791 = vrot.slane %v2687, %v2790
        %v2793 = vunpack.c.l.s4 1966171168
        %v2794 = vunpack.c.0.s8 %v2793
        %v2795 = vlaneseq
        %v2796 = vshrl.u32 %v2795, 7
        %v2797 = vsub.s32 %v2794, %v2796
        %v2798 = vrot.slane %v2688, %v2797
        %v2800 = vunpack.c.l.s4 1966171168
        %v2801 = vunpack.c.0.s8 %v2800
        %v2802 = vlaneseq
        %v2803 = vshrl.u32 %v2802, 7
        %v2804 = vsub.s32 %v2801, %v2803
        %v2805 = vrot.slane %v2689, %v2804
        %v2807 = vunpack.c.l.s4 1966171168
        %v2808 = vunpack.c.0.s8 %v2807
        %v2809 = vlaneseq
        %v2810 = vshrl.u32 %v2809, 7
        %v2811 = vsub.s32 %v2808, %v2810
        %v2812 = vrot.slane %v2690, %v2811
        %v2814 = vunpack.c.l.s4 1966171168
        %v2815 = vunpack.c.0.s8 %v2814
        %v2816 = vlaneseq
        %v2817 = vshrl.u32 %v2816, 7
        %v2818 = vsub.s32 %v2815, %v2817
        %v2819 = vrot.slane %v2691, %v2818
        %v2821 = vunpack.c.l.s4 1966171168
        %v2822 = vunpack.c.0.s8 %v2821
        %v2823 = vlaneseq
        %v2824 = vshrl.u32 %v2823, 7
        %v2825 = vsub.s32 %v2822, %v2824
        %v2826 = vrot.slane %v2692, %v2825
        %v2828 = vunpack.c.l.s4 1966171168
        %v2829 = vunpack.c.0.s8 %v2828
        %v2830 = vlaneseq
        %v2831 = vshrl.u32 %v2830, 7
        %v2832 = vsub.s32 %v2829, %v2831
        %v2833 = vrot.slane %v2693, %v2832
        %v2835 = vunpack.c.l.s4 1966171168
        %v2836 = vunpack.c.0.s8 %v2835
        %v2837 = vlaneseq
        %v2838 = vshrl.u32 %v2837, 7
        %v2839 = vsub.s32 %v2836, %v2838
        %v2840 = vrot.slane %v2694, %v2839
        %v2842 = vunpack.c.l.s4 1966171168
        %v2843 = vunpack.c.0.s8 %v2842
        %v2844 = vlaneseq
        %v2845 = vshrl.u32 %v2844, 7
        %v2846 = vsub.s32 %v2843, %v2845
        %v2847 = vrot.slane %v2695, %v2846
        %v2849 = vunpack.c.l.s4 1966171168
        %v2850 = vunpack.c.0.s8 %v2849
        %v2851 = vlaneseq
        %v2852 = vshrl.u32 %v2851, 7
        %v2853 = vsub.s32 %v2850, %v2852
        %v2854 = vrot.slane %v2696, %v2853
        %v2856 = vunpack.c.l.s4 1966171168
        %v2857 = vunpack.c.0.s8 %v2856
        %v2858 = vlaneseq
        %v2859 = vshrl.u32 %v2858, 7
        %v2860 = vsub.s32 %v2857, %v2859
        %v2861 = vrot.slane %v2697, %v2860
        %v2863 = vunpack.c.l.s4 1966171168
        %v2864 = vunpack.c.0.s8 %v2863
        %v2865 = vlaneseq
        %v2866 = vshrl.u32 %v2865, 7
        %v2867 = vsub.s32 %v2864, %v2866
        %v2868 = vrot.slane %v2698, %v2867
        %v2870 = vunpack.c.l.s4 1966171168
        %v2871 = vunpack.c.0.s8 %v2870
        %v2872 = vlaneseq
        %v2873 = vshrl.u32 %v2872, 7
        %v2874 = vsub.s32 %v2871, %v2873
        %v2875 = vrot.slane %v2699, %v2874
        %v2877 = vunpack.c.l.s4 1966171168
        %v2878 = vunpack.c.0.s8 %v2877
        %v2879 = vlaneseq
        %v2880 = vshrl.u32 %v2879, 7
        %v2881 = vsub.s32 %v2878, %v2880
        %v2882 = vrot.slane %v2700, %v2881
        %v2884 = vunpack.c.l.s4 1966171168
        %v2885 = vunpack.c.0.s8 %v2884
        %v2886 = vlaneseq
        %v2887 = vshrl.u32 %v2886, 7
        %v2888 = vsub.s32 %v2885, %v2887
        %v2889 = vrot.slane %v2701, %v2888
        %v2891 = vunpack.c.l.s4 1966171168
        %v2892 = vunpack.c.0.s8 %v2891
        %v2893 = vlaneseq
        %v2894 = vshrl.u32 %v2893, 7
        %v2895 = vsub.s32 %v2892, %v2894
        %v2896 = vrot.slane %v2702, %v2895
        %v2898 = vunpack.c.l.s4 1966171168
        %v2899 = vunpack.c.0.s8 %v2898
        %v2900 = vlaneseq
        %v2901 = vshrl.u32 %v2900, 7
        %v2902 = vsub.s32 %v2899, %v2901
        %v2903 = vrot.slane %v2703, %v2902
        %v2905 = vunpack.c.l.s4 1966171168
        %v2906 = vunpack.c.0.s8 %v2905
        %v2907 = vlaneseq
        %v2908 = vshrl.u32 %v2907, 7
        %v2909 = vsub.s32 %v2906, %v2908
        %v2910 = vrot.slane %v2704, %v2909
        %v2912 = vunpack.c.l.s4 1966171168
        %v2913 = vunpack.c.0.s8 %v2912
        %v2914 = vlaneseq
        %v2915 = vshrl.u32 %v2914, 7
        %v2916 = vsub.s32 %v2913, %v2915
        %v2917 = vrot.slane %v2705, %v2916
        %v2919 = vunpack.c.l.s4 1966171168
        %v2920 = vunpack.c.0.s8 %v2919
        %v2921 = vlaneseq
        %v2922 = vshrl.u32 %v2921, 7
        %v2923 = vsub.s32 %v2920, %v2922
        %v2924 = vrot.slane %v2706, %v2923
        %v2926 = vunpack.c.l.s4 1966171168
        %v2927 = vunpack.c.0.s8 %v2926
        %v2928 = vlaneseq
        %v2929 = vshrl.u32 %v2928, 7
        %v2930 = vsub.s32 %v2927, %v2929
        %v2931 = vrot.slane %v2707, %v2930
        %v2964 = vrot.slane %v2714, 4
        %v2965 = vrot.slane %v2721, 4
        %v2966 = vrot.slane %v2728, 4
        %v2967 = vrot.slane %v2735, 4
        %v2968 = vrot.slane %v2742, 4
        %v2969 = vrot.slane %v2749, 4
        %v2970 = vrot.slane %v2756, 4
        %v2971 = vrot.slane %v2763, 4
        %v2972 = vrot.slane %v2770, 4
        %v2973 = vrot.slane %v2777, 4
        %v2974 = vrot.slane %v2784, 4
        %v2975 = vrot.slane %v2791, 4
        %v2976 = vrot.slane %v2798, 4
        %v2977 = vrot.slane %v2805, 4
        %v2978 = vrot.slane %v2812, 4
        %v2979 = vrot.slane %v2819, 4
        %v2980 = vrot.slane %v2826, 4
        %v2981 = vrot.slane %v2833, 4
        %v2982 = vrot.slane %v2840, 4
        %v2983 = vrot.slane %v2847, 4
        %v2984 = vrot.slane %v2854, 4
        %v2985 = vrot.slane %v2861, 4
        %v2986 = vrot.slane %v2868, 4
        %v2987 = vrot.slane %v2875, 4
        %v2988 = vrot.slane %v2882, 4
        %v2989 = vrot.slane %v2889, 4
        %v2990 = vrot.slane %v2896, 4
        %v2991 = vrot.slane %v2903, 4
        %v2992 = vrot.slane %v2910, 4
        %v2993 = vrot.slane %v2917, 4
        %v2994 = vrot.slane %v2924, 4
        %v2995 = vrot.slane %v2931, 4
        %v3028 = vadd.f32 %v2714, %v2964
        %v3029 = vadd.f32 %v2721, %v2965
        %v3030 = vadd.f32 %v2728, %v2966
        %v3031 = vadd.f32 %v2735, %v2967
        %v3032 = vadd.f32 %v2742, %v2968
        %v3033 = vadd.f32 %v2749, %v2969
        %v3034 = vadd.f32 %v2756, %v2970
        %v3035 = vadd.f32 %v2763, %v2971
        %v3036 = vadd.f32 %v2770, %v2972
        %v3037 = vadd.f32 %v2777, %v2973
        %v3038 = vadd.f32 %v2784, %v2974
        %v3039 = vadd.f32 %v2791, %v2975
        %v3040 = vadd.f32 %v2798, %v2976
        %v3041 = vadd.f32 %v2805, %v2977
        %v3042 = vadd.f32 %v2812, %v2978
        %v3043 = vadd.f32 %v2819, %v2979
        %v3044 = vadd.f32 %v2826, %v2980
        %v3045 = vadd.f32 %v2833, %v2981
        %v3046 = vadd.f32 %v2840, %v2982
        %v3047 = vadd.f32 %v2847, %v2983
        %v3048 = vadd.f32 %v2854, %v2984
        %v3049 = vadd.f32 %v2861, %v2985
        %v3050 = vadd.f32 %v2868, %v2986
        %v3051 = vadd.f32 %v2875, %v2987
        %v3052 = vadd.f32 %v2882, %v2988
        %v3053 = vadd.f32 %v2889, %v2989
        %v3054 = vadd.f32 %v2896, %v2990
        %v3055 = vadd.f32 %v2903, %v2991
        %v3056 = vadd.f32 %v2910, %v2992
        %v3057 = vadd.f32 %v2917, %v2993
        %v3058 = vadd.f32 %v2924, %v2994
        %v3059 = vadd.f32 %v2931, %v2995
        %v3060 = vadd.f32 %v3028, %v3030
        %v3061 = vadd.f32 %v3029, %v3031
        %v3062 = vadd.f32 %v3032, %v3034
        %v3063 = vadd.f32 %v3033, %v3035
        %v3064 = vadd.f32 %v3036, %v3038
        %v3065 = vadd.f32 %v3037, %v3039
        %v3066 = vadd.f32 %v3040, %v3042
        %v3067 = vadd.f32 %v3041, %v3043
        %v3068 = vadd.f32 %v3044, %v3046
        %v3069 = vadd.f32 %v3045, %v3047
        %v3070 = vadd.f32 %v3048, %v3050
        %v3071 = vadd.f32 %v3049, %v3051
        %v3072 = vadd.f32 %v3052, %v3054
        %v3073 = vadd.f32 %v3053, %v3055
        %v3074 = vadd.f32 %v3056, %v3058
        %v3075 = vadd.f32 %v3057, %v3059
        %v3076 = vld [vmem:[%s3] sm:$0x1]
        %v3078 = vlaneseq
        %v3079 = vshrl.u32 %v3078, 7
        %v3080 = vsub.s32 0, %v3079
        %v3081 = vrot.slane %v3076, %v3080
        %v3083 = vcombine.high %v3081, %v3081
        %v3085 = vmul.f32 %v3060, %v3081
        %v3086 = vmul.f32 %v3061, %v3083
        %v3087 = vmul.f32 %v3062, %v3081
        %v3088 = vmul.f32 %v3063, %v3083
        %v3089 = vmul.f32 %v3064, %v3081
        %v3090 = vmul.f32 %v3065, %v3083
        %v3091 = vmul.f32 %v3066, %v3081
        %v3092 = vmul.f32 %v3067, %v3083
        %v3093 = vmul.f32 %v3068, %v3081
        %v3094 = vmul.f32 %v3069, %v3083
        %v3095 = vmul.f32 %v3070, %v3081
        %v3096 = vmul.f32 %v3071, %v3083
        %v3097 = vmul.f32 %v3072, %v3081
        %v3098 = vmul.f32 %v3073, %v3083
        %v3099 = vmul.f32 %v3074, %v3081
        %v3100 = vmul.f32 %v3075, %v3083
        %v3101 = vld [vmem:[%s4] sm:$0x1]
        %v3103 = vlaneseq
        %v3104 = vshrl.u32 %v3103, 7
        %v3105 = vsub.s32 0, %v3104
        %v3106 = vrot.slane %v3101, %v3105
        %v3108 = vcombine.high %v3106, %v3106
        %v3110 = vadd.f32 %v3085, %v3106
        %v3111 = vadd.f32 %v3086, %v3108
        %v3112 = vadd.f32 %v3087, %v3106
        %v3113 = vadd.f32 %v3088, %v3108
        %v3114 = vadd.f32 %v3089, %v3106
        %v3115 = vadd.f32 %v3090, %v3108
        %v3116 = vadd.f32 %v3091, %v3106
        %v3117 = vadd.f32 %v3092, %v3108
        %v3118 = vadd.f32 %v3093, %v3106
        %v3119 = vadd.f32 %v3094, %v3108
        %v3120 = vadd.f32 %v3095, %v3106
        %v3121 = vadd.f32 %v3096, %v3108
        %v3122 = vadd.f32 %v3097, %v3106
        %v3123 = vadd.f32 %v3098, %v3108
        %v3124 = vadd.f32 %v3099, %v3106
        %v3125 = vadd.f32 %v3100, %v3108
        %3126 = vst [vmem:[#allocation4] sm:$0xff] 0.0
        %3127 = vst [vmem:[#allocation4 + $0x8] sm:$0x3] 0.0
        %3128 = vst [vmem:[#allocation4 + $0x10] sm:$0xff] 0.0
        %3129 = vst [vmem:[#allocation4 + $0x18] sm:$0x3] 0.0
        %3130 = vst [vmem:[#allocation4 + $0x20] sm:$0xff] 0.0
        %3131 = vst [vmem:[#allocation4 + $0x28] sm:$0x3] 0.0
        %3132 = vst [vmem:[#allocation4 + $0x30] sm:$0xff] 0.0
        %3133 = vst [vmem:[#allocation4 + $0x38] sm:$0x3] 0.0
        %3134 = vst [vmem:[#allocation4 + $0x40] sm:$0xff] 0.0
        %3135 = vst [vmem:[#allocation4 + $0x48] sm:$0x3] 0.0
        %3136 = vst [vmem:[#allocation4 + $0x50] sm:$0xff] 0.0
        %3137 = vst [vmem:[#allocation4 + $0x58] sm:$0x3] 0.0
        %3138 = vst [vmem:[#allocation4 + $0x60] sm:$0xff] 0.0
        %3139 = vst [vmem:[#allocation4 + $0x68] sm:$0x3] 0.0
        %3140 = vst [vmem:[#allocation4 + $0x70] sm:$0xff] 0.0
        %3141 = vst [vmem:[#allocation4 + $0x78] sm:$0x3] 0.0
        %3142 = vst [vmem:[#allocation4 + $0x80] sm:$0xff] 0.0
        %3143 = vst [vmem:[#allocation4 + $0x88] sm:$0x3] 0.0
        %3144 = vst [vmem:[#allocation4 + $0x90] sm:$0xff] 0.0
        %3145 = vst [vmem:[#allocation4 + $0x98] sm:$0x3] 0.0
        %v3162 = vcombine.low %v3110, %v3111
        %v3163 = vcombine.low %v3112, %v3113
        %v3164 = vcombine.low %v3114, %v3115
        %v3165 = vcombine.low %v3116, %v3117
        %v3166 = vcombine.low %v3118, %v3119
        %v3167 = vcombine.low %v3120, %v3121
        %v3168 = vcombine.low %v3122, %v3123
        %v3169 = vcombine.low %v3124, %v3125
        %s3178 = scalar_lea.vmem [#allocation4], 16
        %3179 = vst [vmem:[%s3178 + $0x1] sm:$0xff] %v3162
        %3180 = vst [vmem:[%s3178 + $0x11] sm:$0xff] %v3163
        %3181 = vst [vmem:[%s3178 + $0x21] sm:$0xff] %v3164
        %3182 = vst [vmem:[%s3178 + $0x31] sm:$0xff] %v3165
        %3183 = vst [vmem:[%s3178 + $0x41] sm:$0xff] %v3166
        %3184 = vst [vmem:[%s3178 + $0x51] sm:$0xff] %v3167
        %3185 = vst [vmem:[%s3178 + $0x61] sm:$0xff] %v3168
        %3186 = vst [vmem:[%s3178 + $0x71] sm:$0xff] %v3169
        %v3187 = vld [vmem:[#allocation4] sm:$0xff]
        %v3188 = vld [vmem:[#allocation4 + $0x10] sm:$0xff]
        %v3189 = vld [vmem:[#allocation4 + $0x20] sm:$0xff]
        %v3190 = vld [vmem:[#allocation4 + $0x30] sm:$0xff]
        %v3191 = vld [vmem:[#allocation4 + $0x40] sm:$0xff]
        %v3192 = vld [vmem:[#allocation4 + $0x50] sm:$0xff]
        %v3193 = vld [vmem:[#allocation4 + $0x60] sm:$0xff]
        %v3194 = vld [vmem:[#allocation4 + $0x70] sm:$0xff]
        %3195 = vst [vmem:[#allocation5] sm:$0xff] %v3187
        %3196 = vst [vmem:[#allocation5 + $0x48] sm:$0xff] %v3188
        %3197 = vst [vmem:[#allocation5 + $0x90] sm:$0xff] %v3189
        %3198 = vst [vmem:[#allocation5 + $0xd8] sm:$0xff] %v3190
        %3199 = vst [vmem:[#allocation5 + $0x120] sm:$0xff] %v3191
        %3200 = vst [vmem:[#allocation5 + $0x168] sm:$0xff] %v3192
        %3201 = vst [vmem:[#allocation5 + $0x1b0] sm:$0xff] %v3193
        %3202 = vst [vmem:[#allocation5 + $0x1f8] sm:$0xff] %v3194
        %v3203 = vld [vmem:[#allocation4 + $0x1] sm:$0xff]
        %v3204 = vld [vmem:[#allocation4 + $0x11] sm:$0xff]
        %v3205 = vld [vmem:[#allocation4 + $0x21] sm:$0xff]
        %v3206 = vld [vmem:[#allocation4 + $0x31] sm:$0xff]
        %v3207 = vld [vmem:[#allocation4 + $0x41] sm:$0xff]
        %v3208 = vld [vmem:[#allocation4 + $0x51] sm:$0xff]
        %v3209 = vld [vmem:[#allocation4 + $0x61] sm:$0xff]
        %v3210 = vld [vmem:[#allocation4 + $0x71] sm:$0xff]
        %3211 = vst [vmem:[#allocation5 + $0x8] sm:$0xff] %v3203
        %3212 = vst [vmem:[#allocation5 + $0x50] sm:$0xff] %v3204
        %3213 = vst [vmem:[#allocation5 + $0x98] sm:$0xff] %v3205
        %3214 = vst [vmem:[#allocation5 + $0xe0] sm:$0xff] %v3206
        %3215 = vst [vmem:[#allocation5 + $0x128] sm:$0xff] %v3207
        %3216 = vst [vmem:[#allocation5 + $0x170] sm:$0xff] %v3208
        %3217 = vst [vmem:[#allocation5 + $0x1b8] sm:$0xff] %v3209
        %3218 = vst [vmem:[#allocation5 + $0x200] sm:$0xff] %v3210
        %v3219 = vld [vmem:[#allocation4 + $0x2] sm:$0xff]
        %v3220 = vld [vmem:[#allocation4 + $0x12] sm:$0xff]
        %v3221 = vld [vmem:[#allocation4 + $0x22] sm:$0xff]
        %v3222 = vld [vmem:[#allocation4 + $0x32] sm:$0xff]
        %v3223 = vld [vmem:[#allocation4 + $0x42] sm:$0xff]
        %v3224 = vld [vmem:[#allocation4 + $0x52] sm:$0xff]
        %v3225 = vld [vmem:[#allocation4 + $0x62] sm:$0xff]
        %v3226 = vld [vmem:[#allocation4 + $0x72] sm:$0xff]
        %3227 = vst [vmem:[#allocation5 + $0x10] sm:$0xff] %v3219
        %3228 = vst [vmem:[#allocation5 + $0x58] sm:$0xff] %v3220
        %3229 = vst [vmem:[#allocation5 + $0xa0] sm:$0xff] %v3221
        %3230 = vst [vmem:[#allocation5 + $0xe8] sm:$0xff] %v3222
        %3231 = vst [vmem:[#allocation5 + $0x130] sm:$0xff] %v3223
        %3232 = vst [vmem:[#allocation5 + $0x178] sm:$0xff] %v3224
        %3233 = vst [vmem:[#allocation5 + $0x1c0] sm:$0xff] %v3225
        %3234 = vst [vmem:[#allocation5 + $0x208] sm:$0xff] %v3226
        %v3235 = vld [vmem:[%s3178] sm:$0xff]
        %v3236 = vld [vmem:[%s3178 + $0x10] sm:$0xff]
        %v3237 = vld [vmem:[%s3178 + $0x20] sm:$0xff]
        %v3238 = vld [vmem:[%s3178 + $0x30] sm:$0xff]
        %v3239 = vld [vmem:[%s3178 + $0x40] sm:$0xff]
        %v3240 = vld [vmem:[%s3178 + $0x50] sm:$0xff]
        %v3241 = vld [vmem:[%s3178 + $0x60] sm:$0xff]
        %v3242 = vld [vmem:[%s3178 + $0x70] sm:$0xff]
        %3243 = vst [vmem:[#allocation5 + $0x18] sm:$0xff] %v3235
        %3244 = vst [vmem:[#allocation5 + $0x60] sm:$0xff] %v3236
        %3245 = vst [vmem:[#allocation5 + $0xa8] sm:$0xff] %v3237
        %3246 = vst [vmem:[#allocation5 + $0xf0] sm:$0xff] %v3238
        %3247 = vst [vmem:[#allocation5 + $0x138] sm:$0xff] %v3239
        %3248 = vst [vmem:[#allocation5 + $0x180] sm:$0xff] %v3240
        %3249 = vst [vmem:[#allocation5 + $0x1c8] sm:$0xff] %v3241
        %3250 = vst [vmem:[#allocation5 + $0x210] sm:$0xff] %v3242
        %v3251 = vld [vmem:[%s3178 + $0x1] sm:$0xff]
        %v3252 = vld [vmem:[%s3178 + $0x11] sm:$0xff]
        %v3253 = vld [vmem:[%s3178 + $0x21] sm:$0xff]
        %v3254 = vld [vmem:[%s3178 + $0x31] sm:$0xff]
        %v3255 = vld [vmem:[%s3178 + $0x41] sm:$0xff]
        %v3256 = vld [vmem:[%s3178 + $0x51] sm:$0xff]
        %v3257 = vld [vmem:[%s3178 + $0x61] sm:$0xff]
        %v3258 = vld [vmem:[%s3178 + $0x71] sm:$0xff]
        %3259 = vst [vmem:[#allocation5 + $0x20] sm:$0xff] %v3251
        %3260 = vst [vmem:[#allocation5 + $0x68] sm:$0xff] %v3252
        %3261 = vst [vmem:[#allocation5 + $0xb0] sm:$0xff] %v3253
        %3262 = vst [vmem:[#allocation5 + $0xf8] sm:$0xff] %v3254
        %3263 = vst [vmem:[#allocation5 + $0x140] sm:$0xff] %v3255
        %3264 = vst [vmem:[#allocation5 + $0x188] sm:$0xff] %v3256
        %3265 = vst [vmem:[#allocation5 + $0x1d0] sm:$0xff] %v3257
        %3266 = vst [vmem:[#allocation5 + $0x218] sm:$0xff] %v3258
        %v3267 = vld [vmem:[%s3178 + $0x2] sm:$0xff]
        %v3268 = vld [vmem:[%s3178 + $0x12] sm:$0xff]
        %v3269 = vld [vmem:[%s3178 + $0x22] sm:$0xff]
        %v3270 = vld [vmem:[%s3178 + $0x32] sm:$0xff]
        %v3271 = vld [vmem:[%s3178 + $0x42] sm:$0xff]
        %v3272 = vld [vmem:[%s3178 + $0x52] sm:$0xff]
        %v3273 = vld [vmem:[%s3178 + $0x62] sm:$0xff]
        %v3274 = vld [vmem:[%s3178 + $0x72] sm:$0xff]
        %3275 = vst [vmem:[#allocation5 + $0x28] sm:$0xff] %v3267
        %3276 = vst [vmem:[#allocation5 + $0x70] sm:$0xff] %v3268
        %3277 = vst [vmem:[#allocation5 + $0xb8] sm:$0xff] %v3269
        %3278 = vst [vmem:[#allocation5 + $0x100] sm:$0xff] %v3270
        %3279 = vst [vmem:[#allocation5 + $0x148] sm:$0xff] %v3271
        %3280 = vst [vmem:[#allocation5 + $0x190] sm:$0xff] %v3272
        %3281 = vst [vmem:[#allocation5 + $0x1d8] sm:$0xff] %v3273
        %3282 = vst [vmem:[#allocation5 + $0x220] sm:$0xff] %v3274
        %s3283 = scalar_lea.vmem [#allocation4], 32
        %v3284 = vld [vmem:[%s3283] sm:$0xff]
        %v3285 = vld [vmem:[%s3283 + $0x10] sm:$0xff]
        %v3286 = vld [vmem:[%s3283 + $0x20] sm:$0xff]
        %v3287 = vld [vmem:[%s3283 + $0x30] sm:$0xff]
        %v3288 = vld [vmem:[%s3283 + $0x40] sm:$0xff]
        %v3289 = vld [vmem:[%s3283 + $0x50] sm:$0xff]
        %v3290 = vld [vmem:[%s3283 + $0x60] sm:$0xff]
        %v3291 = vld [vmem:[%s3283 + $0x70] sm:$0xff]
        %3292 = vst [vmem:[#allocation5 + $0x30] sm:$0xff] %v3284
        %3293 = vst [vmem:[#allocation5 + $0x78] sm:$0xff] %v3285
        %3294 = vst [vmem:[#allocation5 + $0xc0] sm:$0xff] %v3286
        %3295 = vst [vmem:[#allocation5 + $0x108] sm:$0xff] %v3287
        %3296 = vst [vmem:[#allocation5 + $0x150] sm:$0xff] %v3288
        %3297 = vst [vmem:[#allocation5 + $0x198] sm:$0xff] %v3289
        %3298 = vst [vmem:[#allocation5 + $0x1e0] sm:$0xff] %v3290
        %3299 = vst [vmem:[#allocation5 + $0x228] sm:$0xff] %v3291
        %v3300 = vld [vmem:[%s3283 + $0x1] sm:$0xff]
        %v3301 = vld [vmem:[%s3283 + $0x11] sm:$0xff]
        %v3302 = vld [vmem:[%s3283 + $0x21] sm:$0xff]
        %v3303 = vld [vmem:[%s3283 + $0x31] sm:$0xff]
        %v3304 = vld [vmem:[%s3283 + $0x41] sm:$0xff]
        %v3305 = vld [vmem:[%s3283 + $0x51] sm:$0xff]
        %v3306 = vld [vmem:[%s3283 + $0x61] sm:$0xff]
        %v3307 = vld [vmem:[%s3283 + $0x71] sm:$0xff]
        %3308 = vst [vmem:[#allocation5 + $0x38] sm:$0xff] %v3300
        %3309 = vst [vmem:[#allocation5 + $0x80] sm:$0xff] %v3301
        %3310 = vst [vmem:[#allocation5 + $0xc8] sm:$0xff] %v3302
        %3311 = vst [vmem:[#allocation5 + $0x110] sm:$0xff] %v3303
        %3312 = vst [vmem:[#allocation5 + $0x158] sm:$0xff] %v3304
        %3313 = vst [vmem:[#allocation5 + $0x1a0] sm:$0xff] %v3305
        %3314 = vst [vmem:[#allocation5 + $0x1e8] sm:$0xff] %v3306
        %3315 = vst [vmem:[#allocation5 + $0x230] sm:$0xff] %v3307
        %v3316 = vld [vmem:[%s3283 + $0x2] sm:$0xff]
        %v3317 = vld [vmem:[%s3283 + $0x12] sm:$0xff]
        %v3318 = vld [vmem:[%s3283 + $0x22] sm:$0xff]
        %v3319 = vld [vmem:[%s3283 + $0x32] sm:$0xff]
        %v3320 = vld [vmem:[%s3283 + $0x42] sm:$0xff]
        %v3321 = vld [vmem:[%s3283 + $0x52] sm:$0xff]
        %v3322 = vld [vmem:[%s3283 + $0x62] sm:$0xff]
        %v3323 = vld [vmem:[%s3283 + $0x72] sm:$0xff]
        %3324 = vst [vmem:[#allocation5 + $0x40] sm:$0xff] %v3316
        %3325 = vst [vmem:[#allocation5 + $0x88] sm:$0xff] %v3317
        %3326 = vst [vmem:[#allocation5 + $0xd0] sm:$0xff] %v3318
        %3327 = vst [vmem:[#allocation5 + $0x118] sm:$0xff] %v3319
        %3328 = vst [vmem:[#allocation5 + $0x160] sm:$0xff] %v3320
        %3329 = vst [vmem:[#allocation5 + $0x1a8] sm:$0xff] %v3321
        %3330 = vst [vmem:[#allocation5 + $0x1f0] sm:$0xff] %v3322
        %3331 = vst [vmem:[#allocation5 + $0x238] sm:$0xff] %v3323
        %v3332 = vld [vmem:[#allocation5] sm:$0xff]
        %v3333 = vld [vmem:[#allocation5 + $0x8] sm:$0xff]
        %v3334 = vld [vmem:[#allocation5 + $0x10] sm:$0xff]
        %v3335 = vld [vmem:[#allocation5 + $0x18] sm:$0xff]
        %v3336 = vld [vmem:[#allocation5 + $0x20] sm:$0xff]
        %v3337 = vld [vmem:[#allocation5 + $0x28] sm:$0xff]
        %v3338 = vld [vmem:[#allocation5 + $0x30] sm:$0xff]
        %v3339 = vld [vmem:[#allocation5 + $0x38] sm:$0xff]
        %v3340 = vld [vmem:[#allocation5 + $0x40] sm:$0xff]
        %v3341 = vld [vmem:[#allocation5 + $0x48] sm:$0xff]
        %v3342 = vld [vmem:[#allocation5 + $0x50] sm:$0xff]
        %v3343 = vld [vmem:[#allocation5 + $0x58] sm:$0xff]
        %v3344 = vld [vmem:[#allocation5 + $0x60] sm:$0xff]
        %v3345 = vld [vmem:[#allocation5 + $0x68] sm:$0xff]
        %v3346 = vld [vmem:[#allocation5 + $0x70] sm:$0xff]
        %v3347 = vld [vmem:[#allocation5 + $0x78] sm:$0xff]
        %v3348 = vld [vmem:[#allocation5 + $0x80] sm:$0xff]
        %v3349 = vld [vmem:[#allocation5 + $0x88] sm:$0xff]
        %v3350 = vld [vmem:[#allocation5 + $0x90] sm:$0xff]
        %v3351 = vld [vmem:[#allocation5 + $0x98] sm:$0xff]
        %v3352 = vld [vmem:[#allocation5 + $0xa0] sm:$0xff]
        %v3353 = vld [vmem:[#allocation5 + $0xa8] sm:$0xff]
        %v3354 = vld [vmem:[#allocation5 + $0xb0] sm:$0xff]
        %v3355 = vld [vmem:[#allocation5 + $0xb8] sm:$0xff]
        %v3356 = vld [vmem:[#allocation5 + $0xc0] sm:$0xff]
        %v3357 = vld [vmem:[#allocation5 + $0xc8] sm:$0xff]
        %v3358 = vld [vmem:[#allocation5 + $0xd0] sm:$0xff]
        %v3359 = vld [vmem:[#allocation5 + $0xd8] sm:$0xff]
        %v3360 = vld [vmem:[#allocation5 + $0xe0] sm:$0xff]
        %v3361 = vld [vmem:[#allocation5 + $0xe8] sm:$0xff]
        %v3362 = vld [vmem:[#allocation5 + $0xf0] sm:$0xff]
        %v3363 = vld [vmem:[#allocation5 + $0xf8] sm:$0xff]
        %v3364 = vld [vmem:[#allocation5 + $0x100] sm:$0xff]
        %v3365 = vld [vmem:[#allocation5 + $0x108] sm:$0xff]
        %v3366 = vld [vmem:[#allocation5 + $0x110] sm:$0xff]
        %v3367 = vld [vmem:[#allocation5 + $0x118] sm:$0xff]
        %v3368 = vld [vmem:[#allocation5 + $0x120] sm:$0xff]
        %v3369 = vld [vmem:[#allocation5 + $0x128] sm:$0xff]
        %v3370 = vld [vmem:[#allocation5 + $0x130] sm:$0xff]
        %v3371 = vld [vmem:[#allocation5 + $0x138] sm:$0xff]
        %v3372 = vld [vmem:[#allocation5 + $0x140] sm:$0xff]
        %v3373 = vld [vmem:[#allocation5 + $0x148] sm:$0xff]
        %v3374 = vld [vmem:[#allocation5 + $0x150] sm:$0xff]
        %v3375 = vld [vmem:[#allocation5 + $0x158] sm:$0xff]
        %v3376 = vld [vmem:[#allocation5 + $0x160] sm:$0xff]
        %v3377 = vld [vmem:[#allocation5 + $0x168] sm:$0xff]
        %v3378 = vld [vmem:[#allocation5 + $0x170] sm:$0xff]
        %v3379 = vld [vmem:[#allocation5 + $0x178] sm:$0xff]
        %v3380 = vld [vmem:[#allocation5 + $0x180] sm:$0xff]
        %v3381 = vld [vmem:[#allocation5 + $0x188] sm:$0xff]
        %v3382 = vld [vmem:[#allocation5 + $0x190] sm:$0xff]
        %v3383 = vld [vmem:[#allocation5 + $0x198] sm:$0xff]
        %v3384 = vld [vmem:[#allocation5 + $0x1a0] sm:$0xff]
        %v3385 = vld [vmem:[#allocation5 + $0x1a8] sm:$0xff]
        %v3386 = vld [vmem:[#allocation5 + $0x1b0] sm:$0xff]
        %v3387 = vld [vmem:[#allocation5 + $0x1b8] sm:$0xff]
        %v3388 = vld [vmem:[#allocation5 + $0x1c0] sm:$0xff]
        %v3389 = vld [vmem:[#allocation5 + $0x1c8] sm:$0xff]
        %v3390 = vld [vmem:[#allocation5 + $0x1d0] sm:$0xff]
        %v3391 = vld [vmem:[#allocation5 + $0x1d8] sm:$0xff]
        %v3392 = vld [vmem:[#allocation5 + $0x1e0] sm:$0xff]
        %v3393 = vld [vmem:[#allocation5 + $0x1e8] sm:$0xff]
        %v3394 = vld [vmem:[#allocation5 + $0x1f0] sm:$0xff]
        %v3395 = vld [vmem:[#allocation5 + $0x1f8] sm:$0xff]
        %v3396 = vld [vmem:[#allocation5 + $0x200] sm:$0xff]
        %v3397 = vld [vmem:[#allocation5 + $0x208] sm:$0xff]
        %v3398 = vld [vmem:[#allocation5 + $0x210] sm:$0xff]
        %v3399 = vld [vmem:[#allocation5 + $0x218] sm:$0xff]
        %v3400 = vld [vmem:[#allocation5 + $0x220] sm:$0xff]
        %v3401 = vld [vmem:[#allocation5 + $0x228] sm:$0xff]
        %v3402 = vld [vmem:[#allocation5 + $0x230] sm:$0xff]
        %v3403 = vld [vmem:[#allocation5 + $0x238] sm:$0xff]
        %v3404 = vld [vmem:[#allocation8] sm:$0xff]
        %v3405 = vld [vmem:[#allocation8 + $0x8] sm:$0xff]
        %v3406 = vld [vmem:[#allocation8 + $0x10] sm:$0xff]
        %v3407 = vld [vmem:[#allocation8 + $0x18] sm:$0xff]
        %v3408 = vld [vmem:[#allocation8 + $0x20] sm:$0xff]
        %v3409 = vld [vmem:[#allocation8 + $0x28] sm:$0xff]
        %v3410 = vld [vmem:[#allocation8 + $0x30] sm:$0xff]
        %v3411 = vld [vmem:[#allocation8 + $0x38] sm:$0xff]
        %v3412 = vld [vmem:[#allocation8 + $0x40] sm:$0xff]
        %v3413 = vld [vmem:[#allocation8 + $0x48] sm:$0xff]
        %v3414 = vld [vmem:[#allocation8 + $0x50] sm:$0xff]
        %v3415 = vld [vmem:[#allocation8 + $0x58] sm:$0xff]
        %v3416 = vld [vmem:[#allocation8 + $0x60] sm:$0xff]
        %v3417 = vld [vmem:[#allocation8 + $0x68] sm:$0xff]
        %v3418 = vld [vmem:[#allocation8 + $0x70] sm:$0xff]
        %v3419 = vld [vmem:[#allocation8 + $0x78] sm:$0xff]
        %v3420 = vld [vmem:[#allocation8 + $0x80] sm:$0xff]
        %v3421 = vld [vmem:[#allocation8 + $0x88] sm:$0xff]
        %v3422 = vld [vmem:[#allocation8 + $0x90] sm:$0xff]
        %v3423 = vld [vmem:[#allocation8 + $0x98] sm:$0xff]
        %v3424 = vld [vmem:[#allocation8 + $0xa0] sm:$0xff]
        %v3425 = vld [vmem:[#allocation8 + $0xa8] sm:$0xff]
        %v3426 = vld [vmem:[#allocation8 + $0xb0] sm:$0xff]
        %v3427 = vld [vmem:[#allocation8 + $0xb8] sm:$0xff]
        %v3428 = vld [vmem:[#allocation8 + $0xc0] sm:$0xff]
        %v3429 = vld [vmem:[#allocation8 + $0xc8] sm:$0xff]
        %v3430 = vld [vmem:[#allocation8 + $0xd0] sm:$0xff]
        %v3431 = vld [vmem:[#allocation8 + $0xd8] sm:$0xff]
        %v3432 = vld [vmem:[#allocation8 + $0xe0] sm:$0xff]
        %v3433 = vld [vmem:[#allocation8 + $0xe8] sm:$0xff]
        %v3434 = vld [vmem:[#allocation8 + $0xf0] sm:$0xff]
        %v3435 = vld [vmem:[#allocation8 + $0xf8] sm:$0xff]
        %v3436 = vld [vmem:[#allocation8 + $0x100] sm:$0xff]
        %v3437 = vld [vmem:[#allocation8 + $0x108] sm:$0xff]
        %v3438 = vld [vmem:[#allocation8 + $0x110] sm:$0xff]
        %v3439 = vld [vmem:[#allocation8 + $0x118] sm:$0xff]
        %v3440 = vld [vmem:[#allocation8 + $0x120] sm:$0xff]
        %v3441 = vld [vmem:[#allocation8 + $0x128] sm:$0xff]
        %v3442 = vld [vmem:[#allocation8 + $0x130] sm:$0xff]
        %v3443 = vld [vmem:[#allocation8 + $0x138] sm:$0xff]
        %v3444 = vld [vmem:[#allocation8 + $0x140] sm:$0xff]
        %v3445 = vld [vmem:[#allocation8 + $0x148] sm:$0xff]
        %v3446 = vld [vmem:[#allocation8 + $0x150] sm:$0xff]
        %v3447 = vld [vmem:[#allocation8 + $0x158] sm:$0xff]
        %v3448 = vld [vmem:[#allocation8 + $0x160] sm:$0xff]
        %v3449 = vld [vmem:[#allocation8 + $0x168] sm:$0xff]
        %v3450 = vld [vmem:[#allocation8 + $0x170] sm:$0xff]
        %v3451 = vld [vmem:[#allocation8 + $0x178] sm:$0xff]
        %v3452 = vld [vmem:[#allocation8 + $0x180] sm:$0xff]
        %v3453 = vld [vmem:[#allocation8 + $0x188] sm:$0xff]
        %v3454 = vld [vmem:[#allocation8 + $0x190] sm:$0xff]
        %v3455 = vld [vmem:[#allocation8 + $0x198] sm:$0xff]
        %v3456 = vld [vmem:[#allocation8 + $0x1a0] sm:$0xff]
        %v3457 = vld [vmem:[#allocation8 + $0x1a8] sm:$0xff]
        %v3458 = vld [vmem:[#allocation8 + $0x1b0] sm:$0xff]
        %v3459 = vld [vmem:[#allocation8 + $0x1b8] sm:$0xff]
        %v3460 = vld [vmem:[#allocation8 + $0x1c0] sm:$0xff]
        %v3461 = vld [vmem:[#allocation8 + $0x1c8] sm:$0xff]
        %v3462 = vld [vmem:[#allocation8 + $0x1d0] sm:$0xff]
        %v3463 = vld [vmem:[#allocation8 + $0x1d8] sm:$0xff]
        %v3464 = vld [vmem:[#allocation8 + $0x1e0] sm:$0xff]
        %v3465 = vld [vmem:[#allocation8 + $0x1e8] sm:$0xff]
        %v3466 = vld [vmem:[#allocation8 + $0x1f0] sm:$0xff]
        %v3467 = vld [vmem:[#allocation8 + $0x1f8] sm:$0xff]
        %v3468 = vld [vmem:[#allocation8 + $0x200] sm:$0xff]
        %v3469 = vld [vmem:[#allocation8 + $0x208] sm:$0xff]
        %v3470 = vld [vmem:[#allocation8 + $0x210] sm:$0xff]
        %v3471 = vld [vmem:[#allocation8 + $0x218] sm:$0xff]
        %v3472 = vld [vmem:[#allocation8 + $0x220] sm:$0xff]
        %v3473 = vld [vmem:[#allocation8 + $0x228] sm:$0xff]
        %v3474 = vld [vmem:[#allocation8 + $0x230] sm:$0xff]
        %v3475 = vld [vmem:[#allocation8 + $0x238] sm:$0xff]
        %v3476 = vld [vmem:[#allocation8 + $0x240] sm:$0xff]
        %v3477 = vld [vmem:[#allocation8 + $0x248] sm:$0xff]
        %v3478 = vld [vmem:[#allocation8 + $0x250] sm:$0xff]
        %v3479 = vld [vmem:[#allocation8 + $0x258] sm:$0xff]
        %v3480 = vld [vmem:[#allocation8 + $0x260] sm:$0xff]
        %v3481 = vld [vmem:[#allocation8 + $0x268] sm:$0xff]
        %v3482 = vld [vmem:[#allocation8 + $0x270] sm:$0xff]
        %v3483 = vld [vmem:[#allocation8 + $0x278] sm:$0xff]
        %v3484 = vld [vmem:[#allocation8 + $0x280] sm:$0xff]
        %v3485 = vld [vmem:[#allocation8 + $0x288] sm:$0xff]
        %v3486 = vld [vmem:[#allocation8 + $0x290] sm:$0xff]
        %v3487 = vld [vmem:[#allocation8 + $0x298] sm:$0xff]
        %v3488 = vld [vmem:[#allocation8 + $0x2a0] sm:$0xff]
        %v3489 = vld [vmem:[#allocation8 + $0x2a8] sm:$0xff]
        %v3490 = vld [vmem:[#allocation8 + $0x2b0] sm:$0xff]
        %v3491 = vld [vmem:[#allocation8 + $0x2b8] sm:$0xff]
        %v3492 = vld [vmem:[#allocation8 + $0x2c0] sm:$0xff]
        %v3493 = vld [vmem:[#allocation8 + $0x2c8] sm:$0xff]
        %v3494 = vld [vmem:[#allocation8 + $0x2d0] sm:$0xff]
        %v3495 = vld [vmem:[#allocation8 + $0x2d8] sm:$0xff]
        %v3496 = vld [vmem:[#allocation8 + $0x2e0] sm:$0xff]
        %v3497 = vld [vmem:[#allocation8 + $0x2e8] sm:$0xff]
        %v3498 = vld [vmem:[#allocation8 + $0x2f0] sm:$0xff]
        %v3499 = vld [vmem:[#allocation8 + $0x2f8] sm:$0xff]
        %v3500 = vld [vmem:[#allocation8 + $0x300] sm:$0xff]
        %v3501 = vld [vmem:[#allocation8 + $0x308] sm:$0xff]
        %v3502 = vld [vmem:[#allocation8 + $0x310] sm:$0xff]
        %v3503 = vld [vmem:[#allocation8 + $0x318] sm:$0xff]
        %v3504 = vld [vmem:[#allocation8 + $0x320] sm:$0xff]
        %v3505 = vld [vmem:[#allocation8 + $0x328] sm:$0xff]
        %v3506 = vld [vmem:[#allocation8 + $0x330] sm:$0xff]
        %v3507 = vld [vmem:[#allocation8 + $0x338] sm:$0xff]
        %v3508 = vld [vmem:[#allocation8 + $0x340] sm:$0xff]
        %v3509 = vld [vmem:[#allocation8 + $0x348] sm:$0xff]
        %v3510 = vld [vmem:[#allocation8 + $0x350] sm:$0xff]
        %v3511 = vld [vmem:[#allocation8 + $0x358] sm:$0xff]
        %v3512 = vld [vmem:[#allocation8 + $0x360] sm:$0xff]
        %v3513 = vld [vmem:[#allocation8 + $0x368] sm:$0xff]
        %v3514 = vld [vmem:[#allocation8 + $0x370] sm:$0xff]
        %v3515 = vld [vmem:[#allocation8 + $0x378] sm:$0xff]
        %v3516 = vld [vmem:[#allocation8 + $0x380] sm:$0xff]
        %v3517 = vld [vmem:[#allocation8 + $0x388] sm:$0xff]
        %v3518 = vld [vmem:[#allocation8 + $0x390] sm:$0xff]
        %v3519 = vld [vmem:[#allocation8 + $0x398] sm:$0xff]
        %v3520 = vld [vmem:[#allocation8 + $0x3a0] sm:$0xff]
        %v3521 = vld [vmem:[#allocation8 + $0x3a8] sm:$0xff]
        %v3522 = vld [vmem:[#allocation8 + $0x3b0] sm:$0xff]
        %v3523 = vld [vmem:[#allocation8 + $0x3b8] sm:$0xff]
        %v3524 = vld [vmem:[#allocation8 + $0x3c0] sm:$0xff]
        %v3525 = vld [vmem:[#allocation8 + $0x3c8] sm:$0xff]
        %v3526 = vld [vmem:[#allocation8 + $0x3d0] sm:$0xff]
        %v3527 = vld [vmem:[#allocation8 + $0x3d8] sm:$0xff]
        %v3528 = vld [vmem:[#allocation8 + $0x3e0] sm:$0xff]
        %v3529 = vld [vmem:[#allocation8 + $0x3e8] sm:$0xff]
        %v3530 = vld [vmem:[#allocation8 + $0x3f0] sm:$0xff]
        %v3531 = vld [vmem:[#allocation8 + $0x3f8] sm:$0xff]
        %v3532 = vld [vmem:[#allocation8 + $0x400] sm:$0xff]
        %v3533 = vld [vmem:[#allocation8 + $0x408] sm:$0xff]
        %v3534 = vld [vmem:[#allocation8 + $0x410] sm:$0xff]
        %v3535 = vld [vmem:[#allocation8 + $0x418] sm:$0xff]
        %v3536 = vld [vmem:[#allocation8 + $0x420] sm:$0xff]
        %v3537 = vld [vmem:[#allocation8 + $0x428] sm:$0xff]
        %v3538 = vld [vmem:[#allocation8 + $0x430] sm:$0xff]
        %v3539 = vld [vmem:[#allocation8 + $0x438] sm:$0xff]
        %v3540 = vld [vmem:[#allocation8 + $0x440] sm:$0xff]
        %v3541 = vld [vmem:[#allocation8 + $0x448] sm:$0xff]
        %v3542 = vld [vmem:[#allocation8 + $0x450] sm:$0xff]
        %v3543 = vld [vmem:[#allocation8 + $0x458] sm:$0xff]
        %v3544 = vld [vmem:[#allocation8 + $0x460] sm:$0xff]
        %v3545 = vld [vmem:[#allocation8 + $0x468] sm:$0xff]
        %v3546 = vld [vmem:[#allocation8 + $0x470] sm:$0xff]
        %v3547 = vld [vmem:[#allocation8 + $0x478] sm:$0xff]
        %v3548 = vld [vmem:[%s6] sm:$0x1]
        %v3550 = vlaneseq
        %v3551 = vshrl.u32 %v3550, 7
        %v3552 = vsub.s32 0, %v3551
        %v3553 = vrot.slane %v3548, %v3552
        %3555 = vmatprep.subr.mxu0 0.0
        %3556 = vmatpush1.msra.mxu0 %v3404
        %3557 = vmatprep.subr.mxu0 0.0
        %3558 = vmatpush1.msra.mxu0 %v3405
        %3559 = vmatprep.subr.mxu0 0.0
        %3560 = vmatpush1.msra.mxu0 %v3406
        %3561 = vmatprep.subr.mxu0 0.0
        %3562 = vmatpush1.msra.mxu0 %v3407
        %3563 = vmatprep.subr.mxu0 0.0
        %3564 = vmatpush1.msra.mxu0 %v3408
        %3565 = vmatprep.subr.mxu0 0.0
        %3566 = vmatpush1.msra.mxu0 %v3409
        %3567 = vmatprep.subr.mxu0 0.0
        %3568 = vmatpush1.msra.mxu0 %v3410
        %3569 = vmatprep.subr.mxu0 0.0
        %3570 = vmatpush1.msra.mxu0 %v3411
        %3571 = vmatprep.subr.mxu0 0.0
        %3572 = vmatpush1.msra.mxu0 %v3412
        %3573 = vmatprep.subr.mxu0 0.0
        %3574 = vmatpush1.msra.mxu0 %v3413
        %3575 = vmatprep.subr.mxu0 0.0
        %3576 = vmatpush1.msra.mxu0 %v3414
        %3577 = vmatprep.subr.mxu0 0.0
        %3578 = vmatpush1.msra.mxu0 %v3415
        %3579 = vmatprep.subr.mxu0 0.0
        %3580 = vmatpush1.msra.mxu0 %v3416
        %3581 = vmatprep.subr.mxu0 0.0
        %3582 = vmatpush1.msra.mxu0 %v3417
        %3583 = vmatprep.subr.mxu0 0.0
        %3584 = vmatpush1.msra.mxu0 %v3418
        %3585 = vmatprep.subr.mxu0 0.0
        %3586 = vmatpush1.msra.mxu0 %v3419
        %3587 = vmatprep.subr.mxu0 0.0
        %3588 = vmatpush1.msra.mxu0 %v3420
        %3589 = vmatprep.subr.mxu0 0.0
        %3590 = vmatpush1.msra.mxu0 %v3421
        %3591 = vmatprep.subr.mxu0 0.0
        %3592 = vmatpush1.msra.mxu0 %v3422
        %3593 = vmatprep.subr.mxu0 0.0
        %3594 = vmatpush1.msra.mxu0 %v3423
        %3595 = vmatprep.subr.mxu0 0.0
        %3596 = vmatpush1.msra.mxu0 %v3424
        %3597 = vmatprep.subr.mxu0 0.0
        %3598 = vmatpush1.msra.mxu0 %v3425
        %3599 = vmatprep.subr.mxu0 0.0
        %3600 = vmatpush1.msra.mxu0 %v3426
        %3601 = vmatprep.subr.mxu0 0.0
        %3602 = vmatpush1.msra.mxu0 %v3427
        %3603 = vmatprep.subr.mxu0 0.0
        %3604 = vmatpush1.msra.mxu0 %v3428
        %3605 = vmatprep.subr.mxu0 0.0
        %3606 = vmatpush1.msra.mxu0 %v3429
        %3607 = vmatprep.subr.mxu0 0.0
        %3608 = vmatpush1.msra.mxu0 %v3430
        %3609 = vmatprep.subr.mxu0 0.0
        %3610 = vmatpush1.msra.mxu0 %v3431
        %3611 = vmatprep.subr.mxu0 0.0
        %3612 = vmatpush1.msra.mxu0 %v3432
        %3613 = vmatprep.subr.mxu0 0.0
        %3614 = vmatpush1.msra.mxu0 %v3433
        %3615 = vmatprep.subr.mxu0 0.0
        %3616 = vmatpush1.msra.mxu0 %v3434
        %3617 = vmatprep.subr.mxu0 0.0
        %3618 = vmatpush1.msra.mxu0 %v3435
        %3619 = vmatprep.mubr.f32.mxu0 %v3333
        %3620 = vmatmul.mubr.f32.gmra.mrb[0].mxu0 %v3332
        %v3621 = vpop.f32.mrb[0].mxu0
        %v3622 = vadd.f32 %v3553, %v3621
        %v3623 = vpop.f32.mrb[0].mxu0
        %3624 = vmatprep.mubr.f32.mxu0 %v3342
        %3625 = vmatmul.mubr.f32.gmra.mrb[0].mxu0 %v3341
        %v3626 = vpop.f32.mrb[0].mxu0
        %v3627 = vadd.f32 %v3553, %v3626
        %v3628 = vpop.f32.mrb[0].mxu0
        %3629 = vmatprep.mubr.f32.mxu0 %v3351
        %3630 = vmatmul.mubr.f32.gmra.mrb[0].mxu0 %v3350
        %v3631 = vpop.f32.mrb[0].mxu0
        %v3632 = vadd.f32 %v3553, %v3631
        %v3633 = vpop.f32.mrb[0].mxu0
        %3634 = vmatprep.mubr.f32.mxu0 %v3360
        %3635 = vmatmul.mubr.f32.gmra.mrb[0].mxu0 %v3359
        %v3636 = vpop.f32.mrb[0].mxu0
        %v3637 = vadd.f32 %v3553, %v3636
        %v3638 = vpop.f32.mrb[0].mxu0
        %3639 = vmatprep.mubr.f32.mxu0 %v3369
        %3640 = vmatmul.mubr.f32.gmra.mrb[0].mxu0 %v3368
        %v3641 = vpop.f32.mrb[0].mxu0
        %v3642 = vadd.f32 %v3553, %v3641
        %v3643 = vpop.f32.mrb[0].mxu0
        %3644 = vmatprep.mubr.f32.mxu0 %v3378
        %3645 = vmatmul.mubr.f32.gmra.mrb[0].mxu0 %v3377
        %v3646 = vpop.f32.mrb[0].mxu0
        %v3647 = vadd.f32 %v3553, %v3646
        %v3648 = vpop.f32.mrb[0].mxu0
        %3649 = vmatprep.mubr.f32.mxu0 %v3387
        %3650 = vmatmul.mubr.f32.gmra.mrb[0].mxu0 %v3386
        %v3651 = vpop.f32.mrb[0].mxu0
        %v3652 = vadd.f32 %v3553, %v3651
        %v3653 = vpop.f32.mrb[0].mxu0
        %3654 = vmatprep.mubr.f32.mxu0 %v3396
        %3655 = vmatmul.mubr.f32.gmra.mrb[0].mxu0 %v3395
        %v3656 = vpop.f32.mrb[0].mxu0
        %v3657 = vadd.f32 %v3553, %v3656
        %v3658 = vpop.f32.mrb[0].mxu0
        %3659 = vdwg.mxu0
        %3660 = vmatprep.subr.mxu0 0.0
        %3661 = vmatpush1.msra.mxu0 %v3436
        %3662 = vmatprep.subr.mxu0 0.0
        %3663 = vmatpush1.msra.mxu0 %v3437
        %3664 = vmatprep.subr.mxu0 0.0
        %3665 = vmatpush1.msra.mxu0 %v3438
        %3666 = vmatprep.subr.mxu0 0.0
        %3667 = vmatpush1.msra.mxu0 %v3439
        %3668 = vmatprep.subr.mxu0 0.0
        %3669 = vmatpush1.msra.mxu0 %v3440
        %3670 = vmatprep.subr.mxu0 0.0
        %3671 = vmatpush1.msra.mxu0 %v3441
        %3672 = vmatprep.subr.mxu0 0.0
        %3673 = vmatpush1.msra.mxu0 %v3442
        %3674 = vmatprep.subr.mxu0 0.0
        %3675 = vmatpush1.msra.mxu0 %v3443
        %3676 = vmatprep.subr.mxu0 0.0
        %3677 = vmatpush1.msra.mxu0 %v3444
        %3678 = vmatprep.subr.mxu0 0.0
        %3679 = vmatpush1.msra.mxu0 %v3445
        %3680 = vmatprep.subr.mxu0 0.0
        %3681 = vmatpush1.msra.mxu0 %v3446
        %3682 = vmatprep.subr.mxu0 0.0
        %3683 = vmatpush1.msra.mxu0 %v3447
        %3684 = vmatprep.subr.mxu0 0.0
        %3685 = vmatpush1.msra.mxu0 %v3448
        %3686 = vmatprep.subr.mxu0 0.0
        %3687 = vmatpush1.msra.mxu0 %v3449
        %3688 = vmatprep.subr.mxu0 0.0
        %3689 = vmatpush1.msra.mxu0 %v3450
        %3690 = vmatprep.subr.mxu0 0.0
        %3691 = vmatpush1.msra.mxu0 %v3451
        %3692 = vmatprep.subr.mxu0 0.0
        %3693 = vmatpush1.msra.mxu0 %v3452
        %3694 = vmatprep.subr.mxu0 0.0
        %3695 = vmatpush1.msra.mxu0 %v3453
        %3696 = vmatprep.subr.mxu0 0.0
        %3697 = vmatpush1.msra.mxu0 %v3454
        %3698 = vmatprep.subr.mxu0 0.0
        %3699 = vmatpush1.msra.mxu0 %v3455
        %3700 = vmatprep.subr.mxu0 0.0
        %3701 = vmatpush1.msra.mxu0 %v3456
        %3702 = vmatprep.subr.mxu0 0.0
        %3703 = vmatpush1.msra.mxu0 %v3457
        %3704 = vmatprep.subr.mxu0 0.0
        %3705 = vmatpush1.msra.mxu0 %v3458
        %3706 = vmatprep.subr.mxu0 0.0
        %3707 = vmatpush1.msra.mxu0 %v3459
        %3708 = vmatprep.subr.mxu0 0.0
        %3709 = vmatpush1.msra.mxu0 %v3460
        %3710 = vmatprep.subr.mxu0 0.0
        %3711 = vmatpush1.msra.mxu0 %v3461
        %3712 = vmatprep.subr.mxu0 0.0
        %3713 = vmatpush1.msra.mxu0 %v3462
        %3714 = vmatprep.subr.mxu0 0.0
        %3715 = vmatpush1.msra.mxu0 %v3463
        %3716 = vmatprep.subr.mxu0 0.0
        %3717 = vmatpush1.msra.mxu0 %v3464
        %3718 = vmatprep.subr.mxu0 0.0
        %3719 = vmatpush1.msra.mxu0 %v3465
        %3720 = vmatprep.subr.mxu0 0.0
        %3721 = vmatpush1.msra.mxu0 %v3466
        %3722 = vmatprep.subr.mxu0 0.0
        %3723 = vmatpush1.msra.mxu0 %v3467
        %3724 = vmatprep.mubr.f32.mxu0 %v3335
        %3725 = vmatmul.mubr.f32.gmra.mrb[0].mxu0 %v3334
        %v3726 = vpop.f32.mrb[0].mxu0
        %v3727 = vadd.f32 %v3622, %v3726
        %v3728 = vpop.f32.mrb[0].mxu0
        %3729 = vmatprep.mubr.f32.mxu0 %v3344
        %3730 = vmatmul.mubr.f32.gmra.mrb[0].mxu0 %v3343
        %v3731 = vpop.f32.mrb[0].mxu0
        %v3732 = vadd.f32 %v3627, %v3731
        %v3733 = vpop.f32.mrb[0].mxu0
        %3734 = vmatprep.mubr.f32.mxu0 %v3353
        %3735 = vmatmul.mubr.f32.gmra.mrb[0].mxu0 %v3352
        %v3736 = vpop.f32.mrb[0].mxu0
        %v3737 = vadd.f32 %v3632, %v3736
        %v3738 = vpop.f32.mrb[0].mxu0
        %3739 = vmatprep.mubr.f32.mxu0 %v3362
        %3740 = vmatmul.mubr.f32.gmra.mrb[0].mxu0 %v3361
        %v3741 = vpop.f32.mrb[0].mxu0
        %v3742 = vadd.f32 %v3637, %v3741
        %v3743 = vpop.f32.mrb[0].mxu0
        %3744 = vmatprep.mubr.f32.mxu0 %v3371
        %3745 = vmatmul.mubr.f32.gmra.mrb[0].mxu0 %v3370
        %v3746 = vpop.f32.mrb[0].mxu0
        %v3747 = vadd.f32 %v3642, %v3746
        %v3748 = vpop.f32.mrb[0].mxu0
        %3749 = vmatprep.mubr.f32.mxu0 %v3380
        %3750 = vmatmul.mubr.f32.gmra.mrb[0].mxu0 %v3379
        %v3751 = vpop.f32.mrb[0].mxu0
        %v3752 = vadd.f32 %v3647, %v3751
        %v3753 = vpop.f32.mrb[0].mxu0
        %3754 = vmatprep.mubr.f32.mxu0 %v3389
        %3755 = vmatmul.mubr.f32.gmra.mrb[0].mxu0 %v3388
        %v3756 = vpop.f32.mrb[0].mxu0
        %v3757 = vadd.f32 %v3652, %v3756
        %v3758 = vpop.f32.mrb[0].mxu0
        %3759 = vmatprep.mubr.f32.mxu0 %v3398
        %3760 = vmatmul.mubr.f32.gmra.mrb[0].mxu0 %v3397
        %v3761 = vpop.f32.mrb[0].mxu0
        %v3762 = vadd.f32 %v3657, %v3761
        %v3763 = vpop.f32.mrb[0].mxu0
        %3764 = vdwg.mxu0
        %3765 = vmatprep.subr.mxu0 0.0
        %3766 = vmatpush1.msra.mxu0 %v3468
        %3767 = vmatprep.subr.mxu0 0.0
        %3768 = vmatpush1.msra.mxu0 %v3469
        %3769 = vmatprep.subr.mxu0 0.0
        %3770 = vmatpush1.msra.mxu0 %v3470
        %3771 = vmatprep.subr.mxu0 0.0
        %3772 = vmatpush1.msra.mxu0 %v3471
        %3773 = vmatprep.subr.mxu0 0.0
        %3774 = vmatpush1.msra.mxu0 %v3472
        %3775 = vmatprep.subr.mxu0 0.0
        %3776 = vmatpush1.msra.mxu0 %v3473
        %3777 = vmatprep.subr.mxu0 0.0
        %3778 = vmatpush1.msra.mxu0 %v3474
        %3779 = vmatprep.subr.mxu0 0.0
        %3780 = vmatpush1.msra.mxu0 %v3475
        %3781 = vmatprep.subr.mxu0 0.0
        %3782 = vmatpush1.msra.mxu0 %v3476
        %3783 = vmatprep.subr.mxu0 0.0
        %3784 = vmatpush1.msra.mxu0 %v3477
        %3785 = vmatprep.subr.mxu0 0.0
        %3786 = vmatpush1.msra.mxu0 %v3478
        %3787 = vmatprep.subr.mxu0 0.0
        %3788 = vmatpush1.msra.mxu0 %v3479
        %3789 = vmatprep.subr.mxu0 0.0
        %3790 = vmatpush1.msra.mxu0 %v3480
        %3791 = vmatprep.subr.mxu0 0.0
        %3792 = vmatpush1.msra.mxu0 %v3481
        %3793 = vmatprep.subr.mxu0 0.0
        %3794 = vmatpush1.msra.mxu0 %v3482
        %3795 = vmatprep.subr.mxu0 0.0
        %3796 = vmatpush1.msra.mxu0 %v3483
        %3797 = vmatprep.subr.mxu0 0.0
        %3798 = vmatpush1.msra.mxu0 %v3484
        %3799 = vmatprep.subr.mxu0 0.0
        %3800 = vmatpush1.msra.mxu0 %v3485
        %3801 = vmatprep.subr.mxu0 0.0
        %3802 = vmatpush1.msra.mxu0 %v3486
        %3803 = vmatprep.subr.mxu0 0.0
        %3804 = vmatpush1.msra.mxu0 %v3487
        %3805 = vmatprep.subr.mxu0 0.0
        %3806 = vmatpush1.msra.mxu0 %v3488
        %3807 = vmatprep.subr.mxu0 0.0
        %3808 = vmatpush1.msra.mxu0 %v3489
        %3809 = vmatprep.subr.mxu0 0.0
        %3810 = vmatpush1.msra.mxu0 %v3490
        %3811 = vmatprep.subr.mxu0 0.0
        %3812 = vmatpush1.msra.mxu0 %v3491
        %3813 = vmatprep.subr.mxu0 0.0
        %3814 = vmatpush1.msra.mxu0 %v3492
        %3815 = vmatprep.subr.mxu0 0.0
        %3816 = vmatpush1.msra.mxu0 %v3493
        %3817 = vmatprep.subr.mxu0 0.0
        %3818 = vmatpush1.msra.mxu0 %v3494
        %3819 = vmatprep.subr.mxu0 0.0
        %3820 = vmatpush1.msra.mxu0 %v3495
        %3821 = vmatprep.subr.mxu0 0.0
        %3822 = vmatpush1.msra.mxu0 %v3496
        %3823 = vmatprep.subr.mxu0 0.0
        %3824 = vmatpush1.msra.mxu0 %v3497
        %3825 = vmatprep.subr.mxu0 0.0
        %3826 = vmatpush1.msra.mxu0 %v3498
        %3827 = vmatprep.subr.mxu0 0.0
        %3828 = vmatpush1.msra.mxu0 %v3499
        %3829 = vmatprep.mubr.f32.mxu0 %v3337
        %3830 = vmatmul.mubr.f32.gmra.mrb[0].mxu0 %v3336
        %v3831 = vpop.f32.mrb[0].mxu0
        %v3832 = vadd.f32 %v3727, %v3831
        %v3833 = vpop.f32.mrb[0].mxu0
        %3834 = vmatprep.mubr.f32.mxu0 %v3346
        %3835 = vmatmul.mubr.f32.gmra.mrb[0].mxu0 %v3345
        %v3836 = vpop.f32.mrb[0].mxu0
        %v3837 = vadd.f32 %v3732, %v3836
        %v3838 = vpop.f32.mrb[0].mxu0
        %3839 = vmatprep.mubr.f32.mxu0 %v3355
        %3840 = vmatmul.mubr.f32.gmra.mrb[0].mxu0 %v3354
        %v3841 = vpop.f32.mrb[0].mxu0
        %v3842 = vadd.f32 %v3737, %v3841
        %v3843 = vpop.f32.mrb[0].mxu0
        %3844 = vmatprep.mubr.f32.mxu0 %v3364
        %3845 = vmatmul.mubr.f32.gmra.mrb[0].mxu0 %v3363
        %v3846 = vpop.f32.mrb[0].mxu0
        %v3847 = vadd.f32 %v3742, %v3846
        %v3848 = vpop.f32.mrb[0].mxu0
        %3849 = vmatprep.mubr.f32.mxu0 %v3373
        %3850 = vmatmul.mubr.f32.gmra.mrb[0].mxu0 %v3372
        %v3851 = vpop.f32.mrb[0].mxu0
        %v3852 = vadd.f32 %v3747, %v3851
        %v3853 = vpop.f32.mrb[0].mxu0
        %3854 = vmatprep.mubr.f32.mxu0 %v3382
        %3855 = vmatmul.mubr.f32.gmra.mrb[0].mxu0 %v3381
        %v3856 = vpop.f32.mrb[0].mxu0
        %v3857 = vadd.f32 %v3752, %v3856
        %v3858 = vpop.f32.mrb[0].mxu0
        %3859 = vmatprep.mubr.f32.mxu0 %v3391
        %3860 = vmatmul.mubr.f32.gmra.mrb[0].mxu0 %v3390
        %v3861 = vpop.f32.mrb[0].mxu0
        %v3862 = vadd.f32 %v3757, %v3861
        %v3863 = vpop.f32.mrb[0].mxu0
        %3864 = vmatprep.mubr.f32.mxu0 %v3400
        %3865 = vmatmul.mubr.f32.gmra.mrb[0].mxu0 %v3399
        %v3866 = vpop.f32.mrb[0].mxu0
        %v3867 = vadd.f32 %v3762, %v3866
        %v3868 = vpop.f32.mrb[0].mxu0
        %3869 = vdwg.mxu0
        %3870 = vmatprep.subr.mxu0 0.0
        %3871 = vmatpush1.msra.mxu0 %v3500
        %3872 = vmatprep.subr.mxu0 0.0
        %3873 = vmatpush1.msra.mxu0 %v3501
        %3874 = vmatprep.subr.mxu0 0.0
        %3875 = vmatpush1.msra.mxu0 %v3502
        %3876 = vmatprep.subr.mxu0 0.0
        %3877 = vmatpush1.msra.mxu0 %v3503
        %3878 = vmatprep.subr.mxu0 0.0
        %3879 = vmatpush1.msra.mxu0 %v3504
        %3880 = vmatprep.subr.mxu0 0.0
        %3881 = vmatpush1.msra.mxu0 %v3505
        %3882 = vmatprep.subr.mxu0 0.0
        %3883 = vmatpush1.msra.mxu0 %v3506
        %3884 = vmatprep.subr.mxu0 0.0
        %3885 = vmatpush1.msra.mxu0 %v3507
        %3886 = vmatprep.subr.mxu0 0.0
        %3887 = vmatpush1.msra.mxu0 %v3508
        %3888 = vmatprep.subr.mxu0 0.0
        %3889 = vmatpush1.msra.mxu0 %v3509
        %3890 = vmatprep.subr.mxu0 0.0
        %3891 = vmatpush1.msra.mxu0 %v3510
        %3892 = vmatprep.subr.mxu0 0.0
        %3893 = vmatpush1.msra.mxu0 %v3511
        %3894 = vmatprep.subr.mxu0 0.0
        %3895 = vmatpush1.msra.mxu0 %v3512
        %3896 = vmatprep.subr.mxu0 0.0
        %3897 = vmatpush1.msra.mxu0 %v3513
        %3898 = vmatprep.subr.mxu0 0.0
        %3899 = vmatpush1.msra.mxu0 %v3514
        %3900 = vmatprep.subr.mxu0 0.0
        %3901 = vmatpush1.msra.mxu0 %v3515
        %3902 = vmatprep.subr.mxu0 0.0
        %3903 = vmatpush1.msra.mxu0 %v3516
        %3904 = vmatprep.subr.mxu0 0.0
        %3905 = vmatpush1.msra.mxu0 %v3517
        %3906 = vmatprep.subr.mxu0 0.0
        %3907 = vmatpush1.msra.mxu0 %v3518
        %3908 = vmatprep.subr.mxu0 0.0
        %3909 = vmatpush1.msra.mxu0 %v3519
        %3910 = vmatprep.subr.mxu0 0.0
        %3911 = vmatpush1.msra.mxu0 %v3520
        %3912 = vmatprep.subr.mxu0 0.0
        %3913 = vmatpush1.msra.mxu0 %v3521
        %3914 = vmatprep.subr.mxu0 0.0
        %3915 = vmatpush1.msra.mxu0 %v3522
        %3916 = vmatprep.subr.mxu0 0.0
        %3917 = vmatpush1.msra.mxu0 %v3523
        %3918 = vmatprep.subr.mxu0 0.0
        %3919 = vmatpush1.msra.mxu0 %v3524
        %3920 = vmatprep.subr.mxu0 0.0
        %3921 = vmatpush1.msra.mxu0 %v3525
        %3922 = vmatprep.subr.mxu0 0.0
        %3923 = vmatpush1.msra.mxu0 %v3526
        %3924 = vmatprep.subr.mxu0 0.0
        %3925 = vmatpush1.msra.mxu0 %v3527
        %3926 = vmatprep.subr.mxu0 0.0
        %3927 = vmatpush1.msra.mxu0 %v3528
        %3928 = vmatprep.subr.mxu0 0.0
        %3929 = vmatpush1.msra.mxu0 %v3529
        %3930 = vmatprep.subr.mxu0 0.0
        %3931 = vmatpush1.msra.mxu0 %v3530
        %3932 = vmatprep.subr.mxu0 0.0
        %3933 = vmatpush1.msra.mxu0 %v3531
        %3934 = vmatprep.mubr.f32.mxu0 %v3339
        %3935 = vmatmul.mubr.f32.gmra.mrb[0].mxu0 %v3338
        %v3936 = vpop.f32.mrb[0].mxu0
        %v3937 = vadd.f32 %v3832, %v3936
        %v3938 = vpop.f32.mrb[0].mxu0
        %3939 = vmatprep.mubr.f32.mxu0 %v3348
        %3940 = vmatmul.mubr.f32.gmra.mrb[0].mxu0 %v3347
        %v3941 = vpop.f32.mrb[0].mxu0
        %v3942 = vadd.f32 %v3837, %v3941
        %v3943 = vpop.f32.mrb[0].mxu0
        %3944 = vmatprep.mubr.f32.mxu0 %v3357
        %3945 = vmatmul.mubr.f32.gmra.mrb[0].mxu0 %v3356
        %v3946 = vpop.f32.mrb[0].mxu0
        %v3947 = vadd.f32 %v3842, %v3946
        %v3948 = vpop.f32.mrb[0].mxu0
        %3949 = vmatprep.mubr.f32.mxu0 %v3366
        %3950 = vmatmul.mubr.f32.gmra.mrb[0].mxu0 %v3365
        %v3951 = vpop.f32.mrb[0].mxu0
        %v3952 = vadd.f32 %v3847, %v3951
        %v3953 = vpop.f32.mrb[0].mxu0
        %3954 = vmatprep.mubr.f32.mxu0 %v3375
        %3955 = vmatmul.mubr.f32.gmra.mrb[0].mxu0 %v3374
        %v3956 = vpop.f32.mrb[0].mxu0
        %v3957 = vadd.f32 %v3852, %v3956
        %v3958 = vpop.f32.mrb[0].mxu0
        %3959 = vmatprep.mubr.f32.mxu0 %v3384
        %3960 = vmatmul.mubr.f32.gmra.mrb[0].mxu0 %v3383
        %v3961 = vpop.f32.mrb[0].mxu0
        %v3962 = vadd.f32 %v3857, %v3961
        %v3963 = vpop.f32.mrb[0].mxu0
        %3964 = vmatprep.mubr.f32.mxu0 %v3393
        %3965 = vmatmul.mubr.f32.gmra.mrb[0].mxu0 %v3392
        %v3966 = vpop.f32.mrb[0].mxu0
        %v3967 = vadd.f32 %v3862, %v3966
        %v3968 = vpop.f32.mrb[0].mxu0
        %3969 = vmatprep.mubr.f32.mxu0 %v3402
        %3970 = vmatmul.mubr.f32.gmra.mrb[0].mxu0 %v3401
        %v3971 = vpop.f32.mrb[0].mxu0
        %v3972 = vadd.f32 %v3867, %v3971
        %v3973 = vpop.f32.mrb[0].mxu0
        %3974 = vdwg.mxu0
        %3975 = vmatprep.subr.mxu0 0.0
        %3976 = vmatpush1.msra.mxu0 %v3532
        %3977 = vmatprep.subr.mxu0 0.0
        %3978 = vmatpush1.msra.mxu0 %v3533
        %3979 = vmatprep.subr.mxu0 0.0
        %3980 = vmatpush1.msra.mxu0 %v3534
        %3981 = vmatprep.subr.mxu0 0.0
        %3982 = vmatpush1.msra.mxu0 %v3535
        %3983 = vmatprep.subr.mxu0 0.0
        %3984 = vmatpush1.msra.mxu0 %v3536
        %3985 = vmatprep.subr.mxu0 0.0
        %3986 = vmatpush1.msra.mxu0 %v3537
        %3987 = vmatprep.subr.mxu0 0.0
        %3988 = vmatpush1.msra.mxu0 %v3538
        %3989 = vmatprep.subr.mxu0 0.0
        %3990 = vmatpush1.msra.mxu0 %v3539
        %3991 = vmatprep.subr.mxu0 0.0
        %3992 = vmatpush1.msra.mxu0 %v3540
        %3993 = vmatprep.subr.mxu0 0.0
        %3994 = vmatpush1.msra.mxu0 %v3541
        %3995 = vmatprep.subr.mxu0 0.0
        %3996 = vmatpush1.msra.mxu0 %v3542
        %3997 = vmatprep.subr.mxu0 0.0
        %3998 = vmatpush1.msra.mxu0 %v3543
        %3999 = vmatprep.subr.mxu0 0.0
        %4000 = vmatpush1.msra.mxu0 %v3544
        %4001 = vmatprep.subr.mxu0 0.0
        %4002 = vmatpush1.msra.mxu0 %v3545
        %4003 = vmatprep.subr.mxu0 0.0
        %4004 = vmatpush1.msra.mxu0 %v3546
        %4005 = vmatprep.subr.mxu0 0.0
        %4006 = vmatpush1.msra.mxu0 %v3547
        %4007 = vmatprep.subr.mxu0 0.0
        %4008 = vmatpush1.msra.mxu0 0.0
        %4009 = vmatprep.subr.mxu0 0.0
        %4010 = vmatpush1.msra.mxu0 0.0
        %4011 = vmatprep.subr.mxu0 0.0
        %4012 = vmatpush1.msra.mxu0 0.0
        %4013 = vmatprep.subr.mxu0 0.0
        %4014 = vmatpush1.msra.mxu0 0.0
        %4015 = vmatprep.subr.mxu0 0.0
        %4016 = vmatpush1.msra.mxu0 0.0
        %4017 = vmatprep.subr.mxu0 0.0
        %4018 = vmatpush1.msra.mxu0 0.0
        %4019 = vmatprep.subr.mxu0 0.0
        %4020 = vmatpush1.msra.mxu0 0.0
        %4021 = vmatprep.subr.mxu0 0.0
        %4022 = vmatpush1.msra.mxu0 0.0
        %4023 = vmatprep.subr.mxu0 0.0
        %4024 = vmatpush1.msra.mxu0 0.0
        %4025 = vmatprep.subr.mxu0 0.0
        %4026 = vmatpush1.msra.mxu0 0.0
        %4027 = vmatprep.subr.mxu0 0.0
        %4028 = vmatpush1.msra.mxu0 0.0
        %4029 = vmatprep.subr.mxu0 0.0
        %4030 = vmatpush1.msra.mxu0 0.0
        %4031 = vmatprep.subr.mxu0 0.0
        %4032 = vmatpush1.msra.mxu0 0.0
        %4033 = vmatprep.subr.mxu0 0.0
        %4034 = vmatpush1.msra.mxu0 0.0
        %4035 = vmatprep.subr.mxu0 0.0
        %4036 = vmatpush1.msra.mxu0 0.0
        %4037 = vmatprep.subr.mxu0 0.0
        %4038 = vmatpush1.msra.mxu0 0.0
        %4039 = vmatprep.mubr.f32.mxu0 0.0
        %4040 = vmatmul.mubr.f32.gmra.mrb[0].mxu0 %v3340
        %v4041 = vpop.f32.mrb[0].mxu0
        %v4042 = vadd.f32 %v3937, %v4041
        %v4043 = vpop.f32.mrb[0].mxu0
        %4044 = vmatprep.mubr.f32.mxu0 0.0
        %4045 = vmatmul.mubr.f32.gmra.mrb[0].mxu0 %v3349
        %v4046 = vpop.f32.mrb[0].mxu0
        %v4047 = vadd.f32 %v3942, %v4046
        %v4048 = vpop.f32.mrb[0].mxu0
        %4049 = vmatprep.mubr.f32.mxu0 0.0
        %4050 = vmatmul.mubr.f32.gmra.mrb[0].mxu0 %v3358
        %v4051 = vpop.f32.mrb[0].mxu0
        %v4052 = vadd.f32 %v3947, %v4051
        %v4053 = vpop.f32.mrb[0].mxu0
        %4054 = vmatprep.mubr.f32.mxu0 0.0
        %4055 = vmatmul.mubr.f32.gmra.mrb[0].mxu0 %v3367
        %v4056 = vpop.f32.mrb[0].mxu0
        %v4057 = vadd.f32 %v3952, %v4056
        %v4058 = vpop.f32.mrb[0].mxu0
        %4059 = vmatprep.mubr.f32.mxu0 0.0
        %4060 = vmatmul.mubr.f32.gmra.mrb[0].mxu0 %v3376
        %v4061 = vpop.f32.mrb[0].mxu0
        %v4062 = vadd.f32 %v3957, %v4061
        %v4063 = vpop.f32.mrb[0].mxu0
        %4064 = vmatprep.mubr.f32.mxu0 0.0
        %4065 = vmatmul.mubr.f32.gmra.mrb[0].mxu0 %v3385
        %v4066 = vpop.f32.mrb[0].mxu0
        %v4067 = vadd.f32 %v3962, %v4066
        %v4068 = vpop.f32.mrb[0].mxu0
        %4069 = vmatprep.mubr.f32.mxu0 0.0
        %4070 = vmatmul.mubr.f32.gmra.mrb[0].mxu0 %v3394
        %v4071 = vpop.f32.mrb[0].mxu0
        %v4072 = vadd.f32 %v3967, %v4071
        %v4073 = vpop.f32.mrb[0].mxu0
        %4074 = vmatprep.mubr.f32.mxu0 0.0
        %4075 = vmatmul.mubr.f32.gmra.mrb[0].mxu0 %v3403
        %v4076 = vpop.f32.mrb[0].mxu0
        %v4077 = vadd.f32 %v3972, %v4076
        %v4078 = vpop.f32.mrb[0].mxu0
        %4079 = vdwg.mxu0
        %v4080 = vmax.f32 %v4042, 0.0
        %v4081 = vmax.f32 %v4047, 0.0
        %v4082 = vmax.f32 %v4052, 0.0
        %v4083 = vmax.f32 %v4057, 0.0
        %v4084 = vmax.f32 %v4062, 0.0
        %v4085 = vmax.f32 %v4067, 0.0
        %v4086 = vmax.f32 %v4072, 0.0
        %v4087 = vmax.f32 %v4077, 0.0
        %v4089 = vunpack.c.l.s4 1966171168
        %v4090 = vunpack.c.0.s8 %v4089
        %v4091 = vlaneseq
        %v4092 = vshrl.u32 %v4091, 7
        %v4093 = vsub.s32 %v4090, %v4092
        %v4094 = vrot.slane %v4080, %v4093
        %v4096 = vunpack.c.l.s4 1966171168
        %v4097 = vunpack.c.0.s8 %v4096
        %v4098 = vlaneseq
        %v4099 = vshrl.u32 %v4098, 7
        %v4100 = vsub.s32 %v4097, %v4099
        %v4101 = vrot.slane %v4081, %v4100
        %v4103 = vunpack.c.l.s4 1966171168
        %v4104 = vunpack.c.0.s8 %v4103
        %v4105 = vlaneseq
        %v4106 = vshrl.u32 %v4105, 7
        %v4107 = vsub.s32 %v4104, %v4106
        %v4108 = vrot.slane %v4082, %v4107
        %v4110 = vunpack.c.l.s4 1966171168
        %v4111 = vunpack.c.0.s8 %v4110
        %v4112 = vlaneseq
        %v4113 = vshrl.u32 %v4112, 7
        %v4114 = vsub.s32 %v4111, %v4113
        %v4115 = vrot.slane %v4083, %v4114
        %v4117 = vunpack.c.l.s4 1966171168
        %v4118 = vunpack.c.0.s8 %v4117
        %v4119 = vlaneseq
        %v4120 = vshrl.u32 %v4119, 7
        %v4121 = vsub.s32 %v4118, %v4120
        %v4122 = vrot.slane %v4084, %v4121
        %v4124 = vunpack.c.l.s4 1966171168
        %v4125 = vunpack.c.0.s8 %v4124
        %v4126 = vlaneseq
        %v4127 = vshrl.u32 %v4126, 7
        %v4128 = vsub.s32 %v4125, %v4127
        %v4129 = vrot.slane %v4085, %v4128
        %v4131 = vunpack.c.l.s4 1966171168
        %v4132 = vunpack.c.0.s8 %v4131
        %v4133 = vlaneseq
        %v4134 = vshrl.u32 %v4133, 7
        %v4135 = vsub.s32 %v4132, %v4134
        %v4136 = vrot.slane %v4086, %v4135
        %v4138 = vunpack.c.l.s4 1966171168
        %v4139 = vunpack.c.0.s8 %v4138
        %v4140 = vlaneseq
        %v4141 = vshrl.u32 %v4140, 7
        %v4142 = vsub.s32 %v4139, %v4141
        %v4143 = vrot.slane %v4087, %v4142
        %v4152 = vrot.slane %v4094, 4
        %v4153 = vrot.slane %v4101, 4
        %v4154 = vrot.slane %v4108, 4
        %v4155 = vrot.slane %v4115, 4
        %v4156 = vrot.slane %v4122, 4
        %v4157 = vrot.slane %v4129, 4
        %v4158 = vrot.slane %v4136, 4
        %v4159 = vrot.slane %v4143, 4
        %v4168 = vadd.f32 %v4094, %v4152
        %v4169 = vadd.f32 %v4101, %v4153
        %v4170 = vadd.f32 %v4108, %v4154
        %v4171 = vadd.f32 %v4115, %v4155
        %v4172 = vadd.f32 %v4122, %v4156
        %v4173 = vadd.f32 %v4129, %v4157
        %v4174 = vadd.f32 %v4136, %v4158
        %v4175 = vadd.f32 %v4143, %v4159
        %v4176 = vadd.f32 %v4168, %v4169
        %v4177 = vadd.f32 %v4170, %v4171
        %v4178 = vadd.f32 %v4172, %v4173
        %v4179 = vadd.f32 %v4174, %v4175
        %v4180 = vld [vmem:[%s7] sm:$0x1]
        %v4182 = vlaneseq
        %v4183 = vshrl.u32 %v4182, 7
        %v4184 = vsub.s32 0, %v4183
        %v4185 = vrot.slane %v4180, %v4184
        %v4187 = vmul.f32 %v4176, %v4185
        %v4188 = vmul.f32 %v4177, %v4185
        %v4189 = vmul.f32 %v4178, %v4185
        %v4190 = vmul.f32 %v4179, %v4185
        %v4191 = vld [vmem:[%s8] sm:$0x1]
        %v4193 = vlaneseq
        %v4194 = vshrl.u32 %v4193, 7
        %v4195 = vsub.s32 0, %v4194
        %v4196 = vrot.slane %v4191, %v4195
        %v4198 = vadd.f32 %v4187, %v4196
        %v4199 = vadd.f32 %v4188, %v4196
        %v4200 = vadd.f32 %v4189, %v4196
        %v4201 = vadd.f32 %v4190, %v4196
        %4202 = vst [vmem:[#allocation6] sm:$0x3f] 0.0
        %4203 = vst [vmem:[#allocation6 + $0x8] sm:$0x3f] 0.0
        %4204 = vst [vmem:[#allocation6 + $0x10] sm:$0x3f] 0.0
        %4205 = vst [vmem:[#allocation6 + $0x18] sm:$0x3f] 0.0
        %4206 = vst [vmem:[#allocation6 + $0x20] sm:$0x3f] 0.0
        %4207 = vst [vmem:[#allocation6 + $0x28] sm:$0x3f] 0.0
        %s4208 = scalar_lea.vmem [#allocation6], 8
        %4209 = vst [vmem:[%s4208 + $0x1] sm:$0xf] %v4198
        %4210 = vst [vmem:[%s4208 + $0x9] sm:$0xf] %v4199
        %4211 = vst [vmem:[%s4208 + $0x11] sm:$0xf] %v4200
        %4212 = vst [vmem:[%s4208 + $0x19] sm:$0xf] %v4201
        %v4213 = vld [vmem:[#allocation6] sm:$0xf]
        %v4214 = vld [vmem:[#allocation6 + $0x8] sm:$0xf]
        %v4215 = vld [vmem:[#allocation6 + $0x10] sm:$0xf]
        %v4216 = vld [vmem:[#allocation6 + $0x18] sm:$0xf]
        %4217 = vst [vmem:[#allocation7] sm:$0xf] %v4213
        %4218 = vst [vmem:[#allocation7 + $0x24] sm:$0xf] %v4214
        %4219 = vst [vmem:[#allocation7 + $0x48] sm:$0xf] %v4215
        %4220 = vst [vmem:[#allocation7 + $0x6c] sm:$0xf] %v4216
        %v4221 = vld [vmem:[#allocation6 + $0x1] sm:$0xf]
        %v4222 = vld [vmem:[#allocation6 + $0x9] sm:$0xf]
        %v4223 = vld [vmem:[#allocation6 + $0x11] sm:$0xf]
        %v4224 = vld [vmem:[#allocation6 + $0x19] sm:$0xf]
        %4225 = vst [vmem:[#allocation7 + $0x4] sm:$0xf] %v4221
        %4226 = vst [vmem:[#allocation7 + $0x28] sm:$0xf] %v4222
        %4227 = vst [vmem:[#allocation7 + $0x4c] sm:$0xf] %v4223
        %4228 = vst [vmem:[#allocation7 + $0x70] sm:$0xf] %v4224
        %v4229 = vld [vmem:[#allocation6 + $0x2] sm:$0xf]
        %v4230 = vld [vmem:[#allocation6 + $0xa] sm:$0xf]
        %v4231 = vld [vmem:[#allocation6 + $0x12] sm:$0xf]
        %v4232 = vld [vmem:[#allocation6 + $0x1a] sm:$0xf]
        %4233 = vst [vmem:[#allocation7 + $0x8] sm:$0xf] %v4229
        %4234 = vst [vmem:[#allocation7 + $0x2c] sm:$0xf] %v4230
        %4235 = vst [vmem:[#allocation7 + $0x50] sm:$0xf] %v4231
        %4236 = vst [vmem:[#allocation7 + $0x74] sm:$0xf] %v4232
        %v4237 = vld [vmem:[%s4208] sm:$0xf]
        %v4238 = vld [vmem:[%s4208 + $0x8] sm:$0xf]
        %v4239 = vld [vmem:[%s4208 + $0x10] sm:$0xf]
        %v4240 = vld [vmem:[%s4208 + $0x18] sm:$0xf]
        %4241 = vst [vmem:[#allocation7 + $0xc] sm:$0xf] %v4237
        %4242 = vst [vmem:[#allocation7 + $0x30] sm:$0xf] %v4238
        %4243 = vst [vmem:[#allocation7 + $0x54] sm:$0xf] %v4239
        %4244 = vst [vmem:[#allocation7 + $0x78] sm:$0xf] %v4240
        %v4245 = vld [vmem:[%s4208 + $0x1] sm:$0xf]
        %v4246 = vld [vmem:[%s4208 + $0x9] sm:$0xf]
        %v4247 = vld [vmem:[%s4208 + $0x11] sm:$0xf]
        %v4248 = vld [vmem:[%s4208 + $0x19] sm:$0xf]
        %4249 = vst [vmem:[#allocation7 + $0x10] sm:$0xf] %v4245
        %4250 = vst [vmem:[#allocation7 + $0x34] sm:$0xf] %v4246
        %4251 = vst [vmem:[#allocation7 + $0x58] sm:$0xf] %v4247
        %4252 = vst [vmem:[#allocation7 + $0x7c] sm:$0xf] %v4248
        %v4253 = vld [vmem:[%s4208 + $0x2] sm:$0xf]
        %v4254 = vld [vmem:[%s4208 + $0xa] sm:$0xf]
        %v4255 = vld [vmem:[%s4208 + $0x12] sm:$0xf]
        %v4256 = vld [vmem:[%s4208 + $0x1a] sm:$0xf]
        %4257 = vst [vmem:[#allocation7 + $0x14] sm:$0xf] %v4253
        %4258 = vst [vmem:[#allocation7 + $0x38] sm:$0xf] %v4254
        %4259 = vst [vmem:[#allocation7 + $0x5c] sm:$0xf] %v4255
        %4260 = vst [vmem:[#allocation7 + $0x80] sm:$0xf] %v4256
        %s4261 = scalar_lea.vmem [#allocation6], 16
        %v4262 = vld [vmem:[%s4261] sm:$0xf]
        %v4263 = vld [vmem:[%s4261 + $0x8] sm:$0xf]
        %v4264 = vld [vmem:[%s4261 + $0x10] sm:$0xf]
        %v4265 = vld [vmem:[%s4261 + $0x18] sm:$0xf]
        %4266 = vst [vmem:[#allocation7 + $0x18] sm:$0xf] %v4262
        %4267 = vst [vmem:[#allocation7 + $0x3c] sm:$0xf] %v4263
        %4268 = vst [vmem:[#allocation7 + $0x60] sm:$0xf] %v4264
        %4269 = vst [vmem:[#allocation7 + $0x84] sm:$0xf] %v4265
        %v4270 = vld [vmem:[%s4261 + $0x1] sm:$0xf]
        %v4271 = vld [vmem:[%s4261 + $0x9] sm:$0xf]
        %v4272 = vld [vmem:[%s4261 + $0x11] sm:$0xf]
        %v4273 = vld [vmem:[%s4261 + $0x19] sm:$0xf]
        %4274 = vst [vmem:[#allocation7 + $0x1c] sm:$0xf] %v4270
        %4275 = vst [vmem:[#allocation7 + $0x40] sm:$0xf] %v4271
        %4276 = vst [vmem:[#allocation7 + $0x64] sm:$0xf] %v4272
        %4277 = vst [vmem:[#allocation7 + $0x88] sm:$0xf] %v4273
        %v4278 = vld [vmem:[%s4261 + $0x2] sm:$0xf]
        %v4279 = vld [vmem:[%s4261 + $0xa] sm:$0xf]
        %v4280 = vld [vmem:[%s4261 + $0x12] sm:$0xf]
        %v4281 = vld [vmem:[%s4261 + $0x1a] sm:$0xf]
        %4282 = vst [vmem:[#allocation7 + $0x20] sm:$0xf] %v4278
        %4283 = vst [vmem:[#allocation7 + $0x44] sm:$0xf] %v4279
        %4284 = vst [vmem:[#allocation7 + $0x68] sm:$0xf] %v4280
        %4285 = vst [vmem:[#allocation7 + $0x8c] sm:$0xf] %v4281
        %v4286 = vld [vmem:[#allocation7] sm:$0xff]
        %v4287 = vld [vmem:[#allocation7 + $0x8] sm:$0xff]
        %v4288 = vld [vmem:[#allocation7 + $0x10] sm:$0xff]
        %v4289 = vld [vmem:[#allocation7 + $0x18] sm:$0xff]
        %v4290 = vld [vmem:[#allocation7 + $0x20] sm:$0xf]
        %v4291 = vld [vmem:[#allocation7 + $0x24] sm:$0xff]
        %v4292 = vld [vmem:[#allocation7 + $0x2c] sm:$0xff]
        %v4293 = vld [vmem:[#allocation7 + $0x34] sm:$0xff]
        %v4294 = vld [vmem:[#allocation7 + $0x3c] sm:$0xff]
        %v4295 = vld [vmem:[#allocation7 + $0x44] sm:$0xf]
        %v4296 = vld [vmem:[#allocation7 + $0x48] sm:$0xff]
        %v4297 = vld [vmem:[#allocation7 + $0x50] sm:$0xff]
        %v4298 = vld [vmem:[#allocation7 + $0x58] sm:$0xff]
        %v4299 = vld [vmem:[#allocation7 + $0x60] sm:$0xff]
        %v4300 = vld [vmem:[#allocation7 + $0x68] sm:$0xf]
        %v4301 = vld [vmem:[#allocation7 + $0x6c] sm:$0xff]
        %v4302 = vld [vmem:[#allocation7 + $0x74] sm:$0xff]
        %v4303 = vld [vmem:[#allocation7 + $0x7c] sm:$0xff]
        %v4304 = vld [vmem:[#allocation7 + $0x84] sm:$0xff]
        %v4305 = vld [vmem:[#allocation7 + $0x8c] sm:$0xf]
        %v4306 = vld [vmem:[#allocation11] sm:$0xff]
        %v4307 = vld [vmem:[#allocation11 + $0x8] sm:$0xff]
        %v4308 = vld [vmem:[#allocation11 + $0x10] sm:$0xff]
        %v4309 = vld [vmem:[#allocation11 + $0x18] sm:$0xff]
        %v4310 = vld [vmem:[#allocation11 + $0x20] sm:$0xff]
        %v4311 = vld [vmem:[#allocation11 + $0x28] sm:$0xff]
        %v4312 = vld [vmem:[#allocation11 + $0x30] sm:$0xff]
        %v4313 = vld [vmem:[#allocation11 + $0x38] sm:$0xff]
        %v4314 = vld [vmem:[#allocation11 + $0x40] sm:$0xff]
        %v4315 = vld [vmem:[#allocation11 + $0x48] sm:$0xff]
        %v4316 = vld [vmem:[#allocation11 + $0x50] sm:$0xff]
        %v4317 = vld [vmem:[#allocation11 + $0x58] sm:$0xff]
        %v4318 = vld [vmem:[#allocation11 + $0x60] sm:$0xff]
        %v4319 = vld [vmem:[#allocation11 + $0x68] sm:$0xff]
        %v4320 = vld [vmem:[#allocation11 + $0x70] sm:$0xff]
        %v4321 = vld [vmem:[#allocation11 + $0x78] sm:$0xff]
        %v4322 = vld [vmem:[#allocation11 + $0x80] sm:$0xff]
        %v4323 = vld [vmem:[#allocation11 + $0x88] sm:$0xff]
        %v4324 = vld [vmem:[#allocation11 + $0x90] sm:$0xff]
        %v4325 = vld [vmem:[#allocation11 + $0x98] sm:$0xff]
        %v4326 = vld [vmem:[#allocation11 + $0xa0] sm:$0xff]
        %v4327 = vld [vmem:[#allocation11 + $0xa8] sm:$0xff]
        %v4328 = vld [vmem:[#allocation11 + $0xb0] sm:$0xff]
        %v4329 = vld [vmem:[#allocation11 + $0xb8] sm:$0xff]
        %v4330 = vld [vmem:[#allocation11 + $0xc0] sm:$0xff]
        %v4331 = vld [vmem:[#allocation11 + $0xc8] sm:$0xff]
        %v4332 = vld [vmem:[#allocation11 + $0xd0] sm:$0xff]
        %v4333 = vld [vmem:[#allocation11 + $0xd8] sm:$0xff]
        %v4334 = vld [vmem:[#allocation11 + $0xe0] sm:$0xff]
        %v4335 = vld [vmem:[#allocation11 + $0xe8] sm:$0xff]
        %v4336 = vld [vmem:[#allocation11 + $0xf0] sm:$0xff]
        %v4337 = vld [vmem:[#allocation11 + $0xf8] sm:$0xff]
        %v4338 = vld [vmem:[#allocation11 + $0x100] sm:$0xff]
        %v4339 = vld [vmem:[#allocation11 + $0x108] sm:$0xff]
        %v4340 = vld [vmem:[#allocation11 + $0x110] sm:$0xff]
        %v4341 = vld [vmem:[#allocation11 + $0x118] sm:$0xff]
        %v4342 = vld [vmem:[#allocation11 + $0x120] sm:$0xff]
        %v4343 = vld [vmem:[#allocation11 + $0x128] sm:$0xff]
        %v4344 = vld [vmem:[#allocation11 + $0x130] sm:$0xff]
        %v4345 = vld [vmem:[#allocation11 + $0x138] sm:$0xff]
        %v4346 = vld [vmem:[#allocation11 + $0x140] sm:$0xff]
        %v4347 = vld [vmem:[#allocation11 + $0x148] sm:$0xff]
        %v4348 = vld [vmem:[#allocation11 + $0x150] sm:$0xff]
        %v4349 = vld [vmem:[#allocation11 + $0x158] sm:$0xff]
        %v4350 = vld [vmem:[#allocation11 + $0x160] sm:$0xff]
        %v4351 = vld [vmem:[#allocation11 + $0x168] sm:$0xff]
        %v4352 = vld [vmem:[#allocation11 + $0x170] sm:$0xff]
        %v4353 = vld [vmem:[#allocation11 + $0x178] sm:$0xff]
        %v4354 = vld [vmem:[#allocation11 + $0x180] sm:$0xff]
        %v4355 = vld [vmem:[#allocation11 + $0x188] sm:$0xff]
        %v4356 = vld [vmem:[#allocation11 + $0x190] sm:$0xff]
        %v4357 = vld [vmem:[#allocation11 + $0x198] sm:$0xff]
        %v4358 = vld [vmem:[#allocation11 + $0x1a0] sm:$0xff]
        %v4359 = vld [vmem:[#allocation11 + $0x1a8] sm:$0xff]
        %v4360 = vld [vmem:[#allocation11 + $0x1b0] sm:$0xff]
        %v4361 = vld [vmem:[#allocation11 + $0x1b8] sm:$0xff]
        %v4362 = vld [vmem:[#allocation11 + $0x1c0] sm:$0xff]
        %v4363 = vld [vmem:[#allocation11 + $0x1c8] sm:$0xff]
        %v4364 = vld [vmem:[#allocation11 + $0x1d0] sm:$0xff]
        %v4365 = vld [vmem:[#allocation11 + $0x1d8] sm:$0xff]
        %v4366 = vld [vmem:[#allocation11 + $0x1e0] sm:$0xff]
        %v4367 = vld [vmem:[#allocation11 + $0x1e8] sm:$0xff]
        %v4368 = vld [vmem:[#allocation11 + $0x1f0] sm:$0xff]
        %v4369 = vld [vmem:[#allocation11 + $0x1f8] sm:$0xff]
        %v4370 = vld [vmem:[#allocation11 + $0x200] sm:$0xff]
        %v4371 = vld [vmem:[#allocation11 + $0x208] sm:$0xff]
        %v4372 = vld [vmem:[#allocation11 + $0x210] sm:$0xff]
        %v4373 = vld [vmem:[#allocation11 + $0x218] sm:$0xff]
        %v4374 = vld [vmem:[#allocation11 + $0x220] sm:$0xff]
        %v4375 = vld [vmem:[#allocation11 + $0x228] sm:$0xff]
        %v4376 = vld [vmem:[#allocation11 + $0x230] sm:$0xff]
        %v4377 = vld [vmem:[#allocation11 + $0x238] sm:$0xff]
        %v4378 = vld [vmem:[#allocation11 + $0x240] sm:$0xff]
        %v4379 = vld [vmem:[#allocation11 + $0x248] sm:$0xff]
        %v4380 = vld [vmem:[#allocation11 + $0x250] sm:$0xff]
        %v4381 = vld [vmem:[#allocation11 + $0x258] sm:$0xff]
        %v4382 = vld [vmem:[#allocation11 + $0x260] sm:$0xff]
        %v4383 = vld [vmem:[#allocation11 + $0x268] sm:$0xff]
        %v4384 = vld [vmem:[#allocation11 + $0x270] sm:$0xff]
        %v4385 = vld [vmem:[#allocation11 + $0x278] sm:$0xff]
        %v4386 = vld [vmem:[#allocation11 + $0x280] sm:$0xff]
        %v4387 = vld [vmem:[#allocation11 + $0x288] sm:$0xff]
        %v4388 = vld [vmem:[#allocation11 + $0x290] sm:$0xff]
        %v4389 = vld [vmem:[#allocation11 + $0x298] sm:$0xff]
        %v4390 = vld [vmem:[#allocation11 + $0x2a0] sm:$0xff]
        %v4391 = vld [vmem:[#allocation11 + $0x2a8] sm:$0xff]
        %v4392 = vld [vmem:[#allocation11 + $0x2b0] sm:$0xff]
        %v4393 = vld [vmem:[#allocation11 + $0x2b8] sm:$0xff]
        %v4394 = vld [vmem:[#allocation11 + $0x2c0] sm:$0xff]
        %v4395 = vld [vmem:[#allocation11 + $0x2c8] sm:$0xff]
        %v4396 = vld [vmem:[#allocation11 + $0x2d0] sm:$0xff]
        %v4397 = vld [vmem:[#allocation11 + $0x2d8] sm:$0xff]
        %v4398 = vld [vmem:[#allocation11 + $0x2e0] sm:$0xff]
        %v4399 = vld [vmem:[#allocation11 + $0x2e8] sm:$0xff]
        %v4400 = vld [vmem:[#allocation11 + $0x2f0] sm:$0xff]
        %v4401 = vld [vmem:[#allocation11 + $0x2f8] sm:$0xff]
        %v4402 = vld [vmem:[#allocation11 + $0x300] sm:$0xff]
        %v4403 = vld [vmem:[#allocation11 + $0x308] sm:$0xff]
        %v4404 = vld [vmem:[#allocation11 + $0x310] sm:$0xff]
        %v4405 = vld [vmem:[#allocation11 + $0x318] sm:$0xff]
        %v4406 = vld [vmem:[#allocation11 + $0x320] sm:$0xff]
        %v4407 = vld [vmem:[#allocation11 + $0x328] sm:$0xff]
        %v4408 = vld [vmem:[#allocation11 + $0x330] sm:$0xff]
        %v4409 = vld [vmem:[#allocation11 + $0x338] sm:$0xff]
        %v4410 = vld [vmem:[#allocation11 + $0x340] sm:$0xff]
        %v4411 = vld [vmem:[#allocation11 + $0x348] sm:$0xff]
        %v4412 = vld [vmem:[#allocation11 + $0x350] sm:$0xff]
        %v4413 = vld [vmem:[#allocation11 + $0x358] sm:$0xff]
        %v4414 = vld [vmem:[#allocation11 + $0x360] sm:$0xff]
        %v4415 = vld [vmem:[#allocation11 + $0x368] sm:$0xff]
        %v4416 = vld [vmem:[#allocation11 + $0x370] sm:$0xff]
        %v4417 = vld [vmem:[#allocation11 + $0x378] sm:$0xff]
        %v4418 = vld [vmem:[#allocation11 + $0x380] sm:$0xff]
        %v4419 = vld [vmem:[#allocation11 + $0x388] sm:$0xff]
        %v4420 = vld [vmem:[#allocation11 + $0x390] sm:$0xff]
        %v4421 = vld [vmem:[#allocation11 + $0x398] sm:$0xff]
        %v4422 = vld [vmem:[#allocation11 + $0x3a0] sm:$0xff]
        %v4423 = vld [vmem:[#allocation11 + $0x3a8] sm:$0xff]
        %v4424 = vld [vmem:[#allocation11 + $0x3b0] sm:$0xff]
        %v4425 = vld [vmem:[#allocation11 + $0x3b8] sm:$0xff]
        %v4426 = vld [vmem:[#allocation11 + $0x3c0] sm:$0xff]
        %v4427 = vld [vmem:[#allocation11 + $0x3c8] sm:$0xff]
        %v4428 = vld [vmem:[#allocation11 + $0x3d0] sm:$0xff]
        %v4429 = vld [vmem:[#allocation11 + $0x3d8] sm:$0xff]
        %v4430 = vld [vmem:[#allocation11 + $0x3e0] sm:$0xff]
        %v4431 = vld [vmem:[#allocation11 + $0x3e8] sm:$0xff]
        %v4432 = vld [vmem:[#allocation11 + $0x3f0] sm:$0xff]
        %v4433 = vld [vmem:[#allocation11 + $0x3f8] sm:$0xff]
        %v4434 = vld [vmem:[#allocation11 + $0x400] sm:$0xff]
        %v4435 = vld [vmem:[#allocation11 + $0x408] sm:$0xff]
        %v4436 = vld [vmem:[#allocation11 + $0x410] sm:$0xff]
        %v4437 = vld [vmem:[#allocation11 + $0x418] sm:$0xff]
        %v4438 = vld [vmem:[#allocation11 + $0x420] sm:$0xff]
        %v4439 = vld [vmem:[#allocation11 + $0x428] sm:$0xff]
        %v4440 = vld [vmem:[#allocation11 + $0x430] sm:$0xff]
        %v4441 = vld [vmem:[#allocation11 + $0x438] sm:$0xff]
        %v4442 = vld [vmem:[#allocation11 + $0x440] sm:$0xff]
        %v4443 = vld [vmem:[#allocation11 + $0x448] sm:$0xff]
        %v4444 = vld [vmem:[#allocation11 + $0x450] sm:$0xff]
        %v4445 = vld [vmem:[#allocation11 + $0x458] sm:$0xff]
        %v4446 = vld [vmem:[#allocation11 + $0x460] sm:$0xff]
        %v4447 = vld [vmem:[#allocation11 + $0x468] sm:$0xff]
        %v4448 = vld [vmem:[#allocation11 + $0x470] sm:$0xff]
        %v4449 = vld [vmem:[#allocation11 + $0x478] sm:$0xff]
        %v4450 = vld [vmem:[%s10] sm:$0x1]
        %v4452 = vlaneseq
        %v4453 = vshrl.u32 %v4452, 7
        %v4454 = vsub.s32 0, %v4453
        %v4455 = vrot.slane %v4450, %v4454
        %v4477 = vcombine.low %v4286, %v4291
        %v4478 = vcombine.high %v4286, %v4291
        %v4479 = vcombine.low %v4287, %v4292
        %v4480 = vcombine.high %v4287, %v4292
        %v4481 = vcombine.low %v4288, %v4293
        %v4482 = vcombine.high %v4288, %v4293
        %v4483 = vcombine.low %v4289, %v4294
        %v4484 = vcombine.high %v4289, %v4294
        %v4485 = vcombine.low %v4290, %v4295
        %v4486 = vcombine.low %v4296, %v4301
        %v4487 = vcombine.high %v4296, %v4301
        %v4488 = vcombine.low %v4297, %v4302
        %v4489 = vcombine.high %v4297, %v4302
        %v4490 = vcombine.low %v4298, %v4303
        %v4491 = vcombine.high %v4298, %v4303
        %v4492 = vcombine.low %v4299, %v4304
        %v4493 = vcombine.high %v4299, %v4304
        %v4494 = vcombine.low %v4300, %v4305
        %4513 = vmatprep.subr.mxu0 0.0
        %4514 = vmatpush1.msra.mxu0 %v4306
        %4515 = vmatprep.subr.mxu0 0.0
        %4516 = vmatpush1.msra.mxu0 %v4307
        %4517 = vmatprep.subr.mxu0 0.0
        %4518 = vmatpush1.msra.mxu0 %v4308
        %4519 = vmatprep.subr.mxu0 0.0
        %4520 = vmatpush1.msra.mxu0 %v4309
        %4521 = vmatprep.subr.mxu0 0.0
        %4522 = vmatpush1.msra.mxu0 %v4310
        %4523 = vmatprep.subr.mxu0 0.0
        %4524 = vmatpush1.msra.mxu0 %v4311
        %4525 = vmatprep.subr.mxu0 0.0
        %4526 = vmatpush1.msra.mxu0 %v4312
        %4527 = vmatprep.subr.mxu0 0.0
        %4528 = vmatpush1.msra.mxu0 %v4313
        %4529 = vmatprep.subr.mxu0 0.0
        %4530 = vmatpush1.msra.mxu0 %v4314
        %4531 = vmatprep.subr.mxu0 0.0
        %4532 = vmatpush1.msra.mxu0 %v4315
        %4533 = vmatprep.subr.mxu0 0.0
        %4534 = vmatpush1.msra.mxu0 %v4316
        %4535 = vmatprep.subr.mxu0 0.0
        %4536 = vmatpush1.msra.mxu0 %v4317
        %4537 = vmatprep.subr.mxu0 0.0
        %4538 = vmatpush1.msra.mxu0 %v4318
        %4539 = vmatprep.subr.mxu0 0.0
        %4540 = vmatpush1.msra.mxu0 %v4319
        %4541 = vmatprep.subr.mxu0 0.0
        %4542 = vmatpush1.msra.mxu0 %v4320
        %4543 = vmatprep.subr.mxu0 0.0
        %4544 = vmatpush1.msra.mxu0 %v4321
        %4545 = vmatprep.subr.mxu0 0.0
        %4546 = vmatpush1.msra.mxu0 %v4322
        %4547 = vmatprep.subr.mxu0 0.0
        %4548 = vmatpush1.msra.mxu0 %v4323
        %4549 = vmatprep.subr.mxu0 0.0
        %4550 = vmatpush1.msra.mxu0 %v4324
        %4551 = vmatprep.subr.mxu0 0.0
        %4552 = vmatpush1.msra.mxu0 %v4325
        %4553 = vmatprep.subr.mxu0 0.0
        %4554 = vmatpush1.msra.mxu0 %v4326
        %4555 = vmatprep.subr.mxu0 0.0
        %4556 = vmatpush1.msra.mxu0 %v4327
        %4557 = vmatprep.subr.mxu0 0.0
        %4558 = vmatpush1.msra.mxu0 %v4328
        %4559 = vmatprep.subr.mxu0 0.0
        %4560 = vmatpush1.msra.mxu0 %v4329
        %4561 = vmatprep.subr.mxu0 0.0
        %4562 = vmatpush1.msra.mxu0 %v4330
        %4563 = vmatprep.subr.mxu0 0.0
        %4564 = vmatpush1.msra.mxu0 %v4331
        %4565 = vmatprep.subr.mxu0 0.0
        %4566 = vmatpush1.msra.mxu0 %v4332
        %4567 = vmatprep.subr.mxu0 0.0
        %4568 = vmatpush1.msra.mxu0 %v4333
        %4569 = vmatprep.subr.mxu0 0.0
        %4570 = vmatpush1.msra.mxu0 %v4334
        %4571 = vmatprep.subr.mxu0 0.0
        %4572 = vmatpush1.msra.mxu0 %v4335
        %4573 = vmatprep.subr.mxu0 0.0
        %4574 = vmatpush1.msra.mxu0 %v4336
        %4575 = vmatprep.subr.mxu0 0.0
        %4576 = vmatpush1.msra.mxu0 %v4337
        %4577 = vmatprep.mubr.f32.mxu0 %v4478
        %4578 = vmatmul.mubr.f32.gmra.mrb[0].mxu0 %v4477
        %v4579 = vpop.f32.mrb[0].mxu0
        %v4580 = vadd.f32 %v4455, %v4579
        %v4581 = vpop.f32.mrb[0].mxu0
        %4582 = vmatprep.mubr.f32.mxu0 %v4487
        %4583 = vmatmul.mubr.f32.gmra.mrb[0].mxu0 %v4486
        %v4584 = vpop.f32.mrb[0].mxu0
        %v4585 = vadd.f32 %v4455, %v4584
        %v4586 = vpop.f32.mrb[0].mxu0
        %4587 = vdwg.mxu0
        %4588 = vmatprep.subr.mxu0 0.0
        %4589 = vmatpush1.msra.mxu0 %v4338
        %4590 = vmatprep.subr.mxu0 0.0
        %4591 = vmatpush1.msra.mxu0 %v4339
        %4592 = vmatprep.subr.mxu0 0.0
        %4593 = vmatpush1.msra.mxu0 %v4340
        %4594 = vmatprep.subr.mxu0 0.0
        %4595 = vmatpush1.msra.mxu0 %v4341
        %4596 = vmatprep.subr.mxu0 0.0
        %4597 = vmatpush1.msra.mxu0 %v4342
        %4598 = vmatprep.subr.mxu0 0.0
        %4599 = vmatpush1.msra.mxu0 %v4343
        %4600 = vmatprep.subr.mxu0 0.0
        %4601 = vmatpush1.msra.mxu0 %v4344
        %4602 = vmatprep.subr.mxu0 0.0
        %4603 = vmatpush1.msra.mxu0 %v4345
        %4604 = vmatprep.subr.mxu0 0.0
        %4605 = vmatpush1.msra.mxu0 %v4346
        %4606 = vmatprep.subr.mxu0 0.0
        %4607 = vmatpush1.msra.mxu0 %v4347
        %4608 = vmatprep.subr.mxu0 0.0
        %4609 = vmatpush1.msra.mxu0 %v4348
        %4610 = vmatprep.subr.mxu0 0.0
        %4611 = vmatpush1.msra.mxu0 %v4349
        %4612 = vmatprep.subr.mxu0 0.0
        %4613 = vmatpush1.msra.mxu0 %v4350
        %4614 = vmatprep.subr.mxu0 0.0
        %4615 = vmatpush1.msra.mxu0 %v4351
        %4616 = vmatprep.subr.mxu0 0.0
        %4617 = vmatpush1.msra.mxu0 %v4352
        %4618 = vmatprep.subr.mxu0 0.0
        %4619 = vmatpush1.msra.mxu0 %v4353
        %4620 = vmatprep.subr.mxu0 0.0
        %4621 = vmatpush1.msra.mxu0 %v4354
        %4622 = vmatprep.subr.mxu0 0.0
        %4623 = vmatpush1.msra.mxu0 %v4355
        %4624 = vmatprep.subr.mxu0 0.0
        %4625 = vmatpush1.msra.mxu0 %v4356
        %4626 = vmatprep.subr.mxu0 0.0
        %4627 = vmatpush1.msra.mxu0 %v4357
        %4628 = vmatprep.subr.mxu0 0.0
        %4629 = vmatpush1.msra.mxu0 %v4358
        %4630 = vmatprep.subr.mxu0 0.0
        %4631 = vmatpush1.msra.mxu0 %v4359
        %4632 = vmatprep.subr.mxu0 0.0
        %4633 = vmatpush1.msra.mxu0 %v4360
        %4634 = vmatprep.subr.mxu0 0.0
        %4635 = vmatpush1.msra.mxu0 %v4361
        %4636 = vmatprep.subr.mxu0 0.0
        %4637 = vmatpush1.msra.mxu0 %v4362
        %4638 = vmatprep.subr.mxu0 0.0
        %4639 = vmatpush1.msra.mxu0 %v4363
        %4640 = vmatprep.subr.mxu0 0.0
        %4641 = vmatpush1.msra.mxu0 %v4364
        %4642 = vmatprep.subr.mxu0 0.0
        %4643 = vmatpush1.msra.mxu0 %v4365
        %4644 = vmatprep.subr.mxu0 0.0
        %4645 = vmatpush1.msra.mxu0 %v4366
        %4646 = vmatprep.subr.mxu0 0.0
        %4647 = vmatpush1.msra.mxu0 %v4367
        %4648 = vmatprep.subr.mxu0 0.0
        %4649 = vmatpush1.msra.mxu0 %v4368
        %4650 = vmatprep.subr.mxu0 0.0
        %4651 = vmatpush1.msra.mxu0 %v4369
        %4652 = vmatprep.mubr.f32.mxu0 %v4480
        %4653 = vmatmul.mubr.f32.gmra.mrb[0].mxu0 %v4479
        %v4654 = vpop.f32.mrb[0].mxu0
        %v4655 = vadd.f32 %v4580, %v4654
        %v4656 = vpop.f32.mrb[0].mxu0
        %4657 = vmatprep.mubr.f32.mxu0 %v4489
        %4658 = vmatmul.mubr.f32.gmra.mrb[0].mxu0 %v4488
        %v4659 = vpop.f32.mrb[0].mxu0
        %v4660 = vadd.f32 %v4585, %v4659
        %v4661 = vpop.f32.mrb[0].mxu0
        %4662 = vdwg.mxu0
        %4663 = vmatprep.subr.mxu0 0.0
        %4664 = vmatpush1.msra.mxu0 %v4370
        %4665 = vmatprep.subr.mxu0 0.0
        %4666 = vmatpush1.msra.mxu0 %v4371
        %4667 = vmatprep.subr.mxu0 0.0
        %4668 = vmatpush1.msra.mxu0 %v4372
        %4669 = vmatprep.subr.mxu0 0.0
        %4670 = vmatpush1.msra.mxu0 %v4373
        %4671 = vmatprep.subr.mxu0 0.0
        %4672 = vmatpush1.msra.mxu0 %v4374
        %4673 = vmatprep.subr.mxu0 0.0
        %4674 = vmatpush1.msra.mxu0 %v4375
        %4675 = vmatprep.subr.mxu0 0.0
        %4676 = vmatpush1.msra.mxu0 %v4376
        %4677 = vmatprep.subr.mxu0 0.0
        %4678 = vmatpush1.msra.mxu0 %v4377
        %4679 = vmatprep.subr.mxu0 0.0
        %4680 = vmatpush1.msra.mxu0 %v4378
        %4681 = vmatprep.subr.mxu0 0.0
        %4682 = vmatpush1.msra.mxu0 %v4379
        %4683 = vmatprep.subr.mxu0 0.0
        %4684 = vmatpush1.msra.mxu0 %v4380
        %4685 = vmatprep.subr.mxu0 0.0
        %4686 = vmatpush1.msra.mxu0 %v4381
        %4687 = vmatprep.subr.mxu0 0.0
        %4688 = vmatpush1.msra.mxu0 %v4382
        %4689 = vmatprep.subr.mxu0 0.0
        %4690 = vmatpush1.msra.mxu0 %v4383
        %4691 = vmatprep.subr.mxu0 0.0
        %4692 = vmatpush1.msra.mxu0 %v4384
        %4693 = vmatprep.subr.mxu0 0.0
        %4694 = vmatpush1.msra.mxu0 %v4385
        %4695 = vmatprep.subr.mxu0 0.0
        %4696 = vmatpush1.msra.mxu0 %v4386
        %4697 = vmatprep.subr.mxu0 0.0
        %4698 = vmatpush1.msra.mxu0 %v4387
        %4699 = vmatprep.subr.mxu0 0.0
        %4700 = vmatpush1.msra.mxu0 %v4388
        %4701 = vmatprep.subr.mxu0 0.0
        %4702 = vmatpush1.msra.mxu0 %v4389
        %4703 = vmatprep.subr.mxu0 0.0
        %4704 = vmatpush1.msra.mxu0 %v4390
        %4705 = vmatprep.subr.mxu0 0.0
        %4706 = vmatpush1.msra.mxu0 %v4391
        %4707 = vmatprep.subr.mxu0 0.0
        %4708 = vmatpush1.msra.mxu0 %v4392
        %4709 = vmatprep.subr.mxu0 0.0
        %4710 = vmatpush1.msra.mxu0 %v4393
        %4711 = vmatprep.subr.mxu0 0.0
        %4712 = vmatpush1.msra.mxu0 %v4394
        %4713 = vmatprep.subr.mxu0 0.0
        %4714 = vmatpush1.msra.mxu0 %v4395
        %4715 = vmatprep.subr.mxu0 0.0
        %4716 = vmatpush1.msra.mxu0 %v4396
        %4717 = vmatprep.subr.mxu0 0.0
        %4718 = vmatpush1.msra.mxu0 %v4397
        %4719 = vmatprep.subr.mxu0 0.0
        %4720 = vmatpush1.msra.mxu0 %v4398
        %4721 = vmatprep.subr.mxu0 0.0
        %4722 = vmatpush1.msra.mxu0 %v4399
        %4723 = vmatprep.subr.mxu0 0.0
        %4724 = vmatpush1.msra.mxu0 %v4400
        %4725 = vmatprep.subr.mxu0 0.0
        %4726 = vmatpush1.msra.mxu0 %v4401
        %4727 = vmatprep.mubr.f32.mxu0 %v4482
        %4728 = vmatmul.mubr.f32.gmra.mrb[0].mxu0 %v4481
        %v4729 = vpop.f32.mrb[0].mxu0
        %v4730 = vadd.f32 %v4655, %v4729
        %v4731 = vpop.f32.mrb[0].mxu0
        %4732 = vmatprep.mubr.f32.mxu0 %v4491
        %4733 = vmatmul.mubr.f32.gmra.mrb[0].mxu0 %v4490
        %v4734 = vpop.f32.mrb[0].mxu0
        %v4735 = vadd.f32 %v4660, %v4734
        %v4736 = vpop.f32.mrb[0].mxu0
        %4737 = vdwg.mxu0
        %4738 = vmatprep.subr.mxu0 0.0
        %4739 = vmatpush1.msra.mxu0 %v4402
        %4740 = vmatprep.subr.mxu0 0.0
        %4741 = vmatpush1.msra.mxu0 %v4403
        %4742 = vmatprep.subr.mxu0 0.0
        %4743 = vmatpush1.msra.mxu0 %v4404
        %4744 = vmatprep.subr.mxu0 0.0
        %4745 = vmatpush1.msra.mxu0 %v4405
        %4746 = vmatprep.subr.mxu0 0.0
        %4747 = vmatpush1.msra.mxu0 %v4406
        %4748 = vmatprep.subr.mxu0 0.0
        %4749 = vmatpush1.msra.mxu0 %v4407
        %4750 = vmatprep.subr.mxu0 0.0
        %4751 = vmatpush1.msra.mxu0 %v4408
        %4752 = vmatprep.subr.mxu0 0.0
        %4753 = vmatpush1.msra.mxu0 %v4409
        %4754 = vmatprep.subr.mxu0 0.0
        %4755 = vmatpush1.msra.mxu0 %v4410
        %4756 = vmatprep.subr.mxu0 0.0
        %4757 = vmatpush1.msra.mxu0 %v4411
        %4758 = vmatprep.subr.mxu0 0.0
        %4759 = vmatpush1.msra.mxu0 %v4412
        %4760 = vmatprep.subr.mxu0 0.0
        %4761 = vmatpush1.msra.mxu0 %v4413
        %4762 = vmatprep.subr.mxu0 0.0
        %4763 = vmatpush1.msra.mxu0 %v4414
        %4764 = vmatprep.subr.mxu0 0.0
        %4765 = vmatpush1.msra.mxu0 %v4415
        %4766 = vmatprep.subr.mxu0 0.0
        %4767 = vmatpush1.msra.mxu0 %v4416
        %4768 = vmatprep.subr.mxu0 0.0
        %4769 = vmatpush1.msra.mxu0 %v4417
        %4770 = vmatprep.subr.mxu0 0.0
        %4771 = vmatpush1.msra.mxu0 %v4418
        %4772 = vmatprep.subr.mxu0 0.0
        %4773 = vmatpush1.msra.mxu0 %v4419
        %4774 = vmatprep.subr.mxu0 0.0
        %4775 = vmatpush1.msra.mxu0 %v4420
        %4776 = vmatprep.subr.mxu0 0.0
        %4777 = vmatpush1.msra.mxu0 %v4421
        %4778 = vmatprep.subr.mxu0 0.0
        %4779 = vmatpush1.msra.mxu0 %v4422
        %4780 = vmatprep.subr.mxu0 0.0
        %4781 = vmatpush1.msra.mxu0 %v4423
        %4782 = vmatprep.subr.mxu0 0.0
        %4783 = vmatpush1.msra.mxu0 %v4424
        %4784 = vmatprep.subr.mxu0 0.0
        %4785 = vmatpush1.msra.mxu0 %v4425
        %4786 = vmatprep.subr.mxu0 0.0
        %4787 = vmatpush1.msra.mxu0 %v4426
        %4788 = vmatprep.subr.mxu0 0.0
        %4789 = vmatpush1.msra.mxu0 %v4427
        %4790 = vmatprep.subr.mxu0 0.0
        %4791 = vmatpush1.msra.mxu0 %v4428
        %4792 = vmatprep.subr.mxu0 0.0
        %4793 = vmatpush1.msra.mxu0 %v4429
        %4794 = vmatprep.subr.mxu0 0.0
        %4795 = vmatpush1.msra.mxu0 %v4430
        %4796 = vmatprep.subr.mxu0 0.0
        %4797 = vmatpush1.msra.mxu0 %v4431
        %4798 = vmatprep.subr.mxu0 0.0
        %4799 = vmatpush1.msra.mxu0 %v4432
        %4800 = vmatprep.subr.mxu0 0.0
        %4801 = vmatpush1.msra.mxu0 %v4433
        %4802 = vmatprep.mubr.f32.mxu0 %v4484
        %4803 = vmatmul.mubr.f32.gmra.mrb[0].mxu0 %v4483
        %v4804 = vpop.f32.mrb[0].mxu0
        %v4805 = vadd.f32 %v4730, %v4804
        %v4806 = vpop.f32.mrb[0].mxu0
        %4807 = vmatprep.mubr.f32.mxu0 %v4493
        %4808 = vmatmul.mubr.f32.gmra.mrb[0].mxu0 %v4492
        %v4809 = vpop.f32.mrb[0].mxu0
        %v4810 = vadd.f32 %v4735, %v4809
        %v4811 = vpop.f32.mrb[0].mxu0
        %4812 = vdwg.mxu0
        %4813 = vmatprep.subr.mxu0 0.0
        %4814 = vmatpush1.msra.mxu0 %v4434
        %4815 = vmatprep.subr.mxu0 0.0
        %4816 = vmatpush1.msra.mxu0 %v4435
        %4817 = vmatprep.subr.mxu0 0.0
        %4818 = vmatpush1.msra.mxu0 %v4436
        %4819 = vmatprep.subr.mxu0 0.0
        %4820 = vmatpush1.msra.mxu0 %v4437
        %4821 = vmatprep.subr.mxu0 0.0
        %4822 = vmatpush1.msra.mxu0 %v4438
        %4823 = vmatprep.subr.mxu0 0.0
        %4824 = vmatpush1.msra.mxu0 %v4439
        %4825 = vmatprep.subr.mxu0 0.0
        %4826 = vmatpush1.msra.mxu0 %v4440
        %4827 = vmatprep.subr.mxu0 0.0
        %4828 = vmatpush1.msra.mxu0 %v4441
        %4829 = vmatprep.subr.mxu0 0.0
        %4830 = vmatpush1.msra.mxu0 %v4442
        %4831 = vmatprep.subr.mxu0 0.0
        %4832 = vmatpush1.msra.mxu0 %v4443
        %4833 = vmatprep.subr.mxu0 0.0
        %4834 = vmatpush1.msra.mxu0 %v4444
        %4835 = vmatprep.subr.mxu0 0.0
        %4836 = vmatpush1.msra.mxu0 %v4445
        %4837 = vmatprep.subr.mxu0 0.0
        %4838 = vmatpush1.msra.mxu0 %v4446
        %4839 = vmatprep.subr.mxu0 0.0
        %4840 = vmatpush1.msra.mxu0 %v4447
        %4841 = vmatprep.subr.mxu0 0.0
        %4842 = vmatpush1.msra.mxu0 %v4448
        %4843 = vmatprep.subr.mxu0 0.0
        %4844 = vmatpush1.msra.mxu0 %v4449
        %4845 = vmatprep.subr.mxu0 0.0
        %4846 = vmatpush1.msra.mxu0 0.0
        %4847 = vmatprep.subr.mxu0 0.0
        %4848 = vmatpush1.msra.mxu0 0.0
        %4849 = vmatprep.subr.mxu0 0.0
        %4850 = vmatpush1.msra.mxu0 0.0
        %4851 = vmatprep.subr.mxu0 0.0
        %4852 = vmatpush1.msra.mxu0 0.0
        %4853 = vmatprep.subr.mxu0 0.0
        %4854 = vmatpush1.msra.mxu0 0.0
        %4855 = vmatprep.subr.mxu0 0.0
        %4856 = vmatpush1.msra.mxu0 0.0
        %4857 = vmatprep.subr.mxu0 0.0
        %4858 = vmatpush1.msra.mxu0 0.0
        %4859 = vmatprep.subr.mxu0 0.0
        %4860 = vmatpush1.msra.mxu0 0.0
        %4861 = vmatprep.subr.mxu0 0.0
        %4862 = vmatpush1.msra.mxu0 0.0
        %4863 = vmatprep.subr.mxu0 0.0
        %4864 = vmatpush1.msra.mxu0 0.0
        %4865 = vmatprep.subr.mxu0 0.0
        %4866 = vmatpush1.msra.mxu0 0.0
        %4867 = vmatprep.subr.mxu0 0.0
        %4868 = vmatpush1.msra.mxu0 0.0
        %4869 = vmatprep.subr.mxu0 0.0
        %4870 = vmatpush1.msra.mxu0 0.0
        %4871 = vmatprep.subr.mxu0 0.0
        %4872 = vmatpush1.msra.mxu0 0.0
        %4873 = vmatprep.subr.mxu0 0.0
        %4874 = vmatpush1.msra.mxu0 0.0
        %4875 = vmatprep.subr.mxu0 0.0
        %4876 = vmatpush1.msra.mxu0 0.0
        %4877 = vmatprep.mubr.f32.mxu0 0.0
        %4878 = vmatmul.mubr.f32.gmra.mrb[0].mxu0 %v4485
        %v4879 = vpop.f32.mrb[0].mxu0
        %v4880 = vadd.f32 %v4805, %v4879
        %v4881 = vpop.f32.mrb[0].mxu0
        %4882 = vmatprep.mubr.f32.mxu0 0.0
        %4883 = vmatmul.mubr.f32.gmra.mrb[0].mxu0 %v4494
        %v4884 = vpop.f32.mrb[0].mxu0
        %v4885 = vadd.f32 %v4810, %v4884
        %v4886 = vpop.f32.mrb[0].mxu0
        %4887 = vdwg.mxu0
        %v4888 = vmax.f32 %v4880, 0.0
        %v4889 = vmax.f32 %v4885, 0.0
        %vm4890 = vcmask 1040384
        %v4891 = vsel %vm4890, %v4888, 0.0
        %v4892 = vrot.slane %v4888, 1
        %vm4893 = vcmask 1041409
        %v4894 = vsel %vm4893, %v4892, %v4891
        %v4895 = vsel %vm4890, %v4892, 0.0
        %v4896 = vrot.slane %v4888, 2
        %v4897 = vsel %vm4893, %v4896, %v4895
        %v4898 = vrot.slane %v4888, 4
        %v4899 = vsel %vm4890, %v4898, 0.0
        %v4900 = vrot.slane %v4888, 5
        %v4901 = vsel %vm4893, %v4900, %v4899
        %v4902 = vsel %vm4890, %v4900, 0.0
        %v4903 = vrot.slane %v4888, 6
        %v4904 = vsel %vm4893, %v4903, %v4902
        %v4905 = vsel %vm4890, %v4889, 0.0
        %v4906 = vrot.slane %v4889, 1
        %v4907 = vsel %vm4893, %v4906, %v4905
        %v4908 = vsel %vm4890, %v4906, 0.0
        %v4909 = vrot.slane %v4889, 2
        %v4910 = vsel %vm4893, %v4909, %v4908
        %v4911 = vrot.slane %v4889, 4
        %v4912 = vsel %vm4890, %v4911, 0.0
        %v4913 = vrot.slane %v4889, 5
        %v4914 = vsel %vm4893, %v4913, %v4912
        %v4915 = vsel %vm4890, %v4913, 0.0
        %v4916 = vrot.slane %v4889, 6
        %v4917 = vsel %vm4893, %v4916, %v4915
        %v4918 = vadd.f32 %v4894, %v4897
        %v4919 = vadd.f32 %v4901, %v4904
        %v4920 = vadd.f32 %v4907, %v4910
        %v4921 = vadd.f32 %v4914, %v4917
        %v4922 = vadd.f32 %v4918, %v4919
        %v4923 = vadd.f32 %v4920, %v4921
        %v4924 = vld [vmem:[%s11] sm:$0x1]
        %v4926 = vlaneseq
        %v4927 = vshrl.u32 %v4926, 7
        %v4928 = vsub.s32 0, %v4927
        %v4929 = vrot.slane %v4924, %v4928
        %v4931 = vmul.f32 %v4922, %v4929
        %v4932 = vmul.f32 %v4923, %v4929
        %v4933 = vld [vmem:[%s12] sm:$0x1]
        %v4935 = vlaneseq
        %v4936 = vshrl.u32 %v4935, 7
        %v4937 = vsub.s32 0, %v4936
        %v4938 = vrot.slane %v4933, %v4937
        %v4940 = vadd.f32 %v4931, %v4938
        %v4941 = vadd.f32 %v4932, %v4938
        %v4942 = vsel %vm4890, %v4940, 0.0
        %v4943 = vrot.slane %v4940, 1
        %v4944 = vsel %vm4890, %v4943, 0.0
        %v4945 = vsel %vm4890, %v4941, 0.0
        %v4946 = vrot.slane %v4941, 1
        %v4947 = vsel %vm4890, %v4946, 0.0
        %v4948 = vld [vmem:[%s13] sm:$0xff]
        %v4949 = vld [vmem:[%s13 + $0x8] sm:$0xff]
        %v4950 = vld [vmem:[%s13 + $0x10] sm:$0xff]
        %v4951 = vld [vmem:[%s13 + $0x18] sm:$0xff]
        %v4952 = vld [vmem:[%s13 + $0x20] sm:$0xff]
        %v4953 = vld [vmem:[%s13 + $0x28] sm:$0xff]
        %v4954 = vld [vmem:[%s13 + $0x30] sm:$0xff]
        %v4955 = vld [vmem:[%s13 + $0x38] sm:$0xff]
        %v4956 = vld [vmem:[%s13 + $0x40] sm:$0xff]
        %v4957 = vld [vmem:[%s13 + $0x48] sm:$0xff]
        %v4958 = vld [vmem:[%s13 + $0x50] sm:$0xff]
        %v4959 = vld [vmem:[%s13 + $0x58] sm:$0xff]
        %v4960 = vld [vmem:[%s13 + $0x60] sm:$0xff]
        %v4961 = vld [vmem:[%s13 + $0x68] sm:$0xff]
        %v4962 = vld [vmem:[%s13 + $0x70] sm:$0xff]
        %v4963 = vld [vmem:[%s13 + $0x78] sm:$0xff]
        %v4964 = vld [vmem:[%s13 + $0x80] sm:$0xff]
        %v4965 = vld [vmem:[%s13 + $0x88] sm:$0xff]
        %v4966 = vld [vmem:[%s13 + $0x90] sm:$0xff]
        %v4967 = vld [vmem:[%s13 + $0x98] sm:$0xff]
        %v4968 = vld [vmem:[%s13 + $0xa0] sm:$0xff]
        %v4969 = vld [vmem:[%s13 + $0xa8] sm:$0xff]
        %v4970 = vld [vmem:[%s13 + $0xb0] sm:$0xff]
        %v4971 = vld [vmem:[%s13 + $0xb8] sm:$0xff]
        %v4972 = vld [vmem:[%s13 + $0xc0] sm:$0xff]
        %v4973 = vld [vmem:[%s13 + $0xc8] sm:$0xff]
        %v4974 = vld [vmem:[%s13 + $0xd0] sm:$0xff]
        %v4975 = vld [vmem:[%s13 + $0xd8] sm:$0xff]
        %v4976 = vld [vmem:[%s13 + $0xe0] sm:$0xff]
        %v4977 = vld [vmem:[%s13 + $0xe8] sm:$0xff]
        %v4978 = vld [vmem:[%s13 + $0xf0] sm:$0xff]
        %v4979 = vld [vmem:[%s13 + $0xf8] sm:$0xff]
        %v4980 = vld [vmem:[%s13 + $0x100] sm:$0xff]
        %v4981 = vld [vmem:[%s13 + $0x108] sm:$0xff]
        %v4982 = vld [vmem:[%s13 + $0x110] sm:$0xff]
        %v4983 = vld [vmem:[%s13 + $0x118] sm:$0xff]
        %v4984 = vld [vmem:[%s13 + $0x120] sm:$0xff]
        %v4985 = vld [vmem:[%s13 + $0x128] sm:$0xff]
        %v4986 = vld [vmem:[%s13 + $0x130] sm:$0xff]
        %v4987 = vld [vmem:[%s13 + $0x138] sm:$0xff]
        %v4988 = vld [vmem:[%s13 + $0x140] sm:$0xff]
        %v4989 = vld [vmem:[%s13 + $0x148] sm:$0xff]
        %v4990 = vld [vmem:[%s13 + $0x150] sm:$0xff]
        %v4991 = vld [vmem:[%s13 + $0x158] sm:$0xff]
        %v4992 = vld [vmem:[%s13 + $0x160] sm:$0xff]
        %v4993 = vld [vmem:[%s13 + $0x168] sm:$0xff]
        %v4994 = vld [vmem:[%s13 + $0x170] sm:$0xff]
        %v4995 = vld [vmem:[%s13 + $0x178] sm:$0xff]
        %v4996 = vld [vmem:[%s13 + $0x180] sm:$0xff]
        %v4997 = vld [vmem:[%s13 + $0x188] sm:$0xff]
        %v4998 = vld [vmem:[%s13 + $0x190] sm:$0xff]
        %v4999 = vld [vmem:[%s13 + $0x198] sm:$0xff]
        %v5000 = vld [vmem:[%s13 + $0x1a0] sm:$0xff]
        %v5001 = vld [vmem:[%s13 + $0x1a8] sm:$0xff]
        %v5002 = vld [vmem:[%s13 + $0x1b0] sm:$0xff]
        %v5003 = vld [vmem:[%s13 + $0x1b8] sm:$0xff]
        %v5004 = vld [vmem:[%s13 + $0x1c0] sm:$0xff]
        %v5005 = vld [vmem:[%s13 + $0x1c8] sm:$0xff]
        %v5006 = vld [vmem:[%s13 + $0x1d0] sm:$0xff]
        %v5007 = vld [vmem:[%s13 + $0x1d8] sm:$0xff]
        %v5008 = vld [vmem:[%s13 + $0x1e0] sm:$0xff]
        %v5009 = vld [vmem:[%s13 + $0x1e8] sm:$0xff]
        %v5010 = vld [vmem:[%s13 + $0x1f0] sm:$0xff]
        %v5011 = vld [vmem:[%s13 + $0x1f8] sm:$0xff]
        %v5012 = vld [vmem:[%s14] sm:$0x1]
        %5013 = vmatprep.subr.mxu0 0.0
        %5014 = vmatpush1.msra.mxu0 %v4948
        %5015 = vmatprep.subr.mxu0 0.0
        %5016 = vmatpush1.msra.mxu0 %v4949
        %5017 = vmatprep.subr.mxu0 0.0
        %5018 = vmatpush1.msra.mxu0 %v4950
        %5019 = vmatprep.subr.mxu0 0.0
        %5020 = vmatpush1.msra.mxu0 %v4951
        %5021 = vmatprep.subr.mxu0 0.0
        %5022 = vmatpush1.msra.mxu0 %v4952
        %5023 = vmatprep.subr.mxu0 0.0
        %5024 = vmatpush1.msra.mxu0 %v4953
        %5025 = vmatprep.subr.mxu0 0.0
        %5026 = vmatpush1.msra.mxu0 %v4954
        %5027 = vmatprep.subr.mxu0 0.0
        %5028 = vmatpush1.msra.mxu0 %v4955
        %5029 = vmatprep.subr.mxu0 0.0
        %5030 = vmatpush1.msra.mxu0 %v4956
        %5031 = vmatprep.subr.mxu0 0.0
        %5032 = vmatpush1.msra.mxu0 %v4957
        %5033 = vmatprep.subr.mxu0 0.0
        %5034 = vmatpush1.msra.mxu0 %v4958
        %5035 = vmatprep.subr.mxu0 0.0
        %5036 = vmatpush1.msra.mxu0 %v4959
        %5037 = vmatprep.subr.mxu0 0.0
        %5038 = vmatpush1.msra.mxu0 %v4960
        %5039 = vmatprep.subr.mxu0 0.0
        %5040 = vmatpush1.msra.mxu0 %v4961
        %5041 = vmatprep.subr.mxu0 0.0
        %5042 = vmatpush1.msra.mxu0 %v4962
        %5043 = vmatprep.subr.mxu0 0.0
        %5044 = vmatpush1.msra.mxu0 %v4963
        %5045 = vmatprep.subr.mxu0 0.0
        %5046 = vmatpush1.msra.mxu0 %v4964
        %5047 = vmatprep.subr.mxu0 0.0
        %5048 = vmatpush1.msra.mxu0 %v4965
        %5049 = vmatprep.subr.mxu0 0.0
        %5050 = vmatpush1.msra.mxu0 %v4966
        %5051 = vmatprep.subr.mxu0 0.0
        %5052 = vmatpush1.msra.mxu0 %v4967
        %5053 = vmatprep.subr.mxu0 0.0
        %5054 = vmatpush1.msra.mxu0 %v4968
        %5055 = vmatprep.subr.mxu0 0.0
        %5056 = vmatpush1.msra.mxu0 %v4969
        %5057 = vmatprep.subr.mxu0 0.0
        %5058 = vmatpush1.msra.mxu0 %v4970
        %5059 = vmatprep.subr.mxu0 0.0
        %5060 = vmatpush1.msra.mxu0 %v4971
        %5061 = vmatprep.subr.mxu0 0.0
        %5062 = vmatpush1.msra.mxu0 %v4972
        %5063 = vmatprep.subr.mxu0 0.0
        %5064 = vmatpush1.msra.mxu0 %v4973
        %5065 = vmatprep.subr.mxu0 0.0
        %5066 = vmatpush1.msra.mxu0 %v4974
        %5067 = vmatprep.subr.mxu0 0.0
        %5068 = vmatpush1.msra.mxu0 %v4975
        %5069 = vmatprep.subr.mxu0 0.0
        %5070 = vmatpush1.msra.mxu0 %v4976
        %5071 = vmatprep.subr.mxu0 0.0
        %5072 = vmatpush1.msra.mxu0 %v4977
        %5073 = vmatprep.subr.mxu0 0.0
        %5074 = vmatpush1.msra.mxu0 %v4978
        %5075 = vmatprep.subr.mxu0 0.0
        %5076 = vmatpush1.msra.mxu0 %v4979
        %5077 = vmatprep.mubr.f32.mxu0 %v4944
        %5078 = vmatmul.mubr.f32.gmra.mrb[0].mxu0 %v4942
        %v5079 = vpop.f32.mrb[0].mxu0
        %v5080 = vadd.f32 %v5012, %v5079
        %v5081 = vpop.f32.mrb[0].mxu0
        %5082 = vdwg.mxu0
        %5083 = vmatprep.subr.mxu0 0.0
        %5084 = vmatpush1.msra.mxu0 %v4980
        %5085 = vmatprep.subr.mxu0 0.0
        %5086 = vmatpush1.msra.mxu0 %v4981
        %5087 = vmatprep.subr.mxu0 0.0
        %5088 = vmatpush1.msra.mxu0 %v4982
        %5089 = vmatprep.subr.mxu0 0.0
        %5090 = vmatpush1.msra.mxu0 %v4983
        %5091 = vmatprep.subr.mxu0 0.0
        %5092 = vmatpush1.msra.mxu0 %v4984
        %5093 = vmatprep.subr.mxu0 0.0
        %5094 = vmatpush1.msra.mxu0 %v4985
        %5095 = vmatprep.subr.mxu0 0.0
        %5096 = vmatpush1.msra.mxu0 %v4986
        %5097 = vmatprep.subr.mxu0 0.0
        %5098 = vmatpush1.msra.mxu0 %v4987
        %5099 = vmatprep.subr.mxu0 0.0
        %5100 = vmatpush1.msra.mxu0 %v4988
        %5101 = vmatprep.subr.mxu0 0.0
        %5102 = vmatpush1.msra.mxu0 %v4989
        %5103 = vmatprep.subr.mxu0 0.0
        %5104 = vmatpush1.msra.mxu0 %v4990
        %5105 = vmatprep.subr.mxu0 0.0
        %5106 = vmatpush1.msra.mxu0 %v4991
        %5107 = vmatprep.subr.mxu0 0.0
        %5108 = vmatpush1.msra.mxu0 %v4992
        %5109 = vmatprep.subr.mxu0 0.0
        %5110 = vmatpush1.msra.mxu0 %v4993
        %5111 = vmatprep.subr.mxu0 0.0
        %5112 = vmatpush1.msra.mxu0 %v4994
        %5113 = vmatprep.subr.mxu0 0.0
        %5114 = vmatpush1.msra.mxu0 %v4995
        %5115 = vmatprep.subr.mxu0 0.0
        %5116 = vmatpush1.msra.mxu0 %v4996
        %5117 = vmatprep.subr.mxu0 0.0
        %5118 = vmatpush1.msra.mxu0 %v4997
        %5119 = vmatprep.subr.mxu0 0.0
        %5120 = vmatpush1.msra.mxu0 %v4998
        %5121 = vmatprep.subr.mxu0 0.0
        %5122 = vmatpush1.msra.mxu0 %v4999
        %5123 = vmatprep.subr.mxu0 0.0
        %5124 = vmatpush1.msra.mxu0 %v5000
        %5125 = vmatprep.subr.mxu0 0.0
        %5126 = vmatpush1.msra.mxu0 %v5001
        %5127 = vmatprep.subr.mxu0 0.0
        %5128 = vmatpush1.msra.mxu0 %v5002
        %5129 = vmatprep.subr.mxu0 0.0
        %5130 = vmatpush1.msra.mxu0 %v5003
        %5131 = vmatprep.subr.mxu0 0.0
        %5132 = vmatpush1.msra.mxu0 %v5004
        %5133 = vmatprep.subr.mxu0 0.0
        %5134 = vmatpush1.msra.mxu0 %v5005
        %5135 = vmatprep.subr.mxu0 0.0
        %5136 = vmatpush1.msra.mxu0 %v5006
        %5137 = vmatprep.subr.mxu0 0.0
        %5138 = vmatpush1.msra.mxu0 %v5007
        %5139 = vmatprep.subr.mxu0 0.0
        %5140 = vmatpush1.msra.mxu0 %v5008
        %5141 = vmatprep.subr.mxu0 0.0
        %5142 = vmatpush1.msra.mxu0 %v5009
        %5143 = vmatprep.subr.mxu0 0.0
        %5144 = vmatpush1.msra.mxu0 %v5010
        %5145 = vmatprep.subr.mxu0 0.0
        %5146 = vmatpush1.msra.mxu0 %v5011
        %5147 = vmatprep.mubr.f32.mxu0 %v4947
        %5148 = vmatmul.mubr.f32.gmra.mrb[0].mxu0 %v4945
        %v5149 = vpop.f32.mrb[0].mxu0
        %v5150 = vadd.f32 %v5080, %v5149
        %v5151 = vpop.f32.mrb[0].mxu0
        %5152 = vdwg.mxu0
        %v5153 = vmax.f32 %v5150, 0.0
        %v5154 = vld [vmem:[%s15] sm:$0xff]
        %v5155 = vld [vmem:[%s15 + $0x8] sm:$0xff]
        %v5156 = vld [vmem:[%s15 + $0x10] sm:$0xff]
        %v5157 = vld [vmem:[%s15 + $0x18] sm:$0xff]
        %v5158 = vld [vmem:[%s15 + $0x20] sm:$0xff]
        %v5159 = vld [vmem:[%s15 + $0x28] sm:$0xff]
        %v5160 = vld [vmem:[%s15 + $0x30] sm:$0xff]
        %v5161 = vld [vmem:[%s15 + $0x38] sm:$0xff]
        %v5162 = vld [vmem:[%s15 + $0x40] sm:$0xff]
        %v5163 = vld [vmem:[%s15 + $0x48] sm:$0xff]
        %v5164 = vld [vmem:[%s15 + $0x50] sm:$0xff]
        %v5165 = vld [vmem:[%s15 + $0x58] sm:$0xff]
        %v5166 = vld [vmem:[%s15 + $0x60] sm:$0xff]
        %v5167 = vld [vmem:[%s15 + $0x68] sm:$0xff]
        %v5168 = vld [vmem:[%s15 + $0x70] sm:$0xff]
        %v5169 = vld [vmem:[%s15 + $0x78] sm:$0xff]
        %v5170 = vld [vmem:[%s16] sm:$0x1]
        %5171 = vmatprep.subr.mxu0 0.0
        %5172 = vmatpush1.msra.mxu0 %v5154
        %5173 = vmatprep.subr.mxu0 0.0
        %5174 = vmatpush1.msra.mxu0 %v5155
        %5175 = vmatprep.subr.mxu0 0.0
        %5176 = vmatpush1.msra.mxu0 %v5156
        %5177 = vmatprep.subr.mxu0 0.0
        %5178 = vmatpush1.msra.mxu0 %v5157
        %5179 = vmatprep.subr.mxu0 0.0
        %5180 = vmatpush1.msra.mxu0 %v5158
        %5181 = vmatprep.subr.mxu0 0.0
        %5182 = vmatpush1.msra.mxu0 %v5159
        %5183 = vmatprep.subr.mxu0 0.0
        %5184 = vmatpush1.msra.mxu0 %v5160
        %5185 = vmatprep.subr.mxu0 0.0
        %5186 = vmatpush1.msra.mxu0 %v5161
        %5187 = vmatprep.subr.mxu0 0.0
        %5188 = vmatpush1.msra.mxu0 %v5162
        %5189 = vmatprep.subr.mxu0 0.0
        %5190 = vmatpush1.msra.mxu0 %v5163
        %5191 = vmatprep.subr.mxu0 0.0
        %5192 = vmatpush1.msra.mxu0 %v5164
        %5193 = vmatprep.subr.mxu0 0.0
        %5194 = vmatpush1.msra.mxu0 %v5165
        %5195 = vmatprep.subr.mxu0 0.0
        %5196 = vmatpush1.msra.mxu0 %v5166
        %5197 = vmatprep.subr.mxu0 0.0
        %5198 = vmatpush1.msra.mxu0 %v5167
        %5199 = vmatprep.subr.mxu0 0.0
        %5200 = vmatpush1.msra.mxu0 %v5168
        %5201 = vmatprep.subr.mxu0 0.0
        %5202 = vmatpush1.msra.mxu0 %v5169
        %5203 = vmatprep.subr.mxu0 0.0
        %5204 = vmatpush1.msra.mxu0 0.0
        %5205 = vmatprep.subr.mxu0 0.0
        %5206 = vmatpush1.msra.mxu0 0.0
        %5207 = vmatprep.subr.mxu0 0.0
        %5208 = vmatpush1.msra.mxu0 0.0
        %5209 = vmatprep.subr.mxu0 0.0
        %5210 = vmatpush1.msra.mxu0 0.0
        %5211 = vmatprep.subr.mxu0 0.0
        %5212 = vmatpush1.msra.mxu0 0.0
        %5213 = vmatprep.subr.mxu0 0.0
        %5214 = vmatpush1.msra.mxu0 0.0
        %5215 = vmatprep.subr.mxu0 0.0
        %5216 = vmatpush1.msra.mxu0 0.0
        %5217 = vmatprep.subr.mxu0 0.0
        %5218 = vmatpush1.msra.mxu0 0.0
        %5219 = vmatprep.subr.mxu0 0.0
        %5220 = vmatpush1.msra.mxu0 0.0
        %5221 = vmatprep.subr.mxu0 0.0
        %5222 = vmatpush1.msra.mxu0 0.0
        %5223 = vmatprep.subr.mxu0 0.0
        %5224 = vmatpush1.msra.mxu0 0.0
        %5225 = vmatprep.subr.mxu0 0.0
        %5226 = vmatpush1.msra.mxu0 0.0
        %5227 = vmatprep.subr.mxu0 0.0
        %5228 = vmatpush1.msra.mxu0 0.0
        %5229 = vmatprep.subr.mxu0 0.0
        %5230 = vmatpush1.msra.mxu0 0.0
        %5231 = vmatprep.subr.mxu0 0.0
        %5232 = vmatpush1.msra.mxu0 0.0
        %5233 = vmatprep.subr.mxu0 0.0
        %5234 = vmatpush1.msra.mxu0 0.0
        %5235 = vmatprep.mubr.f32.mxu0 0.0
        %5236 = vmatmul.mubr.f32.gmra.mrb[0].mxu0 %v5153
        %v5237 = vpop.f32.mrb[0].mxu0
        %v5238 = vadd.f32 %v5170, %v5237
        %v5239 = vpop.f32.mrb[0].mxu0
        %5240 = vdwg.mxu0
        %5241 = vst [vmem:[%s570] sm:$0x1] %v5238
        %s5242 = sand.u32 %s403, 1
        %s5243 = scalar_lea.sflag [#allocation10], %s5242
        %s5244 = sand.u32 %s403, 1
        %s5245 = scalar_lea.vmem [#allocation13], %s5244
        // Predicated region
        $region97: #{tpu_custom_call.1} parent=87 // pred_check
          %p5246 = pneg %p413
        $region98: #{tpu_custom_call.1} parent=87 // pred_check_branch
          %5248 = sbr.rel (%p5246) target = $region100
        $region99: #{tpu_custom_call.1} parent=87 // pred_region
          %s5250 = ssub.s32 16, 16
          %5251 = vsyncadd %s5243, %s5250
          %s5252 = smul.addr %s33, 16
          %s5253 = scalar_lea.hbm %s17, %s5252
          %s5255 = sshll.u32 %s5245, 4
          %s5256 = int_to_ptr.vmem [resolvable:$true] %s5255
          %5258 = dma.vmem_to_hbm [thread:$0]  %s5256, 16, %s5253, %s5243
        $region100: #{tpu_custom_call.1} parent=87 // pred_fallthru
          _
      $region88: #{tpu_custom_call.1} parent=5 // pred_fallthru
        _
      %p5259 = scmp.le.s32.totalorder 2, %s28
      // Predicated region
      $region101: #{tpu_custom_call.1} parent=5 // pred_check
        %p5260 = pneg %p5259
      $region102: #{tpu_custom_call.1} parent=5 // pred_check_branch
        %5262 = sbr.rel (%p5260) target = $region104
      $region103: #{tpu_custom_call.1} parent=5 // pred_region
        %s5263 = ssub.s32 %s28, 2
        // Predicated region
        $region105: #{tpu_custom_call.1} parent=103 // pred_check
          %p5264 = pneg %p419
        $region106: #{tpu_custom_call.1} parent=103 // pred_check_branch
          %5266 = sbr.rel (%p5264) target = $region108
        $region107: #{tpu_custom_call.1} parent=103 // pred_region
          %s5267 = sand.u32 %s404, 1
          %s5268 = scalar_lea.sflag [#allocation10], %s5267
          %s5269 = sand.u32 %s404, 1
          %s5270 = scalar_lea.vmem [#allocation13], %s5269
          %5271 = dma.done %s5268, 16
        $region108: #{tpu_custom_call.1} parent=103 // pred_fallthru
          _
      $region104: #{tpu_custom_call.1} parent=5 // pred_fallthru
        _
    $region6: #{tpu_custom_call.1} parent=1 // loop_footer
      %s32 = sadd.s32 1, %s28
    $region7: #{tpu_custom_call.1} parent=1 // loop_footer_branch
      %27 = sbr.rel target = $region3
    $region8: #{tpu_custom_call.1} parent=1 // loop_exit
      _
    %5272 = vsyncpa [#allocation9], 1
    %s5273 = scalar_lea.sflag [#allocation9], 1
    %5274 = vsyncpa %s5273, 1
    %5275 = vsyncpa [#allocation12], 1
    %5276 = vsyncpa [#allocation10], 1
    %s5277 = scalar_lea.sflag [#allocation10], 1
    %5278 = vsyncpa %s5277, 1

</llo_original>
